<compile_context>
chip_gen: v7x
topology: tpu7x:2x2x1
jax: 0.10.0
libtpu: 0.0.40
codegen_flags: <defaults>
</compile_context>

<pallas_src>
import functools

import jax
import jax.numpy as jnp
from jax import lax
from jax.experimental import pallas as pl
from jax.experimental.pallas import tpu as pltpu


_COL0 = 8  # left zero border of the padded scratch -> sublane-aligned stores


# ----------------------------------------------------------------------------
# Fused Pallas kernel
# ----------------------------------------------------------------------------

def _fpn_fused_kernel(*refs, th, wp, add_upsample):
    """One (batch n, row-tile i) block, NHWC.

    refs (with upsample):
      cur, cur_row_above, cur_row_below, hi, hi_row_above, hi_row_below,
      ah_tile, aw, w1, b1, w2(3,C,3C), b2, x_out, out, xpad_scratch
    refs (highest_block):
      cur, cur_row_above, cur_row_below, w1, b1, w2, b2, x_out, out, xpad
    """
    if add_upsample:
        (cur_ref, cur_up_ref, cur_dn_ref,
         hi_ref, hi_up_ref, hi_dn_ref, ah_ref, aw_ref,
         w1_ref, b1_ref, w2_ref, b2_ref, x_ref, out_ref, xpad_s) = refs
    else:
        (cur_ref, cur_up_ref, cur_dn_ref,
         w1_ref, b1_ref, w2_ref, b2_ref, x_ref, out_ref, xpad_s) = refs

    i = pl.program_id(1)
    n_tiles = pl.num_programs(1)

    _, w, cin = cur_ref.shape
    cout = w1_ref.shape[1]
    ext = th + 2
    col0 = _COL0
    pdt = xpad_s.dtype

    w1 = w1_ref[...]
    b1 = b1_ref[...]                                   # (1, C) f32

    # ---- conv1x1 (+bias): 3 independent dots (tile + 2 halo rows) ----------
    xm = jnp.dot(cur_ref[...].reshape(th * w, cin), w1,
                 preferred_element_type=jnp.float32) + b1
    xm = xm.reshape(th, w, cout)                       # (th, W, C) f32
    xt = jnp.dot(cur_up_ref[...].reshape(w, cin), w1,
                 preferred_element_type=jnp.float32) + b1      # (W, C)
    xb = jnp.dot(cur_dn_ref[...].reshape(w, cin), w1,
                 preferred_element_type=jnp.float32) + b1      # (W, C)

    # ---- fused bilinear (align_corners=True) x2 upsample-add ----------------
    if add_upsample:
        hm = hi_ref.shape[0]                           # = th // 2
        # Small half-resolution concat so the H-interp is ONE matmul with a
        # contiguous RHS (3 separate dots would each pop a full-size result).
        hi_cat = jnp.concatenate(
            [hi_up_ref[...], hi_ref[...], hi_dn_ref[...]], axis=0)   # (hm+2, wh, C)
        # W-interp first, on the half-size block; the einsum's transposes ride
        # the otherwise idle XLU slot.
        hi_w = jnp.einsum("hwc,pw->hpc", hi_cat, aw_ref[...],
                          preferred_element_type=jnp.float32)        # (hm+2, W, C)
        ah_s = ah_ref[...]                                           # (ext, hm+2)
        up = jnp.dot(ah_s, hi_w.reshape(hm + 2, w * cout).astype(ah_s.dtype),
                     preferred_element_type=jnp.float32)
        up = up.reshape(ext, w, cout)                                # (ext, W, C)
        xm = xm + up[1:th + 1]
        xt = xt + up[0]
        xb = xb + up[th + 1]

    # ---- emit x ------------------------------------------------------------
    x_ref[...] = xm.astype(x_ref.dtype)

    # ---- assemble zero-padded 3x3 input in VMEM scratch (aligned stores) ----
    xpad_s[1:th + 1, col0:col0 + w, :] = xm.astype(pdt)
    xpad_s[0:1, col0:col0 + w, :] = xt.reshape(1, w, cout).astype(pdt)
    xpad_s[th + 1:th + 2, col0:col0 + w, :] = xb.reshape(1, w, cout).astype(pdt)
    # Border columns are re-zeroed every iteration on purpose (grid axes are
    # "parallel"; no cross-iteration scratch state is assumed).
    xpad_s[:, 0:col0, :] = jnp.zeros((ext, col0, cout), pdt)
    xpad_s[:, col0 + w:wp, :] = jnp.zeros((ext, wp - col0 - w, cout), pdt)

    @pl.when(i == 0)                                   # top of the image
    def _():
        xpad_s[0:1, :, :] = jnp.zeros((1, wp, cout), pdt)

    @pl.when(i == n_tiles - 1)                         # bottom of the image
    def _():
        xpad_s[th + 1:th + 2, :, :] = jnp.zeros((1, wp, cout), pdt)

    # ---- 3x3 conv: 3 contiguous row-slab matmuls, dx stacked along N --------
    acc = jnp.zeros((th, w, cout), jnp.float32)
    for dy in range(3):
        slab = xpad_s[dy:dy + th, :, :]                # (th, Wp, C) contiguous
        prod = jnp.dot(slab.reshape(th * wp, cout), w2_ref[dy],
                       preferred_element_type=jnp.float32)   # (th*Wp, 3C)
        prod = prod.reshape(th, wp, 3 * cout)
        for dx in range(3):
            off = col0 - 1 + dx                        # 7 / 8 / 9
            acc = acc + prod[:, off:off + w, dx * cout:(dx + 1) * cout]
    out_ref[...] = (acc + b2_ref[...]).astype(out_ref.dtype)


# ----------------------------------------------------------------------------
# Glue
# ----------------------------------------------------------------------------

def _interp_matrix(out_size, in_size, dtype=jnp.float32):
    """(out_size, in_size) 1-D linear interpolation with align_corners=True."""
    if out_size == 1 or in_size == 1:
        src = jnp.zeros((out_size,), jnp.float32)
    else:
        src = jnp.arange(out_size, dtype=jnp.float32) * (in_size - 1) / (out_size - 1)
    i0 = jnp.clip(jnp.floor(src).astype(jnp.int32), 0, in_size - 1)
    i1 = jnp.clip(i0 + 1, 0, in_size - 1)
    frac = src - i0.astype(jnp.float32)
    a = (jax.nn.one_hot(i0, in_size, dtype=jnp.float32) * (1.0 - frac)[:, None]
         + jax.nn.one_hot(i1, in_size, dtype=jnp.float32) * frac[:, None])
    return a.astype(dtype)


def _padded_width(w):
    return _COL0 + ((w + 8) // 8) * 8          # 8-col left border, >=1 right, %8


def _vmem_est_bytes(th, w, cin, cout, wh, add_up, in_sz, pad_sz):
    """Rough per-step VMEM footprint (double-buffered pipeline buffers)."""
    wp = _padded_width(w)
    est = 2 * (th * w * cin + 2 * w * cin) * in_sz            # cur tile + halos
    est += 2 * 2 * th * w * cout * 4                          # x + out tiles (f32)
    est += 2 * (cin * cout + 9 * cout * cout + 2 * cout) * 4  # weights / biases
    if add_up:
        hm = max(th // 2, 1)
        est += 2 * (hm + 2) * wh * cout * in_sz               # higher tile + halos
        est += 2 * ((th + 2) * (hm + 2) + 2 * wh * wh) * in_sz  # ah tile + aw
    est += (th + 2) * wp * cout * pad_sz                      # padded scratch
    return est


def _pick_tile_h(h, w, cin, cout, wh, add_up, in_sz, pad_sz, budget=24 * 2 ** 20):
    """Largest divisor of H (even when upsampling) whose VMEM estimate fits."""
    smallest_valid = None
    for th in range(min(h, 256), 0, -1):
        if h % th:
            continue
        if add_up and th % 2:
            continue
        smallest_valid = th
        if _vmem_est_bytes(th, w, cin, cout, wh, add_up, in_sz, pad_sz) <= budget:
            return th
    return smallest_valid if smallest_valid is not None else h


@functools.partial(jax.jit,
                   static_argnames=("highest_block", "tile_h", "compute_dtype"))
def fpn_block_forward_nhwc(cur, higher, params, highest_block=False, tile_h=None,
                           compute_dtype=jnp.float32):
    """FPNBlock.forward on NHWC tensors (keep NHWC across FPN levels)."""
    w1, b1, w2, b2 = params["w1"], params["b1"], params["w2"], params["b2"]
    n, h, w, cin = cur.shape
    cout = w1.shape[1]
    add_up = not highest_block
    mxu_dt = jnp.dtype(compute_dtype)
    in_sz = mxu_dt.itemsize
    wh_hint = higher.shape[2] if (add_up and higher is not None) else 0

    th = tile_h if tile_h is not None else _pick_tile_h(
        h, w, cin, cout, wh_hint, add_up, in_sz, in_sz)
    if h % th != 0:
        raise ValueError("tile_h must divide H")
    if add_up and th % 2 != 0:
        raise ValueError("tile_h must be even when upsampling")
    n_tiles = h // th
    wp = _padded_width(w)

    b1_2d = b1.reshape(1, cout).astype(jnp.float32)
    b2_2d = b2.reshape(1, cout).astype(jnp.float32)
    w1c = w1.astype(mxu_dt)
    # (3,3,Ci,Co) HWIO -> (3, Ci, 3*Co): dx taps stacked along the output dim.
    w2s = jnp.transpose(w2, (0, 2, 1, 3)).reshape(3, cout, 3 * cout).astype(mxu_dt)
    cur_c = cur.astype(mxu_dt)

    def idx_main(ni, ti):
        return (ni, ti, 0, 0)

    # NOTE: these 1-row halo specs rely on block_size == 1 so element index ==
    # block index; do not change the halo block size.
    def idx_cur_up(ni, ti):
        return (ni, jnp.maximum(ti * th - 1, 0), 0, 0)

    def idx_cur_dn(ni, ti):
        return (ni, jnp.minimum(ti * th + th, h - 1), 0, 0)

    def idx_c2(ni, ti):
        return (0, 0)

    def idx_c3(ni, ti):
        return (0, 0, 0)

    in_specs = [
        pl.BlockSpec((None, th, w, cin), idx_main),
        pl.BlockSpec((None, 1, w, cin), idx_cur_up),
        pl.BlockSpec((None, 1, w, cin), idx_cur_dn),
    ]
    args = [cur_c, cur_c, cur_c]

    if add_up:
        hh, wh = higher.shape[1], higher.shape[2]
        if h != 2 * hh or w != 2 * wh:
            raise ValueError("scale_factor=2 requires exact 2x shapes")
        hm = th // 2
        hi_c = higher.astype(mxu_dt)

        # Zero-padded H-interp matrix, pre-sliced per row-tile in the wrapper
        # (tiny blocks -> no in-kernel dynamic lane slicing, `higher` is not
        # kept resident in VMEM).
        ahp = jnp.pad(_interp_matrix(h, hh), ((1, 1), (1, 1)))      # (H+2, hh+2)
        ah_tiles = jnp.stack(
            [ahp[ti * th:ti * th + th + 2, ti * hm:ti * hm + hm + 2]
             for ti in range(n_tiles)]).astype(mxu_dt)              # (T, th+2, hm+2)
        aw = _interp_matrix(w, wh).astype(mxu_dt)

        def idx_hi_main(ni, ti):
            return (ni, ti, 0, 0)

        def idx_hi_up(ni, ti):
            return (ni, jnp.maximum(ti * hm - 1, 0), 0, 0)

        def idx_hi_dn(ni, ti):
            return (ni, jnp.minimum(ti * hm + hm, hh - 1), 0, 0)

        def idx_ah(ni, ti):
            return (ti, 0, 0)

        in_specs += [
            pl.BlockSpec((None, hm, wh, cout), idx_hi_main),
            pl.BlockSpec((None, 1, wh, cout), idx_hi_up),
            pl.BlockSpec((None, 1, wh, cout), idx_hi_dn),
            pl.BlockSpec((None, th + 2, hm + 2), idx_ah),
            pl.BlockSpec((w, wh), idx_c2),
        ]
        args += [hi_c, hi_c, hi_c, ah_tiles, aw]

    in_specs += [
        pl.BlockSpec((cin, cout), idx_c2),
        pl.BlockSpec((1, cout), idx_c2),
        pl.BlockSpec((3, cout, 3 * cout), idx_c3),
        pl.BlockSpec((1, cout), idx_c2),
    ]
    args += [w1c, b1_2d, w2s, b2_2d]

    out_spec = pl.BlockSpec((None, th, w, cout), idx_main)
    out_shape = (jax.ShapeDtypeStruct((n, h, w, cout), jnp.float32),
                 jax.ShapeDtypeStruct((n, h, w, cout), jnp.float32))

    est = _vmem_est_bytes(th, w, cin, cout, wh_hint, add_up, in_sz, in_sz)
    vmem_limit = int(min(100 * 2 ** 20, max(32 * 2 ** 20, 3 * est)))

    kernel = functools.partial(_fpn_fused_kernel, th=th, wp=wp, add_upsample=add_up)

    x, out = pl.pallas_call(
        kernel,
        out_shape=out_shape,
        grid=(n, n_tiles),
        in_specs=in_specs,
        out_specs=(out_spec, out_spec),
        scratch_shapes=[pltpu.VMEM((th + 2, wp, cout), mxu_dt)],
        compiler_params=pltpu.CompilerParams(
            dimension_semantics=("parallel", "parallel"),
            vmem_limit_bytes=vmem_limit),
    )(*args)
    return x, out


@functools.partial(jax.jit,
                   static_argnames=("highest_block", "tile_h", "compute_dtype"))
def fpn_block_forward(cur_nchw, higher_nchw, params, highest_block=False,
                      tile_h=None, compute_dtype=jnp.float32):
    """FPNBlock.forward with PyTorch NCHW I/O (transpose only at the boundary)."""
    cur = jnp.transpose(cur_nchw, (0, 2, 3, 1))
    higher = (jnp.transpose(higher_nchw, (0, 2, 3, 1))
              if higher_nchw is not None else None)
    x, out = fpn_block_forward_nhwc(cur, higher, params,
                                    highest_block=highest_block, tile_h=tile_h,
                                    compute_dtype=compute_dtype)
    return jnp.transpose(x, (0, 3, 1, 2)), jnp.transpose(out, (0, 3, 1, 2))


# ----------------------------------------------------------------------------
# Pure-JAX reference (correctness check only)
# ----------------------------------------------------------------------------

def _ref_forward(cur_nchw, higher_nchw, params, highest_block=False):
    w1, b1, w2, b2 = params["w1"], params["b1"], params["w2"], params["b2"]
    cin, cout = w1.shape
    cur = jnp.transpose(cur_nchw, (0, 2, 3, 1))
    x = lax.conv_general_dilated(
        cur, w1.reshape(1, 1, cin, cout), (1, 1), "VALID",
        dimension_numbers=("NHWC", "HWIO", "NHWC")) + b1
    if not highest_block:
        hi = jnp.transpose(higher_nchw, (0, 2, 3, 1))
        ah = _interp_matrix(x.shape[1], hi.shape[1])
        aw = _interp_matrix(x.shape[2], hi.shape[2])
        up = jnp.einsum("oh,nhwc->nowc", ah, hi)
        up = jnp.einsum("nowc,pw->nopc", up, aw)
        x = x + up
    out = lax.conv_general_dilated(
        x, w2, (1, 1), "SAME", dimension_numbers=("NHWC", "HWIO", "NHWC")) + b2
    return jnp.transpose(x, (0, 3, 1, 2)), jnp.transpose(out, (0, 3, 1, 2))


# ----------------------------------------------------------------------------
# Main
# ----------------------------------------------------------------------------

if __name__ == "__main__":
    # Small shapes: batch=2, inp_ch=4, out_ch=8, spatial=16 (higher level 8x8).
    N, INP_CH, OUT_CH, H, W = 2, 4, 8, 16, 16

    key = jax.random.PRNGKey(0)
    k1, k2, k3, k4, k5, k6 = jax.random.split(key, 6)

    cur = jax.random.normal(k1, (N, INP_CH, H, W), jnp.float32)               # NCHW
    higher = jax.random.normal(k2, (N, OUT_CH, H // 2, W // 2), jnp.float32)  # NCHW

    params = {
        "w1": 0.1 * jax.random.normal(k3, (INP_CH, OUT_CH), jnp.float32),
        "b1": 0.1 * jax.random.normal(k4, (OUT_CH,), jnp.float32),
        "w2": 0.1 * jax.random.normal(k5, (3, 3, OUT_CH, OUT_CH), jnp.float32),
        "b2": 0.1 * jax.random.normal(k6, (OUT_CH,), jnp.float32),
    }

    # Main path, 2 row tiles: exercises halo recompute + boundary zeroing.
    x_pal, out_pal = fpn_block_forward(cur, higher, params,
                                       highest_block=False, tile_h=8)
    jax.block_until_ready((x_pal, out_pal))

    # highest_block=True path (no upsample add).
    x_top, out_top = fpn_block_forward(cur, higher, params,
                                       highest_block=True, tile_h=8)
    jax.block_until_ready((x_top, out_top))

    # Automatic (VMEM-estimate based) tile size: single-tile path.
    x_auto, out_auto = fpn_block_forward(cur, higher, params, highest_block=False)
    jax.block_until_ready((x_auto, out_auto))

    # bf16 MXU-operand variant (f32 accumulation, f32 outputs).
    x_bf, out_bf = fpn_block_forward(cur, higher, params, highest_block=False,
                                     tile_h=8, compute_dtype=jnp.bfloat16)
    jax.block_until_ready((x_bf, out_bf))

    # Correctness vs pure-JAX reference.
    x_ref, out_ref = _ref_forward(cur, higher, params, highest_block=False)
    assert jnp.allclose(x_pal, x_ref, atol=1e-4, rtol=1e-4)
    assert jnp.allclose(out_pal, out_ref, atol=1e-4, rtol=1e-4)
    assert jnp.allclose(x_auto, x_ref, atol=1e-4, rtol=1e-4)
    assert jnp.allclose(out_auto, out_ref, atol=1e-4, rtol=1e-4)
    x_ref_t, out_ref_t = _ref_forward(cur, higher, params, highest_block=True)
    assert jnp.allclose(x_top, x_ref_t, atol=1e-4, rtol=1e-4)
    assert jnp.allclose(out_top, out_ref_t, atol=1e-4, rtol=1e-4)
    # bf16 path: loose tolerance (operand rounding only).
    assert jnp.allclose(x_bf, x_ref, atol=2e-1, rtol=5e-2)
    assert jnp.allclose(out_bf, out_ref, atol=2e-1, rtol=5e-2)

    print("KERNEL_OK")
</pallas_src>

<mosaic_0001>
module attributes {stable_mosaic.version = 11 : i64} {
  func.func @_fpn_fused_kernel(%arg0: i32, %arg1: i32, %arg2: memref<1x8x16x4xf32, #tpu.memory_space<vmem>>, %arg3: memref<1x1x16x4xf32, #tpu.memory_space<vmem>>, %arg4: memref<1x1x16x4xf32, #tpu.memory_space<vmem>>, %arg5: memref<1x4x8x8xf32, #tpu.memory_space<vmem>>, %arg6: memref<1x1x8x8xf32, #tpu.memory_space<vmem>>, %arg7: memref<1x1x8x8xf32, #tpu.memory_space<vmem>>, %arg8: memref<1x10x6xf32, #tpu.memory_space<vmem>>, %arg9: memref<16x8xf32, #tpu.memory_space<vmem>>, %arg10: memref<4x8xf32, #tpu.memory_space<vmem>>, %arg11: memref<1x8xf32, #tpu.memory_space<vmem>>, %arg12: memref<3x8x24xf32, #tpu.memory_space<vmem>>, %arg13: memref<1x8xf32, #tpu.memory_space<vmem>>, %arg14: memref<1x8x16x8xf32, #tpu.memory_space<vmem>>, %arg15: memref<1x8x16x8xf32, #tpu.memory_space<vmem>>, %arg16: memref<10x32x8xf32, #tpu.memory_space<vmem>>) attributes {dimension_semantics = [#tpu.dimension_semantics<parallel>, #tpu.dimension_semantics<parallel>], iteration_bounds = array<i64: 2, 2>, scalar_prefetch = 0 : i64, scratch_operands = 1 : i64, tpu.core_type = #tpu.core_type<tc>, window_params = [{transform_indices = @transform_0, window_bounds = array<i64: 1, 8, 16, 4>}, {transform_indices = @transform_1, window_bounds = array<i64: 1, 1, 16, 4>}, {transform_indices = @transform_2, window_bounds = array<i64: 1, 1, 16, 4>}, {transform_indices = @transform_3, window_bounds = array<i64: 1, 4, 8, 8>}, {transform_indices = @transform_4, window_bounds = array<i64: 1, 1, 8, 8>}, {transform_indices = @transform_5, window_bounds = array<i64: 1, 1, 8, 8>}, {transform_indices = @transform_6, window_bounds = array<i64: 1, 10, 6>}, {pipeline_mode = #tpu.pipeline_mode<synchronous>, transform_indices = @transform_7, window_bounds = array<i64: 16, 8>}, {pipeline_mode = #tpu.pipeline_mode<synchronous>, transform_indices = @transform_8, window_bounds = array<i64: 4, 8>}, {pipeline_mode = #tpu.pipeline_mode<synchronous>, transform_indices = @transform_9, window_bounds = array<i64: 1, 8>}, {pipeline_mode = #tpu.pipeline_mode<synchronous>, transform_indices = @transform_10, window_bounds = array<i64: 3, 8, 24>}, {pipeline_mode = #tpu.pipeline_mode<synchronous>, transform_indices = @transform_11, window_bounds = array<i64: 1, 8>}, {transform_indices = @transform_12, window_bounds = array<i64: 1, 8, 16, 8>}, {transform_indices = @transform_13, window_bounds = array<i64: 1, 8, 16, 8>}]} {
    %c0 = arith.constant 0 : index
    %c0_0 = arith.constant 0 : index
    %0 = vector.load %arg10[%c0, %c0_0] : memref<4x8xf32, #tpu.memory_space<vmem>>, vector<4x8xf32>
    %c0_1 = arith.constant 0 : index
    %c0_2 = arith.constant 0 : index
    %1 = vector.load %arg11[%c0_1, %c0_2] : memref<1x8xf32, #tpu.memory_space<vmem>>, vector<1x8xf32>
    %c0_3 = arith.constant 0 : index
    %c0_4 = arith.constant 0 : index
    %c0_5 = arith.constant 0 : index
    %c0_6 = arith.constant 0 : index
    %2 = vector.load %arg2[%c0_3, %c0_4, %c0_5, %c0_6] : memref<1x8x16x4xf32, #tpu.memory_space<vmem>>, vector<1x8x16x4xf32>
    %3 = vector.shape_cast %2 : vector<1x8x16x4xf32> to vector<8x16x4xf32>
    %4 = vector.shape_cast %3 : vector<8x16x4xf32> to vector<128x4xf32>
    %cst = arith.constant dense<0.000000e+00> : vector<128x8xf32>
    %5 = tpu.matmul %4, %0, %cst {dimension_numbers = #tpu.dot_dimension_numbers<[1], [0], [0], [1], [0, 0, 1, 1], [], []>} : vector<128x4xf32>, vector<4x8xf32>, vector<128x8xf32> -> vector<128x8xf32>
    %6 = vector.broadcast %1 : vector<1x8xf32> to vector<128x8xf32>
    %7 = arith.addf %5, %6 : vector<128x8xf32>
    %8 = vector.shape_cast %7 : vector<128x8xf32> to vector<8x16x8xf32>
    %c0_7 = arith.constant 0 : index
    %c0_8 = arith.constant 0 : index
    %c0_9 = arith.constant 0 : index
    %c0_10 = arith.constant 0 : index
    %9 = vector.load %arg3[%c0_7, %c0_8, %c0_9, %c0_10] : memref<1x1x16x4xf32, #tpu.memory_space<vmem>>, vector<1x1x16x4xf32>
    %10 = vector.shape_cast %9 : vector<1x1x16x4xf32> to vector<1x16x4xf32>
    %11 = vector.shape_cast %10 : vector<1x16x4xf32> to vector<16x4xf32>
    %cst_11 = arith.constant dense<0.000000e+00> : vector<16x8xf32>
    %12 = tpu.matmul %11, %0, %cst_11 {dimension_numbers = #tpu.dot_dimension_numbers<[1], [0], [0], [1], [0, 0, 1, 1], [], []>} : vector<16x4xf32>, vector<4x8xf32>, vector<16x8xf32> -> vector<16x8xf32>
    %13 = vector.broadcast %1 : vector<1x8xf32> to vector<16x8xf32>
    %14 = arith.addf %12, %13 : vector<16x8xf32>
    %c0_12 = arith.constant 0 : index
    %c0_13 = arith.constant 0 : index
    %c0_14 = arith.constant 0 : index
    %c0_15 = arith.constant 0 : index
    %15 = vector.load %arg4[%c0_12, %c0_13, %c0_14, %c0_15] : memref<1x1x16x4xf32, #tpu.memory_space<vmem>>, vector<1x1x16x4xf32>
    %16 = vector.shape_cast %15 : vector<1x1x16x4xf32> to vector<1x16x4xf32>
    %17 = vector.shape_cast %16 : vector<1x16x4xf32> to vector<16x4xf32>
    %cst_16 = arith.constant dense<0.000000e+00> : vector<16x8xf32>
    %18 = tpu.matmul %17, %0, %cst_16 {dimension_numbers = #tpu.dot_dimension_numbers<[1], [0], [0], [1], [0, 0, 1, 1], [], []>} : vector<16x4xf32>, vector<4x8xf32>, vector<16x8xf32> -> vector<16x8xf32>
    %19 = vector.broadcast %1 : vector<1x8xf32> to vector<16x8xf32>
    %20 = arith.addf %18, %19 : vector<16x8xf32>
    %c0_17 = arith.constant 0 : index
    %c0_18 = arith.constant 0 : index
    %c0_19 = arith.constant 0 : index
    %c0_20 = arith.constant 0 : index
    %21 = vector.load %arg6[%c0_17, %c0_18, %c0_19, %c0_20] : memref<1x1x8x8xf32, #tpu.memory_space<vmem>>, vector<1x1x8x8xf32>
    %22 = vector.shape_cast %21 : vector<1x1x8x8xf32> to vector<1x8x8xf32>
    %c0_21 = arith.constant 0 : index
    %c0_22 = arith.constant 0 : index
    %c0_23 = arith.constant 0 : index
    %c0_24 = arith.constant 0 : index
    %23 = vector.load %arg5[%c0_21, %c0_22, %c0_23, %c0_24] : memref<1x4x8x8xf32, #tpu.memory_space<vmem>>, vector<1x4x8x8xf32>
    %24 = vector.shape_cast %23 : vector<1x4x8x8xf32> to vector<4x8x8xf32>
    %c0_25 = arith.constant 0 : index
    %c0_26 = arith.constant 0 : index
    %c0_27 = arith.constant 0 : index
    %c0_28 = arith.constant 0 : index
    %25 = vector.load %arg7[%c0_25, %c0_26, %c0_27, %c0_28] : memref<1x1x8x8xf32, #tpu.memory_space<vmem>>, vector<1x1x8x8xf32>
    %26 = vector.shape_cast %25 : vector<1x1x8x8xf32> to vector<1x8x8xf32>
    %27 = tpu.concatenate %22, %24, %26 in 0 : vector<1x8x8xf32>, vector<4x8x8xf32>, vector<1x8x8xf32> -> vector<6x8x8xf32>
    %c0_29 = arith.constant 0 : index
    %c0_30 = arith.constant 0 : index
    %28 = vector.load %arg9[%c0_29, %c0_30] : memref<16x8xf32, #tpu.memory_space<vmem>>, vector<16x8xf32>
    "tpu.trace_start"() <{level = 10 : i32, message = "hwc,pw->hpc"}> : () -> ()
    %cst_31 = arith.constant dense<0.000000e+00> : vector<16x6x8xf32>
    %29 = tpu.matmul %28, %27, %cst_31 {dimension_numbers = #tpu.dot_dimension_numbers<[1], [1], [0], [0, 2], [0, 0, 1, 0, 1, 2], [], []>} : vector<16x8xf32>, vector<6x8x8xf32>, vector<16x6x8xf32> -> vector<16x6x8xf32>
    %30 = tpu.transpose %29, [1, 0, 2] : vector<16x6x8xf32> -> vector<6x16x8xf32>
    "tpu.trace_stop"() : () -> ()
    %c0_32 = arith.constant 0 : index
    %c0_33 = arith.constant 0 : index
    %c0_34 = arith.constant 0 : index
    %31 = vector.load %arg8[%c0_32, %c0_33, %c0_34] : memref<1x10x6xf32, #tpu.memory_space<vmem>>, vector<1x10x6xf32>
    %32 = vector.shape_cast %31 : vector<1x10x6xf32> to vector<10x6xf32>
    %33 = vector.shape_cast %30 : vector<6x16x8xf32> to vector<6x128xf32>
    %cst_35 = arith.constant dense<0.000000e+00> : vector<10x128xf32>
    %34 = tpu.matmul %32, %33, %cst_35 {dimension_numbers = #tpu.dot_dimension_numbers<[1], [0], [0], [1], [0, 0, 1, 1], [], []>} : vector<10x6xf32>, vector<6x128xf32>, vector<10x128xf32> -> vector<10x128xf32>
    %35 = vector.shape_cast %34 : vector<10x128xf32> to vector<10x16x8xf32>
    %36 = vector.extract_strided_slice %35 {offsets = [1, 0, 0], sizes = [8, 16, 8], strides = [1, 1, 1]} : vector<10x16x8xf32> to vector<8x16x8xf32>
    %37 = arith.addf %8, %36 : vector<8x16x8xf32>
    %38 = vector.extract_strided_slice %35 {offsets = [0, 0, 0], sizes = [1, 16, 8], strides = [1, 1, 1]} : vector<10x16x8xf32> to vector<1x16x8xf32>
    %39 = vector.shape_cast %38 : vector<1x16x8xf32> to vector<16x8xf32>
    %40 = arith.addf %14, %39 : vector<16x8xf32>
    %41 = vector.extract_strided_slice %35 {offsets = [9, 0, 0], sizes = [1, 16, 8], strides = [1, 1, 1]} : vector<10x16x8xf32> to vector<1x16x8xf32>
    %42 = vector.shape_cast %41 : vector<1x16x8xf32> to vector<16x8xf32>
    %43 = arith.addf %20, %42 : vector<16x8xf32>
    %c0_36 = arith.constant 0 : index
    %c0_37 = arith.constant 0 : index
    %c0_38 = arith.constant 0 : index
    %c0_39 = arith.constant 0 : index
    %44 = vector.load %arg14[%c0_36, %c0_37, %c0_38, %c0_39] : memref<1x8x16x8xf32, #tpu.memory_space<vmem>>, vector<1x8x16x8xf32>
    %45 = vector.shape_cast %44 : vector<1x8x16x8xf32> to vector<8x16x8xf32>
    %46 = vector.shape_cast %37 : vector<8x16x8xf32> to vector<1x8x16x8xf32>
    tpu.vector_store %arg14[%c0_36, %c0_37, %c0_38, %c0_39], %46 {strides = array<i32>} : memref<1x8x16x8xf32, #tpu.memory_space<vmem>>, vector<1x8x16x8xf32>,
    %c1 = arith.constant 1 : index
    %c8 = arith.constant 8 : index
    %c0_40 = arith.constant 0 : index
    %47 = vector.load %arg16[%c1, %c8, %c0_40] : memref<10x32x8xf32, #tpu.memory_space<vmem>>, vector<8x16x8xf32>
    tpu.vector_store %arg16[%c1, %c8, %c0_40], %37 {strides = array<i32>} : memref<10x32x8xf32, #tpu.memory_space<vmem>>, vector<8x16x8xf32>,
    %48 = vector.shape_cast %40 : vector<16x8xf32> to vector<1x16x8xf32>
    %c0_41 = arith.constant 0 : index
    %c8_42 = arith.constant 8 : index
    %c0_43 = arith.constant 0 : index
    %49 = vector.load %arg16[%c0_41, %c8_42, %c0_43] : memref<10x32x8xf32, #tpu.memory_space<vmem>>, vector<1x16x8xf32>
    tpu.vector_store %arg16[%c0_41, %c8_42, %c0_43], %48 {strides = array<i32>} : memref<10x32x8xf32, #tpu.memory_space<vmem>>, vector<1x16x8xf32>,
    %50 = vector.shape_cast %43 : vector<16x8xf32> to vector<1x16x8xf32>
    %c9 = arith.constant 9 : index
    %c8_44 = arith.constant 8 : index
    %c0_45 = arith.constant 0 : index
    %51 = vector.load %arg16[%c9, %c8_44, %c0_45] : memref<10x32x8xf32, #tpu.memory_space<vmem>>, vector<1x16x8xf32>
    tpu.vector_store %arg16[%c9, %c8_44, %c0_45], %50 {strides = array<i32>} : memref<10x32x8xf32, #tpu.memory_space<vmem>>, vector<1x16x8xf32>,
    %cst_46 = arith.constant 0.000000e+00 : f32
    %52 = vector.broadcast %cst_46 : f32 to vector<10x8x8xf32>
    %c0_47 = arith.constant 0 : index
    %c0_48 = arith.constant 0 : index
    %c0_49 = arith.constant 0 : index
    %53 = vector.load %arg16[%c0_47, %c0_48, %c0_49] : memref<10x32x8xf32, #tpu.memory_space<vmem>>, vector<10x8x8xf32>
    tpu.vector_store %arg16[%c0_47, %c0_48, %c0_49], %52 {strides = array<i32>} : memref<10x32x8xf32, #tpu.memory_space<vmem>>, vector<10x8x8xf32>,
    %cst_50 = arith.constant 0.000000e+00 : f32
    %54 = vector.broadcast %cst_50 : f32 to vector<10x8x8xf32>
    %c0_51 = arith.constant 0 : index
    %c24 = arith.constant 24 : index
    %c0_52 = arith.constant 0 : index
    %55 = vector.load %arg16[%c0_51, %c24, %c0_52] : memref<10x32x8xf32, #tpu.memory_space<vmem>>, vector<10x8x8xf32>
    tpu.vector_store %arg16[%c0_51, %c24, %c0_52], %54 {strides = array<i32>} : memref<10x32x8xf32, #tpu.memory_space<vmem>>, vector<10x8x8xf32>,
    %c0_i32 = arith.constant 0 : i32
    %56 = arith.cmpi eq, %arg1, %c0_i32 : i32
    %57 = arith.extui %56 : i1 to i32
    %c0_i32_53 = arith.constant 0 : i32
    %58 = arith.cmpi ne, %57, %c0_i32_53 : i32
    scf.if %58 {
      %cst_82 = arith.constant 0.000000e+00 : f32
      %106 = vector.broadcast %cst_82 : f32 to vector<1x32x8xf32>
      %c0_83 = arith.constant 0 : index
      %c0_84 = arith.constant 0 : index
      %c0_85 = arith.constant 0 : index
      %107 = vector.load %arg16[%c0_83, %c0_84, %c0_85] : memref<10x32x8xf32, #tpu.memory_space<vmem>>, vector<1x32x8xf32>
      tpu.vector_store %arg16[%c0_83, %c0_84, %c0_85], %106 {strides = array<i32>} : memref<10x32x8xf32, #tpu.memory_space<vmem>>, vector<1x32x8xf32>,
    } else {
    }
    %c1_i32 = arith.constant 1 : i32
    %59 = arith.cmpi eq, %arg1, %c1_i32 : i32
    %60 = arith.extui %59 : i1 to i32
    %c0_i32_54 = arith.constant 0 : i32
    %61 = arith.cmpi ne, %60, %c0_i32_54 : i32
    scf.if %61 {
      %cst_82 = arith.constant 0.000000e+00 : f32
      %106 = vector.broadcast %cst_82 : f32 to vector<1x32x8xf32>
      %c9_83 = arith.constant 9 : index
      %c0_84 = arith.constant 0 : index
      %c0_85 = arith.constant 0 : index
      %107 = vector.load %arg16[%c9_83, %c0_84, %c0_85] : memref<10x32x8xf32, #tpu.memory_space<vmem>>, vector<1x32x8xf32>
      tpu.vector_store %arg16[%c9_83, %c0_84, %c0_85], %106 {strides = array<i32>} : memref<10x32x8xf32, #tpu.memory_space<vmem>>, vector<1x32x8xf32>,
    } else {
    }
    %cst_55 = arith.constant 0.000000e+00 : f32
    %62 = vector.broadcast %cst_55 : f32 to vector<8x16x8xf32>
    %c0_56 = arith.constant 0 : index
    %c0_57 = arith.constant 0 : index
    %c0_58 = arith.constant 0 : index
    %63 = vector.load %arg16[%c0_56, %c0_57, %c0_58] : memref<10x32x8xf32, #tpu.memory_space<vmem>>, vector<8x32x8xf32>
    %64 = vector.shape_cast %63 : vector<8x32x8xf32> to vector<256x8xf32>
    %c0_59 = arith.constant 0 : index
    %c0_60 = arith.constant 0 : index
    %c0_61 = arith.constant 0 : index
    %65 = vector.load %arg12[%c0_59, %c0_60, %c0_61] : memref<3x8x24xf32, #tpu.memory_space<vmem>>, vector<1x8x24xf32>
    %66 = vector.shape_cast %65 : vector<1x8x24xf32> to vector<8x24xf32>
    %cst_62 = arith.constant dense<0.000000e+00> : vector<256x24xf32>
    %67 = tpu.matmul %64, %66, %cst_62 {dimension_numbers = #tpu.dot_dimension_numbers<[1], [0], [0], [1], [0, 0, 1, 1], [], []>} : vector<256x8xf32>, vector<8x24xf32>, vector<256x24xf32> -> vector<256x24xf32>
    %68 = vector.shape_cast %67 : vector<256x24xf32> to vector<8x32x24xf32>
    %69 = vector.extract_strided_slice %68 {offsets = [0, 7, 0], sizes = [8, 16, 8], strides = [1, 1, 1]} : vector<8x32x24xf32> to vector<8x16x8xf32>
    %70 = arith.addf %62, %69 : vector<8x16x8xf32>
    %71 = vector.extract_strided_slice %68 {offsets = [0, 8, 8], sizes = [8, 16, 8], strides = [1, 1, 1]} : vector<8x32x24xf32> to vector<8x16x8xf32>
    %72 = arith.addf %70, %71 : vector<8x16x8xf32>
    %73 = vector.extract_strided_slice %68 {offsets = [0, 9, 16], sizes = [8, 16, 8], strides = [1, 1, 1]} : vector<8x32x24xf32> to vector<8x16x8xf32>
    %74 = arith.addf %72, %73 : vector<8x16x8xf32>
    %c1_63 = arith.constant 1 : index
    %c0_64 = arith.constant 0 : index
    %c0_65 = arith.constant 0 : index
    %75 = vector.load %arg16[%c1_63, %c0_64, %c0_65] : memref<10x32x8xf32, #tpu.memory_space<vmem>>, vector<8x32x8xf32>
    %76 = vector.shape_cast %75 : vector<8x32x8xf32> to vector<256x8xf32>
    %c1_66 = arith.constant 1 : index
    %c0_67 = arith.constant 0 : index
    %c0_68 = arith.constant 0 : index
    %77 = vector.load %arg12[%c1_66, %c0_67, %c0_68] : memref<3x8x24xf32, #tpu.memory_space<vmem>>, vector<1x8x24xf32>
    %78 = vector.shape_cast %77 : vector<1x8x24xf32> to vector<8x24xf32>
    %cst_69 = arith.constant dense<0.000000e+00> : vector<256x24xf32>
    %79 = tpu.matmul %76, %78, %cst_69 {dimension_numbers = #tpu.dot_dimension_numbers<[1], [0], [0], [1], [0, 0, 1, 1], [], []>} : vector<256x8xf32>, vector<8x24xf32>, vector<256x24xf32> -> vector<256x24xf32>
    %80 = vector.shape_cast %79 : vector<256x24xf32> to vector<8x32x24xf32>
    %81 = vector.extract_strided_slice %80 {offsets = [0, 7, 0], sizes = [8, 16, 8], strides = [1, 1, 1]} : vector<8x32x24xf32> to vector<8x16x8xf32>
    %82 = arith.addf %74, %81 : vector<8x16x8xf32>
    %83 = vector.extract_strided_slice %80 {offsets = [0, 8, 8], sizes = [8, 16, 8], strides = [1, 1, 1]} : vector<8x32x24xf32> to vector<8x16x8xf32>
    %84 = arith.addf %82, %83 : vector<8x16x8xf32>
    %85 = vector.extract_strided_slice %80 {offsets = [0, 9, 16], sizes = [8, 16, 8], strides = [1, 1, 1]} : vector<8x32x24xf32> to vector<8x16x8xf32>
    %86 = arith.addf %84, %85 : vector<8x16x8xf32>
    %c2 = arith.constant 2 : index
    %c0_70 = arith.constant 0 : index
    %c0_71 = arith.constant 0 : index
    %87 = vector.load %arg16[%c2, %c0_70, %c0_71] : memref<10x32x8xf32, #tpu.memory_space<vmem>>, vector<8x32x8xf32>
    %88 = vector.shape_cast %87 : vector<8x32x8xf32> to vector<256x8xf32>
    %c2_72 = arith.constant 2 : index
    %c0_73 = arith.constant 0 : index
    %c0_74 = arith.constant 0 : index
    %89 = vector.load %arg12[%c2_72, %c0_73, %c0_74] : memref<3x8x24xf32, #tpu.memory_space<vmem>>, vector<1x8x24xf32>
    %90 = vector.shape_cast %89 : vector<1x8x24xf32> to vector<8x24xf32>
    %cst_75 = arith.constant dense<0.000000e+00> : vector<256x24xf32>
    %91 = tpu.matmul %88, %90, %cst_75 {dimension_numbers = #tpu.dot_dimension_numbers<[1], [0], [0], [1], [0, 0, 1, 1], [], []>} : vector<256x8xf32>, vector<8x24xf32>, vector<256x24xf32> -> vector<256x24xf32>
    %92 = vector.shape_cast %91 : vector<256x24xf32> to vector<8x32x24xf32>
    %93 = vector.extract_strided_slice %92 {offsets = [0, 7, 0], sizes = [8, 16, 8], strides = [1, 1, 1]} : vector<8x32x24xf32> to vector<8x16x8xf32>
    %94 = arith.addf %86, %93 : vector<8x16x8xf32>
    %95 = vector.extract_strided_slice %92 {offsets = [0, 8, 8], sizes = [8, 16, 8], strides = [1, 1, 1]} : vector<8x32x24xf32> to vector<8x16x8xf32>
    %96 = arith.addf %94, %95 : vector<8x16x8xf32>
    %97 = vector.extract_strided_slice %92 {offsets = [0, 9, 16], sizes = [8, 16, 8], strides = [1, 1, 1]} : vector<8x32x24xf32> to vector<8x16x8xf32>
    %98 = arith.addf %96, %97 : vector<8x16x8xf32>
    %c0_76 = arith.constant 0 : index
    %c0_77 = arith.constant 0 : index
    %99 = vector.load %arg13[%c0_76, %c0_77] : memref<1x8xf32, #tpu.memory_space<vmem>>, vector<1x8xf32>
    %100 = vector.shape_cast %99 : vector<1x8xf32> to vector<1x1x8xf32>
    %101 = vector.broadcast %100 : vector<1x1x8xf32> to vector<8x16x8xf32>
    %102 = arith.addf %98, %101 : vector<8x16x8xf32>
    %c0_78 = arith.constant 0 : index
    %c0_79 = arith.constant 0 : index
    %c0_80 = arith.constant 0 : index
    %c0_81 = arith.constant 0 : index
    %103 = vector.load %arg15[%c0_78, %c0_79, %c0_80, %c0_81] : memref<1x8x16x8xf32, #tpu.memory_space<vmem>>, vector<1x8x16x8xf32>
    %104 = vector.shape_cast %103 : vector<1x8x16x8xf32> to vector<8x16x8xf32>
    %105 = vector.shape_cast %102 : vector<8x16x8xf32> to vector<1x8x16x8xf32>
    tpu.vector_store %arg15[%c0_78, %c0_79, %c0_80, %c0_81], %105 {strides = array<i32>} : memref<1x8x16x8xf32, #tpu.memory_space<vmem>>, vector<1x8x16x8xf32>,
    return
  }
  func.func @transform_0(%arg0: i32, %arg1: i32) -> (i32, i32, i32, i32) {
    %c0_i32 = arith.constant 0 : i32
    %c0_i32_0 = arith.constant 0 : i32
    %c0_i32_1 = arith.constant 0 : i32
    return %arg0, %arg1, %c0_i32, %c0_i32_0 : i32, i32, i32, i32
  }
  func.func @transform_1(%arg0: i32, %arg1: i32) -> (i32, i32, i32, i32) {
    %c8_i32 = arith.constant 8 : i32
    %0 = arith.muli %arg1, %c8_i32 : i32
    %c1_i32 = arith.constant 1 : i32
    %1 = arith.subi %0, %c1_i32 : i32
    %c0_i32 = arith.constant 0 : i32
    %2 = arith.maxsi %1, %c0_i32 : i32
    %c0_i32_0 = arith.constant 0 : i32
    %c0_i32_1 = arith.constant 0 : i32
    %c0_i32_2 = arith.constant 0 : i32
    return %arg0, %2, %c0_i32_0, %c0_i32_1 : i32, i32, i32, i32
  }
  func.func @transform_2(%arg0: i32, %arg1: i32) -> (i32, i32, i32, i32) {
    %c8_i32 = arith.constant 8 : i32
    %0 = arith.muli %arg1, %c8_i32 : i32
    %c8_i32_0 = arith.constant 8 : i32
    %1 = arith.addi %0, %c8_i32_0 : i32
    %c15_i32 = arith.constant 15 : i32
    %2 = arith.minsi %1, %c15_i32 : i32
    %c0_i32 = arith.constant 0 : i32
    %c0_i32_1 = arith.constant 0 : i32
    %c0_i32_2 = arith.constant 0 : i32
    return %arg0, %2, %c0_i32, %c0_i32_1 : i32, i32, i32, i32
  }
  func.func @transform_3(%arg0: i32, %arg1: i32) -> (i32, i32, i32, i32) {
    %c0_i32 = arith.constant 0 : i32
    %c0_i32_0 = arith.constant 0 : i32
    %c0_i32_1 = arith.constant 0 : i32
    return %arg0, %arg1, %c0_i32, %c0_i32_0 : i32, i32, i32, i32
  }
  func.func @transform_4(%arg0: i32, %arg1: i32) -> (i32, i32, i32, i32) {
    %c4_i32 = arith.constant 4 : i32
    %0 = arith.muli %arg1, %c4_i32 : i32
    %c1_i32 = arith.constant 1 : i32
    %1 = arith.subi %0, %c1_i32 : i32
    %c0_i32 = arith.constant 0 : i32
    %2 = arith.maxsi %1, %c0_i32 : i32
    %c0_i32_0 = arith.constant 0 : i32
    %c0_i32_1 = arith.constant 0 : i32
    %c0_i32_2 = arith.constant 0 : i32
    return %arg0, %2, %c0_i32_0, %c0_i32_1 : i32, i32, i32, i32
  }
  func.func @transform_5(%arg0: i32, %arg1: i32) -> (i32, i32, i32, i32) {
    %c4_i32 = arith.constant 4 : i32
    %0 = arith.muli %arg1, %c4_i32 : i32
    %c4_i32_0 = arith.constant 4 : i32
    %1 = arith.addi %0, %c4_i32_0 : i32
    %c7_i32 = arith.constant 7 : i32
    %2 = arith.minsi %1, %c7_i32 : i32
    %c0_i32 = arith.constant 0 : i32
    %c0_i32_1 = arith.constant 0 : i32
    %c0_i32_2 = arith.constant 0 : i32
    return %arg0, %2, %c0_i32, %c0_i32_1 : i32, i32, i32, i32
  }
  func.func @transform_6(%arg0: i32, %arg1: i32) -> (i32, i32, i32) {
    %c0_i32 = arith.constant 0 : i32
    %c0_i32_0 = arith.constant 0 : i32
    %c0_i32_1 = arith.constant 0 : i32
    return %arg1, %c0_i32, %c0_i32_0 : i32, i32, i32
  }
  func.func @transform_7(%arg0: i32, %arg1: i32) -> (i32, i32) {
    %c0_i32 = arith.constant 0 : i32
    %c0_i32_0 = arith.constant 0 : i32
    %c0_i32_1 = arith.constant 0 : i32
    return %c0_i32, %c0_i32_0 : i32, i32
  }
  func.func @transform_8(%arg0: i32, %arg1: i32) -> (i32, i32) {
    %c0_i32 = arith.constant 0 : i32
    %c0_i32_0 = arith.constant 0 : i32
    %c0_i32_1 = arith.constant 0 : i32
    return %c0_i32, %c0_i32_0 : i32, i32
  }
  func.func @transform_9(%arg0: i32, %arg1: i32) -> (i32, i32) {
    %c0_i32 = arith.constant 0 : i32
    %c0_i32_0 = arith.constant 0 : i32
    %c0_i32_1 = arith.constant 0 : i32
    return %c0_i32, %c0_i32_0 : i32, i32
  }
  func.func @transform_10(%arg0: i32, %arg1: i32) -> (i32, i32, i32) {
    %c0_i32 = arith.constant 0 : i32
    %c0_i32_0 = arith.constant 0 : i32
    %c0_i32_1 = arith.constant 0 : i32
    %c0_i32_2 = arith.constant 0 : i32
    return %c0_i32, %c0_i32_0, %c0_i32_1 : i32, i32, i32
  }
  func.func @transform_11(%arg0: i32, %arg1: i32) -> (i32, i32) {
    %c0_i32 = arith.constant 0 : i32
    %c0_i32_0 = arith.constant 0 : i32
    %c0_i32_1 = arith.constant 0 : i32
    return %c0_i32, %c0_i32_0 : i32, i32
  }
  func.func @transform_12(%arg0: i32, %arg1: i32) -> (i32, i32, i32, i32) {
    %c0_i32 = arith.constant 0 : i32
    %c0_i32_0 = arith.constant 0 : i32
    %c0_i32_1 = arith.constant 0 : i32
    return %arg0, %arg1, %c0_i32, %c0_i32_0 : i32, i32, i32, i32
  }
  func.func @transform_13(%arg0: i32, %arg1: i32) -> (i32, i32, i32, i32) {
    %c0_i32 = arith.constant 0 : i32
    %c0_i32_0 = arith.constant 0 : i32
    %c0_i32_1 = arith.constant 0 : i32
    return %arg0, %arg1, %c0_i32, %c0_i32_0 : i32, i32, i32, i32
  }
}

</mosaic_0001>

<llo_original>
// kernel: fpn_block_forward_nhwc.1
$region0: #{fpn_block_forward_nhwc.1}
  #allocation0 [shape = 'u32[]', space=smem, size = 0x4, offset = 0x4, fixed_abs, tag = 'smem constant byte address 0x4 - core index']
  #allocation1 [shape = 'u32[144,128]{1,0:T(1,128)}', space=vmem, size = 0x12000, scoped, tag = 'internal scratch']
  #allocation2 [shape = 'f32[10,32,8]{2,1,0:T(8,128)}', space=vmem, size = 0x28000, scoped, tag = 'scratch operand']
  %s0 = inlined_call_operand.vmem [shape: f32[2,16,16,4], index: 0, kind: input, shape index: {}, may-alias: {0,1,2}]
  %s1 = inlined_call_operand.vmem [shape: f32[2,16,16,4], index: 1, kind: input, shape index: {}, may-alias: {0,1,2}]
  %s2 = inlined_call_operand.vmem [shape: f32[2,16,16,4], index: 2, kind: input, shape index: {}, may-alias: {0,1,2}]
  %s3 = inlined_call_operand.vmem [shape: f32[2,8,8,8], index: 3, kind: input, shape index: {}, may-alias: {3,4,5}]
  %s4 = inlined_call_operand.vmem [shape: f32[2,8,8,8], index: 4, kind: input, shape index: {}, may-alias: {3,4,5}]
  %s5 = inlined_call_operand.vmem [shape: f32[2,8,8,8], index: 5, kind: input, shape index: {}, may-alias: {3,4,5}]
  %s6 = inlined_call_operand.vmem [shape: f32[2,10,6], index: 6, kind: input, shape index: {}]
  %s7 = inlined_call_operand.vmem [shape: f32[16,8], index: 7, kind: input, shape index: {}]
  %s8 = inlined_call_operand.vmem [shape: f32[4,8], index: 8, kind: input, shape index: {}]
  %s9 = inlined_call_operand.vmem [shape: f32[1,8], index: 9, kind: input, shape index: {}]
  %s10 = inlined_call_operand.vmem [shape: f32[3,8,24], index: 10, kind: input, shape index: {}]
  %s11 = inlined_call_operand.vmem [shape: f32[1,8], index: 11, kind: input, shape index: {}]
  %s12 = inlined_call_operand.vmem [shape: f32[2,16,16,8], index: 12, kind: output, shape index: {0}]
  %s13 = inlined_call_operand.vmem [shape: f32[2,16,16,8], index: 13, kind: output, shape index: {1}]
  %14 = xla_tuple %s12, %s13
  %s15 = sld [smem:[#allocation0]]
  $region97: #{fpn_block_forward_nhwc.1} parent=0
    _
  %s17 = ssub.s32 1, %s15
  %s18 = scalar_select 0, %s17, %s15
  loop: start=0, step=1, limit=6
  $region2: #{fpn_block_forward_nhwc.1} parent=0 // loop_pre_header
    _
  $region3: #{fpn_block_forward_nhwc.1} parent=0 // loop_header
    %s20 = sphi 0, %s24
    %p21 = scmp.ge.s32.totalorder %s20, 6
    %s27 = sphi 0, %s39
    %s28 = sphi 0, %s35
    %s29 = sphi 0, %s27
    %s30 = sphi 0, %s28
    %s31 = sphi 0, %s29
    %s32 = sphi 0, %s30
    %s44 = sphi 0, %s46
    %s47 = sphi 0, %s44
    %s48 = sphi 0, %s47
    %s64 = sphi 0, %s48
    %s80 = sphi 0, %s82
    %s83 = sphi 0, %s80
    %s84 = sphi 0, %s83
    %s100 = sphi 0, %s84
    %s116 = sphi 0, %s118
    %s119 = sphi 0, %s116
    %s120 = sphi 0, %s119
    %s136 = sphi 0, %s120
    %s144 = sphi 0, %s146
    %s147 = sphi 0, %s144
    %s148 = sphi 0, %s147
    %s164 = sphi 0, %s148
    %s180 = sphi 0, %s182
    %s183 = sphi 0, %s180
    %s184 = sphi 0, %s183
    %s200 = sphi 0, %s184
    %s216 = sphi 0, %s218
    %s219 = sphi 0, %s216
    %s220 = sphi 0, %s219
    %s236 = sphi 0, %s220
    %s242 = sphi 0, %s244
    %s245 = sphi 0, %s242
    %s246 = sphi 0, %s245
    %s262 = sphi 0, %s246
    %s266 = sphi 0, %s266
    %s268 = sphi 0, %s266
    %s269 = sphi 0, %s268
    %s283 = sphi 0, %s269
    %s287 = sphi 0, %s287
    %s289 = sphi 0, %s287
    %s290 = sphi 0, %s289
    %s304 = sphi 0, %s290
    %s308 = sphi 0, %s308
    %s310 = sphi 0, %s308
    %s311 = sphi 0, %s310
    %s325 = sphi 0, %s311
    %s329 = sphi 0, %s329
    %s331 = sphi 0, %s329
    %s332 = sphi 0, %s331
    %s346 = sphi 0, %s332
    %s350 = sphi 0, %s350
    %s352 = sphi 0, %s350
    %s353 = sphi 0, %s352
    %s367 = sphi 0, %s353
    %s375 = sphi 0, %s377
    %s378 = sphi 0, %s375
    %s379 = sphi 0, %s378
    %s395 = sphi 0, %s379
    %s403 = sphi 0, %s405
    %s406 = sphi 0, %s403
    %s407 = sphi 0, %s406
    %s423 = sphi 0, %s407
  $region4: #{fpn_block_forward_nhwc.1} parent=0 // loop_header_branch
    %23 = sbr.rel (%p21) target = $region8
  $region5: #{fpn_block_forward_nhwc.1} parent=0 // loop_body
    %s25 = ssub.s32 %s20, 1
    %s26 = ssub.s32 %s20, 2
    %s33 = sadd.s32 1, %s28
    %p34 = scmp.ge.s32.totalorder %s33, 2
    %s35 = scalar_select %p34, 0, %s33
    %s36 = sadd.s32 1, %s27
    %s37 = scalar_select %p34, %s36, %s27
    %p38 = scmp.ge.s32.totalorder %s37, 2
    %s39 = scalar_select %p38, 0, %s37
    %s40 = ssub.s32 %s27, %s39
    %s41 = ssub.s32 %s28, %s35
    %s42 = sor.u32 %s40, %s41
    %p43 = scmp.eq.s32.totalorder %s42, 0
    %s45 = sadd.s32 %s44, 1
    %s46 = scalar_select %p43, %s44, %s45
    %p49 = pneg %p43
    %p50 = scmp.eq.s32.totalorder %s20, 3
    %p51 = por %p49, %p50
    %p52 = scmp.ne.s32.totalorder %s44, %s47
    %p53 = scmp.eq.s32.totalorder %s20, 0
    %p54 = por %p52, %p53
    %p55 = scmp.ne.s32.totalorder %s44, %s47
    %p56 = scmp.eq.s32.totalorder %s25, 3
    %p57 = por %p55, %p56
    %p58 = scmp.ne.s32.totalorder %s47, %s48
    %p59 = scmp.eq.s32.totalorder %s25, 0
    %p60 = por %p58, %p59
    %p61 = scmp.ne.s32.totalorder %s47, %s48
    %p62 = scmp.eq.s32.totalorder %s26, 3
    %p63 = por %p61, %p62
    %p65 = scmp.ne.s32.totalorder %s48, %s64
    %p66 = scmp.eq.s32.totalorder %s26, 0
    %p67 = por %p65, %p66
    %s68 = smul.u32 %s28, 8
    %s69 = ssub.s32 %s68, 1
    %p70 = scmp.gt.s32.totalorder %s69, 0
    %s71 = scalar_select %p70, %s69, 0
    %s72 = smul.u32 %s35, 8
    %s73 = ssub.s32 %s72, 1
    %p74 = scmp.gt.s32.totalorder %s73, 0
    %s75 = scalar_select %p74, %s73, 0
    %s76 = ssub.s32 %s27, %s39
    %s77 = ssub.s32 %s71, %s75
    %s78 = sor.u32 %s76, %s77
    %p79 = scmp.eq.s32.totalorder %s78, 0
    %s81 = sadd.s32 %s80, 1
    %s82 = scalar_select %p79, %s80, %s81
    %p85 = pneg %p79
    %p86 = scmp.eq.s32.totalorder %s20, 3
    %p87 = por %p85, %p86
    %p88 = scmp.ne.s32.totalorder %s80, %s83
    %p89 = scmp.eq.s32.totalorder %s20, 0
    %p90 = por %p88, %p89
    %p91 = scmp.ne.s32.totalorder %s80, %s83
    %p92 = scmp.eq.s32.totalorder %s25, 3
    %p93 = por %p91, %p92
    %p94 = scmp.ne.s32.totalorder %s83, %s84
    %p95 = scmp.eq.s32.totalorder %s25, 0
    %p96 = por %p94, %p95
    %p97 = scmp.ne.s32.totalorder %s83, %s84
    %p98 = scmp.eq.s32.totalorder %s26, 3
    %p99 = por %p97, %p98
    %p101 = scmp.ne.s32.totalorder %s84, %s100
    %p102 = scmp.eq.s32.totalorder %s26, 0
    %p103 = por %p101, %p102
    %s104 = smul.u32 %s28, 8
    %s105 = sadd.s32 %s104, 8
    %p106 = scmp.lt.s32.totalorder %s105, 15
    %s107 = scalar_select %p106, %s105, 15
    %s108 = smul.u32 %s35, 8
    %s109 = sadd.s32 %s108, 8
    %p110 = scmp.lt.s32.totalorder %s109, 15
    %s111 = scalar_select %p110, %s109, 15
    %s112 = ssub.s32 %s27, %s39
    %s113 = ssub.s32 %s107, %s111
    %s114 = sor.u32 %s112, %s113
    %p115 = scmp.eq.s32.totalorder %s114, 0
    %s117 = sadd.s32 %s116, 1
    %s118 = scalar_select %p115, %s116, %s117
    %p121 = pneg %p115
    %p122 = scmp.eq.s32.totalorder %s20, 3
    %p123 = por %p121, %p122
    %p124 = scmp.ne.s32.totalorder %s116, %s119
    %p125 = scmp.eq.s32.totalorder %s20, 0
    %p126 = por %p124, %p125
    %p127 = scmp.ne.s32.totalorder %s116, %s119
    %p128 = scmp.eq.s32.totalorder %s25, 3
    %p129 = por %p127, %p128
    %p130 = scmp.ne.s32.totalorder %s119, %s120
    %p131 = scmp.eq.s32.totalorder %s25, 0
    %p132 = por %p130, %p131
    %p133 = scmp.ne.s32.totalorder %s119, %s120
    %p134 = scmp.eq.s32.totalorder %s26, 3
    %p135 = por %p133, %p134
    %p137 = scmp.ne.s32.totalorder %s120, %s136
    %p138 = scmp.eq.s32.totalorder %s26, 0
    %p139 = por %p137, %p138
    %s140 = ssub.s32 %s27, %s39
    %s141 = ssub.s32 %s28, %s35
    %s142 = sor.u32 %s140, %s141
    %p143 = scmp.eq.s32.totalorder %s142, 0
    %s145 = sadd.s32 %s144, 1
    %s146 = scalar_select %p143, %s144, %s145
    %p149 = pneg %p143
    %p150 = scmp.eq.s32.totalorder %s20, 3
    %p151 = por %p149, %p150
    %p152 = scmp.ne.s32.totalorder %s144, %s147
    %p153 = scmp.eq.s32.totalorder %s20, 0
    %p154 = por %p152, %p153
    %p155 = scmp.ne.s32.totalorder %s144, %s147
    %p156 = scmp.eq.s32.totalorder %s25, 3
    %p157 = por %p155, %p156
    %p158 = scmp.ne.s32.totalorder %s147, %s148
    %p159 = scmp.eq.s32.totalorder %s25, 0
    %p160 = por %p158, %p159
    %p161 = scmp.ne.s32.totalorder %s147, %s148
    %p162 = scmp.eq.s32.totalorder %s26, 3
    %p163 = por %p161, %p162
    %p165 = scmp.ne.s32.totalorder %s148, %s164
    %p166 = scmp.eq.s32.totalorder %s26, 0
    %p167 = por %p165, %p166
    %s168 = smul.u32 %s28, 4
    %s169 = ssub.s32 %s168, 1
    %p170 = scmp.gt.s32.totalorder %s169, 0
    %s171 = scalar_select %p170, %s169, 0
    %s172 = smul.u32 %s35, 4
    %s173 = ssub.s32 %s172, 1
    %p174 = scmp.gt.s32.totalorder %s173, 0
    %s175 = scalar_select %p174, %s173, 0
    %s176 = ssub.s32 %s27, %s39
    %s177 = ssub.s32 %s171, %s175
    %s178 = sor.u32 %s176, %s177
    %p179 = scmp.eq.s32.totalorder %s178, 0
    %s181 = sadd.s32 %s180, 1
    %s182 = scalar_select %p179, %s180, %s181
    %p185 = pneg %p179
    %p186 = scmp.eq.s32.totalorder %s20, 3
    %p187 = por %p185, %p186
    %p188 = scmp.ne.s32.totalorder %s180, %s183
    %p189 = scmp.eq.s32.totalorder %s20, 0
    %p190 = por %p188, %p189
    %p191 = scmp.ne.s32.totalorder %s180, %s183
    %p192 = scmp.eq.s32.totalorder %s25, 3
    %p193 = por %p191, %p192
    %p194 = scmp.ne.s32.totalorder %s183, %s184
    %p195 = scmp.eq.s32.totalorder %s25, 0
    %p196 = por %p194, %p195
    %p197 = scmp.ne.s32.totalorder %s183, %s184
    %p198 = scmp.eq.s32.totalorder %s26, 3
    %p199 = por %p197, %p198
    %p201 = scmp.ne.s32.totalorder %s184, %s200
    %p202 = scmp.eq.s32.totalorder %s26, 0
    %p203 = por %p201, %p202
    %s204 = smul.u32 %s28, 4
    %s205 = sadd.s32 %s204, 4
    %p206 = scmp.lt.s32.totalorder %s205, 7
    %s207 = scalar_select %p206, %s205, 7
    %s208 = smul.u32 %s35, 4
    %s209 = sadd.s32 %s208, 4
    %p210 = scmp.lt.s32.totalorder %s209, 7
    %s211 = scalar_select %p210, %s209, 7
    %s212 = ssub.s32 %s27, %s39
    %s213 = ssub.s32 %s207, %s211
    %s214 = sor.u32 %s212, %s213
    %p215 = scmp.eq.s32.totalorder %s214, 0
    %s217 = sadd.s32 %s216, 1
    %s218 = scalar_select %p215, %s216, %s217
    %p221 = pneg %p215
    %p222 = scmp.eq.s32.totalorder %s20, 3
    %p223 = por %p221, %p222
    %p224 = scmp.ne.s32.totalorder %s216, %s219
    %p225 = scmp.eq.s32.totalorder %s20, 0
    %p226 = por %p224, %p225
    %p227 = scmp.ne.s32.totalorder %s216, %s219
    %p228 = scmp.eq.s32.totalorder %s25, 3
    %p229 = por %p227, %p228
    %p230 = scmp.ne.s32.totalorder %s219, %s220
    %p231 = scmp.eq.s32.totalorder %s25, 0
    %p232 = por %p230, %p231
    %p233 = scmp.ne.s32.totalorder %s219, %s220
    %p234 = scmp.eq.s32.totalorder %s26, 3
    %p235 = por %p233, %p234
    %p237 = scmp.ne.s32.totalorder %s220, %s236
    %p238 = scmp.eq.s32.totalorder %s26, 0
    %p239 = por %p237, %p238
    %s240 = ssub.s32 %s28, %s35
    %p241 = scmp.eq.s32.totalorder %s240, 0
    %s243 = sadd.s32 %s242, 1
    %s244 = scalar_select %p241, %s242, %s243
    %p247 = pneg %p241
    %p248 = scmp.eq.s32.totalorder %s20, 3
    %p249 = por %p247, %p248
    %p250 = scmp.ne.s32.totalorder %s242, %s245
    %p251 = scmp.eq.s32.totalorder %s20, 0
    %p252 = por %p250, %p251
    %p253 = scmp.ne.s32.totalorder %s242, %s245
    %p254 = scmp.eq.s32.totalorder %s25, 3
    %p255 = por %p253, %p254
    %p256 = scmp.ne.s32.totalorder %s245, %s246
    %p257 = scmp.eq.s32.totalorder %s25, 0
    %p258 = por %p256, %p257
    %p259 = scmp.ne.s32.totalorder %s245, %s246
    %p260 = scmp.eq.s32.totalorder %s26, 3
    %p261 = por %p259, %p260
    %p263 = scmp.ne.s32.totalorder %s246, %s262
    %p264 = scmp.eq.s32.totalorder %s26, 0
    %p265 = por %p263, %p264
    %s267 = sadd.s32 %s266, 1
    %p270 = scmp.eq.s32.totalorder %s20, 3
    %p271 = scmp.ne.s32.totalorder %s266, %s268
    %p272 = scmp.eq.s32.totalorder %s20, 0
    %p273 = por %p271, %p272
    %p274 = scmp.ne.s32.totalorder %s266, %s268
    %p275 = scmp.eq.s32.totalorder %s25, 3
    %p276 = por %p274, %p275
    %p277 = scmp.ne.s32.totalorder %s268, %s269
    %p278 = scmp.eq.s32.totalorder %s25, 0
    %p279 = por %p277, %p278
    %p280 = scmp.ne.s32.totalorder %s268, %s269
    %p281 = scmp.eq.s32.totalorder %s26, 3
    %p282 = por %p280, %p281
    %p284 = scmp.ne.s32.totalorder %s269, %s283
    %p285 = scmp.eq.s32.totalorder %s26, 0
    %p286 = por %p284, %p285
    %s288 = sadd.s32 %s287, 1
    %p291 = scmp.eq.s32.totalorder %s20, 3
    %p292 = scmp.ne.s32.totalorder %s287, %s289
    %p293 = scmp.eq.s32.totalorder %s20, 0
    %p294 = por %p292, %p293
    %p295 = scmp.ne.s32.totalorder %s287, %s289
    %p296 = scmp.eq.s32.totalorder %s25, 3
    %p297 = por %p295, %p296
    %p298 = scmp.ne.s32.totalorder %s289, %s290
    %p299 = scmp.eq.s32.totalorder %s25, 0
    %p300 = por %p298, %p299
    %p301 = scmp.ne.s32.totalorder %s289, %s290
    %p302 = scmp.eq.s32.totalorder %s26, 3
    %p303 = por %p301, %p302
    %p305 = scmp.ne.s32.totalorder %s290, %s304
    %p306 = scmp.eq.s32.totalorder %s26, 0
    %p307 = por %p305, %p306
    %s309 = sadd.s32 %s308, 1
    %p312 = scmp.eq.s32.totalorder %s20, 3
    %p313 = scmp.ne.s32.totalorder %s308, %s310
    %p314 = scmp.eq.s32.totalorder %s20, 0
    %p315 = por %p313, %p314
    %p316 = scmp.ne.s32.totalorder %s308, %s310
    %p317 = scmp.eq.s32.totalorder %s25, 3
    %p318 = por %p316, %p317
    %p319 = scmp.ne.s32.totalorder %s310, %s311
    %p320 = scmp.eq.s32.totalorder %s25, 0
    %p321 = por %p319, %p320
    %p322 = scmp.ne.s32.totalorder %s310, %s311
    %p323 = scmp.eq.s32.totalorder %s26, 3
    %p324 = por %p322, %p323
    %p326 = scmp.ne.s32.totalorder %s311, %s325
    %p327 = scmp.eq.s32.totalorder %s26, 0
    %p328 = por %p326, %p327
    %s330 = sadd.s32 %s329, 1
    %p333 = scmp.eq.s32.totalorder %s20, 3
    %p334 = scmp.ne.s32.totalorder %s329, %s331
    %p335 = scmp.eq.s32.totalorder %s20, 0
    %p336 = por %p334, %p335
    %p337 = scmp.ne.s32.totalorder %s329, %s331
    %p338 = scmp.eq.s32.totalorder %s25, 3
    %p339 = por %p337, %p338
    %p340 = scmp.ne.s32.totalorder %s331, %s332
    %p341 = scmp.eq.s32.totalorder %s25, 0
    %p342 = por %p340, %p341
    %p343 = scmp.ne.s32.totalorder %s331, %s332
    %p344 = scmp.eq.s32.totalorder %s26, 3
    %p345 = por %p343, %p344
    %p347 = scmp.ne.s32.totalorder %s332, %s346
    %p348 = scmp.eq.s32.totalorder %s26, 0
    %p349 = por %p347, %p348
    %s351 = sadd.s32 %s350, 1
    %p354 = scmp.eq.s32.totalorder %s20, 3
    %p355 = scmp.ne.s32.totalorder %s350, %s352
    %p356 = scmp.eq.s32.totalorder %s20, 0
    %p357 = por %p355, %p356
    %p358 = scmp.ne.s32.totalorder %s350, %s352
    %p359 = scmp.eq.s32.totalorder %s25, 3
    %p360 = por %p358, %p359
    %p361 = scmp.ne.s32.totalorder %s352, %s353
    %p362 = scmp.eq.s32.totalorder %s25, 0
    %p363 = por %p361, %p362
    %p364 = scmp.ne.s32.totalorder %s352, %s353
    %p365 = scmp.eq.s32.totalorder %s26, 3
    %p366 = por %p364, %p365
    %p368 = scmp.ne.s32.totalorder %s353, %s367
    %p369 = scmp.eq.s32.totalorder %s26, 0
    %p370 = por %p368, %p369
    %s371 = ssub.s32 %s27, %s39
    %s372 = ssub.s32 %s28, %s35
    %s373 = sor.u32 %s371, %s372
    %p374 = scmp.eq.s32.totalorder %s373, 0
    %s376 = sadd.s32 %s375, 1
    %s377 = scalar_select %p374, %s375, %s376
    %p380 = pneg %p374
    %p381 = scmp.eq.s32.totalorder %s20, 3
    %p382 = por %p380, %p381
    %p383 = scmp.ne.s32.totalorder %s375, %s378
    %p384 = scmp.eq.s32.totalorder %s20, 0
    %p385 = por %p383, %p384
    %p386 = scmp.ne.s32.totalorder %s375, %s378
    %p387 = scmp.eq.s32.totalorder %s25, 3
    %p388 = por %p386, %p387
    %p389 = scmp.ne.s32.totalorder %s378, %s379
    %p390 = scmp.eq.s32.totalorder %s25, 0
    %p391 = por %p389, %p390
    %p392 = scmp.ne.s32.totalorder %s378, %s379
    %p393 = scmp.eq.s32.totalorder %s26, 3
    %p394 = por %p392, %p393
    %p396 = scmp.ne.s32.totalorder %s379, %s395
    %p397 = scmp.eq.s32.totalorder %s26, 0
    %p398 = por %p396, %p397
    %s399 = ssub.s32 %s27, %s39
    %s400 = ssub.s32 %s28, %s35
    %s401 = sor.u32 %s399, %s400
    %p402 = scmp.eq.s32.totalorder %s401, 0
    %s404 = sadd.s32 %s403, 1
    %s405 = scalar_select %p402, %s403, %s404
    %p408 = pneg %p402
    %p409 = scmp.eq.s32.totalorder %s20, 3
    %p410 = por %p408, %p409
    %p411 = scmp.ne.s32.totalorder %s403, %s406
    %p412 = scmp.eq.s32.totalorder %s20, 0
    %p413 = por %p411, %p412
    %p414 = scmp.ne.s32.totalorder %s403, %s406
    %p415 = scmp.eq.s32.totalorder %s25, 3
    %p416 = por %p414, %p415
    %p417 = scmp.ne.s32.totalorder %s406, %s407
    %p418 = scmp.eq.s32.totalorder %s25, 0
    %p419 = por %p417, %p418
    %p420 = scmp.ne.s32.totalorder %s406, %s407
    %p421 = scmp.eq.s32.totalorder %s26, 3
    %p422 = por %p420, %p421
    %p424 = scmp.ne.s32.totalorder %s407, %s423
    %p425 = scmp.eq.s32.totalorder %s26, 0
    %p426 = por %p424, %p425
    %p427 = scmp.le.s32.totalorder 1, %s20
    %p428 = scmp.lt.s32.totalorder %s20, 5
    %p429 = pnand %p427, %p428
    %p430 = pneg %p429
    // Predicated region
    $region9: #{fpn_block_forward_nhwc.1} parent=5 // pred_check
      _
    $region10: #{fpn_block_forward_nhwc.1} parent=5 // pred_check_branch
      %432 = sbr.rel (%p429) target = $region12
    $region11: #{fpn_block_forward_nhwc.1} parent=5 // pred_region
      %s433 = ssub.s32 %s20, 1
      // Predicated region
      $region13: #{fpn_block_forward_nhwc.1} parent=11 // pred_check
        %p434 = pneg %p279
      $region14: #{fpn_block_forward_nhwc.1} parent=11 // pred_check_branch
        %436 = sbr.rel (%p434) target = $region16
      $region15: #{fpn_block_forward_nhwc.1} parent=11 // pred_region
        _
      $region16: #{fpn_block_forward_nhwc.1} parent=11 // pred_fallthru
        _
      // Predicated region
      $region17: #{fpn_block_forward_nhwc.1} parent=11 // pred_check
        %p437 = pneg %p300
      $region18: #{fpn_block_forward_nhwc.1} parent=11 // pred_check_branch
        %439 = sbr.rel (%p437) target = $region20
      $region19: #{fpn_block_forward_nhwc.1} parent=11 // pred_region
        _
      $region20: #{fpn_block_forward_nhwc.1} parent=11 // pred_fallthru
        _
      // Predicated region
      $region21: #{fpn_block_forward_nhwc.1} parent=11 // pred_check
        %p440 = pneg %p321
      $region22: #{fpn_block_forward_nhwc.1} parent=11 // pred_check_branch
        %442 = sbr.rel (%p440) target = $region24
      $region23: #{fpn_block_forward_nhwc.1} parent=11 // pred_region
        _
      $region24: #{fpn_block_forward_nhwc.1} parent=11 // pred_fallthru
        _
      // Predicated region
      $region25: #{fpn_block_forward_nhwc.1} parent=11 // pred_check
        %p443 = pneg %p342
      $region26: #{fpn_block_forward_nhwc.1} parent=11 // pred_check_branch
        %445 = sbr.rel (%p443) target = $region28
      $region27: #{fpn_block_forward_nhwc.1} parent=11 // pred_region
        _
      $region28: #{fpn_block_forward_nhwc.1} parent=11 // pred_fallthru
        _
      // Predicated region
      $region29: #{fpn_block_forward_nhwc.1} parent=11 // pred_check
        %p446 = pneg %p363
      $region30: #{fpn_block_forward_nhwc.1} parent=11 // pred_check_branch
        %448 = sbr.rel (%p446) target = $region32
      $region31: #{fpn_block_forward_nhwc.1} parent=11 // pred_region
        _
      $region32: #{fpn_block_forward_nhwc.1} parent=11 // pred_fallthru
        _
    $region12: #{fpn_block_forward_nhwc.1} parent=5 // pred_fallthru
      _
    %p449 = scmp.lt.s32.totalorder %s20, 4
    // Predicated region
    $region33: #{fpn_block_forward_nhwc.1} parent=5 // pred_check
      %p450 = pneg %p449
    $region34: #{fpn_block_forward_nhwc.1} parent=5 // pred_check_branch
      %452 = sbr.rel (%p450) target = $region36
    $region35: #{fpn_block_forward_nhwc.1} parent=5 // pred_region
      // Predicated region
      $region37: #{fpn_block_forward_nhwc.1} parent=35 // pred_check
        %p453 = pneg %p54
      $region38: #{fpn_block_forward_nhwc.1} parent=35 // pred_check_branch
        %455 = sbr.rel (%p453) target = $region40
      $region39: #{fpn_block_forward_nhwc.1} parent=35 // pred_region
        %s456 = smul.u32 8, %s28
        %p457 = scmp.lt.s32.totalorder %s27, 1
        %s458 = scalar_select %p457, %s27, 1
        %p459 = scmp.lt.s32.totalorder %s456, 15
        %s460 = scalar_select %p459, %s456, 15
        %s461 = smul.addr %s460, 2
        %s462 = smul.addr %s458, 32
        %s463 = sadd.s32 %s461, %s462
        %s464 = smul.addr %s463, 8
        %s465 = scalar_lea.vmem %s0, %s464
        %s466 = smul.u32 8, %s28
      $region40: #{fpn_block_forward_nhwc.1} parent=35 // pred_fallthru
        _
      // Predicated region
      $region41: #{fpn_block_forward_nhwc.1} parent=35 // pred_check
        %p467 = pneg %p90
      $region42: #{fpn_block_forward_nhwc.1} parent=35 // pred_check_branch
        %469 = sbr.rel (%p467) target = $region44
      $region43: #{fpn_block_forward_nhwc.1} parent=35 // pred_region
        %s470 = smul.u32 %s28, 8
        %s471 = ssub.s32 %s470, 1
        %p472 = scmp.gt.s32.totalorder %s471, 0
        %s473 = scalar_select %p472, %s471, 0
        %p474 = scmp.lt.s32.totalorder %s27, 1
        %s475 = scalar_select %p474, %s27, 1
        %p476 = scmp.lt.s32.totalorder %s473, 15
        %s477 = scalar_select %p476, %s473, 15
        %s478 = smul.addr %s477, 2
        %s479 = smul.addr %s475, 32
        %s480 = sadd.s32 %s478, %s479
        %s481 = smul.addr %s480, 8
        %s482 = scalar_lea.vmem %s1, %s481
        %s483 = smul.u32 %s28, 8
        %s484 = ssub.s32 %s483, 1
        %p485 = scmp.gt.s32.totalorder %s484, 0
        %s486 = scalar_select %p485, %s484, 0
      $region44: #{fpn_block_forward_nhwc.1} parent=35 // pred_fallthru
        _
      // Predicated region
      $region45: #{fpn_block_forward_nhwc.1} parent=35 // pred_check
        %p487 = pneg %p126
      $region46: #{fpn_block_forward_nhwc.1} parent=35 // pred_check_branch
        %489 = sbr.rel (%p487) target = $region48
      $region47: #{fpn_block_forward_nhwc.1} parent=35 // pred_region
        %s490 = smul.u32 %s28, 8
        %s491 = sadd.s32 %s490, 8
        %p492 = scmp.lt.s32.totalorder %s491, 15
        %s493 = scalar_select %p492, %s491, 15
        %p494 = scmp.lt.s32.totalorder %s27, 1
        %s495 = scalar_select %p494, %s27, 1
        %p496 = scmp.lt.s32.totalorder %s493, 15
        %s497 = scalar_select %p496, %s493, 15
        %s498 = smul.addr %s497, 2
        %s499 = smul.addr %s495, 32
        %s500 = sadd.s32 %s498, %s499
        %s501 = smul.addr %s500, 8
        %s502 = scalar_lea.vmem %s2, %s501
        %s503 = smul.u32 %s28, 8
        %s504 = sadd.s32 %s503, 8
        %p505 = scmp.lt.s32.totalorder %s504, 15
        %s506 = scalar_select %p505, %s504, 15
      $region48: #{fpn_block_forward_nhwc.1} parent=35 // pred_fallthru
        _
      // Predicated region
      $region49: #{fpn_block_forward_nhwc.1} parent=35 // pred_check
        %p507 = pneg %p154
      $region50: #{fpn_block_forward_nhwc.1} parent=35 // pred_check_branch
        %509 = sbr.rel (%p507) target = $region52
      $region51: #{fpn_block_forward_nhwc.1} parent=35 // pred_region
        %s510 = smul.u32 4, %s28
        %p511 = scmp.lt.s32.totalorder %s27, 1
        %s512 = scalar_select %p511, %s27, 1
        %p513 = scmp.lt.s32.totalorder %s510, 7
        %s514 = scalar_select %p513, %s510, 7
        %s515 = smul.addr %s512, 8
        %s516 = sadd.s32 %s514, %s515
        %s517 = smul.addr %s516, 8
        %s518 = scalar_lea.vmem %s3, %s517
        %s519 = smul.u32 4, %s28
      $region52: #{fpn_block_forward_nhwc.1} parent=35 // pred_fallthru
        _
      // Predicated region
      $region53: #{fpn_block_forward_nhwc.1} parent=35 // pred_check
        %p520 = pneg %p190
      $region54: #{fpn_block_forward_nhwc.1} parent=35 // pred_check_branch
        %522 = sbr.rel (%p520) target = $region56
      $region55: #{fpn_block_forward_nhwc.1} parent=35 // pred_region
        %s523 = smul.u32 %s28, 4
        %s524 = ssub.s32 %s523, 1
        %p525 = scmp.gt.s32.totalorder %s524, 0
        %s526 = scalar_select %p525, %s524, 0
        %p527 = scmp.lt.s32.totalorder %s27, 1
        %s528 = scalar_select %p527, %s27, 1
        %p529 = scmp.lt.s32.totalorder %s526, 7
        %s530 = scalar_select %p529, %s526, 7
        %s531 = smul.addr %s528, 8
        %s532 = sadd.s32 %s530, %s531
        %s533 = smul.addr %s532, 8
        %s534 = scalar_lea.vmem %s4, %s533
        %s535 = smul.u32 %s28, 4
        %s536 = ssub.s32 %s535, 1
        %p537 = scmp.gt.s32.totalorder %s536, 0
        %s538 = scalar_select %p537, %s536, 0
      $region56: #{fpn_block_forward_nhwc.1} parent=35 // pred_fallthru
        _
      // Predicated region
      $region57: #{fpn_block_forward_nhwc.1} parent=35 // pred_check
        %p539 = pneg %p226
      $region58: #{fpn_block_forward_nhwc.1} parent=35 // pred_check_branch
        %541 = sbr.rel (%p539) target = $region60
      $region59: #{fpn_block_forward_nhwc.1} parent=35 // pred_region
        %s542 = smul.u32 %s28, 4
        %s543 = sadd.s32 %s542, 4
        %p544 = scmp.lt.s32.totalorder %s543, 7
        %s545 = scalar_select %p544, %s543, 7
        %p546 = scmp.lt.s32.totalorder %s27, 1
        %s547 = scalar_select %p546, %s27, 1
        %p548 = scmp.lt.s32.totalorder %s545, 7
        %s549 = scalar_select %p548, %s545, 7
        %s550 = smul.addr %s547, 8
        %s551 = sadd.s32 %s549, %s550
        %s552 = smul.addr %s551, 8
        %s553 = scalar_lea.vmem %s5, %s552
        %s554 = smul.u32 %s28, 4
        %s555 = sadd.s32 %s554, 4
        %p556 = scmp.lt.s32.totalorder %s555, 7
        %s557 = scalar_select %p556, %s555, 7
      $region60: #{fpn_block_forward_nhwc.1} parent=35 // pred_fallthru
        _
      // Predicated region
      $region61: #{fpn_block_forward_nhwc.1} parent=35 // pred_check
        %p558 = pneg %p252
      $region62: #{fpn_block_forward_nhwc.1} parent=35 // pred_check_branch
        %560 = sbr.rel (%p558) target = $region64
      $region63: #{fpn_block_forward_nhwc.1} parent=35 // pred_region
        %p561 = scmp.lt.s32.totalorder %s28, 1
        %s562 = scalar_select %p561, %s28, 1
        %s563 = smul.addr %s562, 2
        %s564 = smul.addr %s563, 8
        %s565 = scalar_lea.vmem %s6, %s564
      $region64: #{fpn_block_forward_nhwc.1} parent=35 // pred_fallthru
        _
    $region36: #{fpn_block_forward_nhwc.1} parent=5 // pred_fallthru
      _
    %p566 = scmp.le.s32.totalorder 1, %s20
    %p567 = scmp.lt.s32.totalorder %s20, 5
    %p568 = pnand %p566, %p567
    %p569 = pneg %p568
    // Predicated region
    $region65: #{fpn_block_forward_nhwc.1} parent=5 // pred_check
      _
    $region66: #{fpn_block_forward_nhwc.1} parent=5 // pred_check_branch
      %571 = sbr.rel (%p568) target = $region68
    $region67: #{fpn_block_forward_nhwc.1} parent=5 // pred_region
      %s572 = ssub.s32 %s20, 1
      %s573 = smul.u32 8, %s30
      %p574 = scmp.lt.s32.totalorder %s29, 1
      %s575 = scalar_select %p574, %s29, 1
      %p576 = scmp.lt.s32.totalorder %s573, 15
      %s577 = scalar_select %p576, %s573, 15
      %s578 = smul.addr %s577, 2
      %s579 = smul.addr %s575, 32
      %s580 = sadd.s32 %s578, %s579
      %s581 = smul.addr %s580, 8
      %s582 = scalar_lea.vmem %s0, %s581
      %p583 = pneg %p60
      %p584 = pneg %p57
      %s585 = smul.u32 %s30, 8
      %s586 = ssub.s32 %s585, 1
      %p587 = scmp.gt.s32.totalorder %s586, 0
      %s588 = scalar_select %p587, %s586, 0
      %p589 = scmp.lt.s32.totalorder %s29, 1
      %s590 = scalar_select %p589, %s29, 1
      %p591 = scmp.lt.s32.totalorder %s588, 15
      %s592 = scalar_select %p591, %s588, 15
      %s593 = smul.addr %s592, 2
      %s594 = smul.addr %s590, 32
      %s595 = sadd.s32 %s593, %s594
      %s596 = smul.addr %s595, 8
      %s597 = scalar_lea.vmem %s1, %s596
      %p598 = pneg %p96
      %p599 = pneg %p93
      %s600 = smul.u32 %s30, 8
      %s601 = sadd.s32 %s600, 8
      %p602 = scmp.lt.s32.totalorder %s601, 15
      %s603 = scalar_select %p602, %s601, 15
      %p604 = scmp.lt.s32.totalorder %s29, 1
      %s605 = scalar_select %p604, %s29, 1
      %p606 = scmp.lt.s32.totalorder %s603, 15
      %s607 = scalar_select %p606, %s603, 15
      %s608 = smul.addr %s607, 2
      %s609 = smul.addr %s605, 32
      %s610 = sadd.s32 %s608, %s609
      %s611 = smul.addr %s610, 8
      %s612 = scalar_lea.vmem %s2, %s611
      %p613 = pneg %p132
      %p614 = pneg %p129
      %s615 = smul.u32 4, %s30
      %p616 = scmp.lt.s32.totalorder %s29, 1
      %s617 = scalar_select %p616, %s29, 1
      %p618 = scmp.lt.s32.totalorder %s615, 7
      %s619 = scalar_select %p618, %s615, 7
      %s620 = smul.addr %s617, 8
      %s621 = sadd.s32 %s619, %s620
      %s622 = smul.addr %s621, 8
      %s623 = scalar_lea.vmem %s3, %s622
      %p624 = pneg %p160
      %p625 = pneg %p157
      %s626 = smul.u32 %s30, 4
      %s627 = ssub.s32 %s626, 1
      %p628 = scmp.gt.s32.totalorder %s627, 0
      %s629 = scalar_select %p628, %s627, 0
      %p630 = scmp.lt.s32.totalorder %s29, 1
      %s631 = scalar_select %p630, %s29, 1
      %p632 = scmp.lt.s32.totalorder %s629, 7
      %s633 = scalar_select %p632, %s629, 7
      %s634 = smul.addr %s631, 8
      %s635 = sadd.s32 %s633, %s634
      %s636 = smul.addr %s635, 8
      %s637 = scalar_lea.vmem %s4, %s636
      %p638 = pneg %p196
      %p639 = pneg %p193
      %s640 = smul.u32 %s30, 4
      %s641 = sadd.s32 %s640, 4
      %p642 = scmp.lt.s32.totalorder %s641, 7
      %s643 = scalar_select %p642, %s641, 7
      %p644 = scmp.lt.s32.totalorder %s29, 1
      %s645 = scalar_select %p644, %s29, 1
      %p646 = scmp.lt.s32.totalorder %s643, 7
      %s647 = scalar_select %p646, %s643, 7
      %s648 = smul.addr %s645, 8
      %s649 = sadd.s32 %s647, %s648
      %s650 = smul.addr %s649, 8
      %s651 = scalar_lea.vmem %s5, %s650
      %p652 = pneg %p232
      %p653 = pneg %p229
      %p654 = scmp.lt.s32.totalorder %s30, 1
      %s655 = scalar_select %p654, %s30, 1
      %s656 = smul.addr %s655, 2
      %s657 = smul.addr %s656, 8
      %s658 = scalar_lea.vmem %s6, %s657
      %p659 = pneg %p258
      %p660 = pneg %p255
      %p661 = pneg %p279
      %p662 = pneg %p276
      %p663 = pneg %p300
      %p664 = pneg %p297
      %p665 = pneg %p321
      %p666 = pneg %p318
      %p667 = pneg %p342
      %p668 = pneg %p339
      %p669 = pneg %p363
      %p670 = pneg %p360
      %p671 = pneg %p391
      %p672 = pneg %p388
      %s673 = smul.u32 8, %s30
      %p674 = scmp.lt.s32.totalorder %s29, 1
      %s675 = scalar_select %p674, %s29, 1
      %p676 = scmp.lt.s32.totalorder %s673, 15
      %s677 = scalar_select %p676, %s673, 15
      %s678 = smul.addr %s677, 2
      %s679 = smul.addr %s675, 32
      %s680 = sadd.s32 %s678, %s679
      %s681 = smul.addr %s680, 8
      %s682 = scalar_lea.vmem %s12, %s681
      %p683 = pneg %p419
      %p684 = pneg %p416
      %s685 = smul.u32 8, %s30
      %p686 = scmp.lt.s32.totalorder %s29, 1
      %s687 = scalar_select %p686, %s29, 1
      %p688 = scmp.lt.s32.totalorder %s685, 15
      %s689 = scalar_select %p688, %s685, 15
      %s690 = smul.addr %s689, 2
      %s691 = smul.addr %s687, 32
      %s692 = sadd.s32 %s690, %s691
      %s693 = smul.addr %s692, 8
      %s694 = scalar_lea.vmem %s13, %s693
      %s695 = smul.u32 8, %s30
      %p696 = scmp.lt.s32.totalorder %s29, 1
      %s697 = scalar_select %p696, %s29, 1
      %p698 = scmp.lt.s32.totalorder %s695, 15
      %s699 = scalar_select %p698, %s695, 15
      %s700 = smul.addr %s699, 2
      %s701 = smul.addr %s697, 32
      %s702 = sadd.s32 %s700, %s701
      %s703 = smul.addr %s702, 8
      %s704 = scalar_lea.vmem %s0, %s703
      %s705 = smul.u32 8, %s30
      %s706 = smul.u32 %s30, 8
      %s707 = ssub.s32 %s706, 1
      %p708 = scmp.gt.s32.totalorder %s707, 0
      %s709 = scalar_select %p708, %s707, 0
      %p710 = scmp.lt.s32.totalorder %s29, 1
      %s711 = scalar_select %p710, %s29, 1
      %p712 = scmp.lt.s32.totalorder %s709, 15
      %s713 = scalar_select %p712, %s709, 15
      %s714 = smul.addr %s713, 2
      %s715 = smul.addr %s711, 32
      %s716 = sadd.s32 %s714, %s715
      %s717 = smul.addr %s716, 8
      %s718 = scalar_lea.vmem %s1, %s717
      %s719 = smul.u32 %s30, 8
      %s720 = ssub.s32 %s719, 1
      %p721 = scmp.gt.s32.totalorder %s720, 0
      %s722 = scalar_select %p721, %s720, 0
      %s723 = smul.u32 %s30, 8
      %s724 = sadd.s32 %s723, 8
      %p725 = scmp.lt.s32.totalorder %s724, 15
      %s726 = scalar_select %p725, %s724, 15
      %p727 = scmp.lt.s32.totalorder %s29, 1
      %s728 = scalar_select %p727, %s29, 1
      %p729 = scmp.lt.s32.totalorder %s726, 15
      %s730 = scalar_select %p729, %s726, 15
      %s731 = smul.addr %s730, 2
      %s732 = smul.addr %s728, 32
      %s733 = sadd.s32 %s731, %s732
      %s734 = smul.addr %s733, 8
      %s735 = scalar_lea.vmem %s2, %s734
      %s736 = smul.u32 %s30, 8
      %s737 = sadd.s32 %s736, 8
      %p738 = scmp.lt.s32.totalorder %s737, 15
      %s739 = scalar_select %p738, %s737, 15
      %s740 = smul.u32 4, %s30
      %p741 = scmp.lt.s32.totalorder %s29, 1
      %s742 = scalar_select %p741, %s29, 1
      %p743 = scmp.lt.s32.totalorder %s740, 7
      %s744 = scalar_select %p743, %s740, 7
      %s745 = smul.addr %s742, 8
      %s746 = sadd.s32 %s744, %s745
      %s747 = smul.addr %s746, 8
      %s748 = scalar_lea.vmem %s3, %s747
      %s749 = smul.u32 4, %s30
      %s750 = smul.u32 %s30, 4
      %s751 = ssub.s32 %s750, 1
      %p752 = scmp.gt.s32.totalorder %s751, 0
      %s753 = scalar_select %p752, %s751, 0
      %p754 = scmp.lt.s32.totalorder %s29, 1
      %s755 = scalar_select %p754, %s29, 1
      %p756 = scmp.lt.s32.totalorder %s753, 7
      %s757 = scalar_select %p756, %s753, 7
      %s758 = smul.addr %s755, 8
      %s759 = sadd.s32 %s757, %s758
      %s760 = smul.addr %s759, 8
      %s761 = scalar_lea.vmem %s4, %s760
      %s762 = smul.u32 %s30, 4
      %s763 = ssub.s32 %s762, 1
      %p764 = scmp.gt.s32.totalorder %s763, 0
      %s765 = scalar_select %p764, %s763, 0
      %s766 = smul.u32 %s30, 4
      %s767 = sadd.s32 %s766, 4
      %p768 = scmp.lt.s32.totalorder %s767, 7
      %s769 = scalar_select %p768, %s767, 7
      %p770 = scmp.lt.s32.totalorder %s29, 1
      %s771 = scalar_select %p770, %s29, 1
      %p772 = scmp.lt.s32.totalorder %s769, 7
      %s773 = scalar_select %p772, %s769, 7
      %s774 = smul.addr %s771, 8
      %s775 = sadd.s32 %s773, %s774
      %s776 = smul.addr %s775, 8
      %s777 = scalar_lea.vmem %s5, %s776
      %s778 = smul.u32 %s30, 4
      %s779 = sadd.s32 %s778, 4
      %p780 = scmp.lt.s32.totalorder %s779, 7
      %s781 = scalar_select %p780, %s779, 7
      %p782 = scmp.lt.s32.totalorder %s30, 1
      %s783 = scalar_select %p782, %s30, 1
      %s784 = smul.addr %s783, 2
      %s785 = smul.addr %s784, 8
      %s786 = scalar_lea.vmem %s6, %s785
      %s787 = smul.u32 8, %s30
      %p788 = scmp.lt.s32.totalorder %s29, 1
      %s789 = scalar_select %p788, %s29, 1
      %p790 = scmp.lt.s32.totalorder %s787, 15
      %s791 = scalar_select %p790, %s787, 15
      %s792 = smul.addr %s791, 2
      %s793 = smul.addr %s789, 32
      %s794 = sadd.s32 %s792, %s793
      %s795 = smul.addr %s794, 8
      %s796 = scalar_lea.vmem %s12, %s795
      %s797 = smul.u32 8, %s30
      %s798 = smul.u32 8, %s30
      %p799 = scmp.lt.s32.totalorder %s29, 1
      %s800 = scalar_select %p799, %s29, 1
      %p801 = scmp.lt.s32.totalorder %s798, 15
      %s802 = scalar_select %p801, %s798, 15
      %s803 = smul.addr %s802, 2
      %s804 = smul.addr %s800, 32
      %s805 = sadd.s32 %s803, %s804
      %s806 = smul.addr %s805, 8
      %s807 = scalar_lea.vmem %s13, %s806
      %s808 = smul.u32 8, %s30
      %v809 = vld [vmem:[%s8] sm:$0xf]
      %v810 = vld [vmem:[%s9] sm:$0x1]
      %v811 = vld [vmem:[%s704] sm:$0xff]
      %v812 = vld [vmem:[%s704 + $0x8] sm:$0xff]
      %v813 = vld [vmem:[%s704 + $0x10] sm:$0xff]
      %v814 = vld [vmem:[%s704 + $0x18] sm:$0xff]
      %v815 = vld [vmem:[%s704 + $0x20] sm:$0xff]
      %v816 = vld [vmem:[%s704 + $0x28] sm:$0xff]
      %v817 = vld [vmem:[%s704 + $0x30] sm:$0xff]
      %v818 = vld [vmem:[%s704 + $0x38] sm:$0xff]
      %v819 = vld [vmem:[%s704 + $0x40] sm:$0xff]
      %v820 = vld [vmem:[%s704 + $0x48] sm:$0xff]
      %v821 = vld [vmem:[%s704 + $0x50] sm:$0xff]
      %v822 = vld [vmem:[%s704 + $0x58] sm:$0xff]
      %v823 = vld [vmem:[%s704 + $0x60] sm:$0xff]
      %v824 = vld [vmem:[%s704 + $0x68] sm:$0xff]
      %v825 = vld [vmem:[%s704 + $0x70] sm:$0xff]
      %v826 = vld [vmem:[%s704 + $0x78] sm:$0xff]
      %v828 = vlaneseq
      %v829 = vshrl.u32 %v828, 7
      %v830 = vsub.s32 0, %v829
      %v831 = vrot.slane %v810, %v830
      %vm833 = vcmask 31744
      %v835 = vsel %vm833, %v811, 0
      %v838 = vsel %vm833, %v812, 0
      %v841 = vsel %vm833, %v813, 0
      %v844 = vsel %vm833, %v814, 0
      %v847 = vsel %vm833, %v815, 0
      %v850 = vsel %vm833, %v816, 0
      %v853 = vsel %vm833, %v817, 0
      %v856 = vsel %vm833, %v818, 0
      %v859 = vsel %vm833, %v819, 0
      %v862 = vsel %vm833, %v820, 0
      %v865 = vsel %vm833, %v821, 0
      %v868 = vsel %vm833, %v822, 0
      %v871 = vsel %vm833, %v823, 0
      %v874 = vsel %vm833, %v824, 0
      %v877 = vsel %vm833, %v825, 0
      %v880 = vsel %vm833, %v826, 0
      %vm882 = vcmask 1043456
      %v884 = vsel %vm882, %v809, 0
      %886 = vmatprep.subr.mxu0 0.0
      %887 = vmatpush1.msra.mxu0 %v884
      %888 = vmatprep.subr.mxu0 0.0
      %889 = vmatpush1.msra.mxu0 0.0
      %890 = vmatprep.subr.mxu0 0.0
      %891 = vmatpush1.msra.mxu0 0.0
      %892 = vmatprep.subr.mxu0 0.0
      %893 = vmatpush1.msra.mxu0 0.0
      %894 = vmatprep.subr.mxu0 0.0
      %895 = vmatpush1.msra.mxu0 0.0
      %896 = vmatprep.subr.mxu0 0.0
      %897 = vmatpush1.msra.mxu0 0.0
      %898 = vmatprep.subr.mxu0 0.0
      %899 = vmatpush1.msra.mxu0 0.0
      %900 = vmatprep.subr.mxu0 0.0
      %901 = vmatpush1.msra.mxu0 0.0
      %902 = vmatprep.subr.mxu0 0.0
      %903 = vmatpush1.msra.mxu0 0.0
      %904 = vmatprep.subr.mxu0 0.0
      %905 = vmatpush1.msra.mxu0 0.0
      %906 = vmatprep.subr.mxu0 0.0
      %907 = vmatpush1.msra.mxu0 0.0
      %908 = vmatprep.subr.mxu0 0.0
      %909 = vmatpush1.msra.mxu0 0.0
      %910 = vmatprep.subr.mxu0 0.0
      %911 = vmatpush1.msra.mxu0 0.0
      %912 = vmatprep.subr.mxu0 0.0
      %913 = vmatpush1.msra.mxu0 0.0
      %914 = vmatprep.subr.mxu0 0.0
      %915 = vmatpush1.msra.mxu0 0.0
      %916 = vmatprep.subr.mxu0 0.0
      %917 = vmatpush1.msra.mxu0 0.0
      %918 = vmatprep.subr.mxu0 0.0
      %919 = vmatpush1.msra.mxu0 0.0
      %920 = vmatprep.subr.mxu0 0.0
      %921 = vmatpush1.msra.mxu0 0.0
      %922 = vmatprep.subr.mxu0 0.0
      %923 = vmatpush1.msra.mxu0 0.0
      %924 = vmatprep.subr.mxu0 0.0
      %925 = vmatpush1.msra.mxu0 0.0
      %926 = vmatprep.subr.mxu0 0.0
      %927 = vmatpush1.msra.mxu0 0.0
      %928 = vmatprep.subr.mxu0 0.0
      %929 = vmatpush1.msra.mxu0 0.0
      %930 = vmatprep.subr.mxu0 0.0
      %931 = vmatpush1.msra.mxu0 0.0
      %932 = vmatprep.subr.mxu0 0.0
      %933 = vmatpush1.msra.mxu0 0.0
      %934 = vmatprep.subr.mxu0 0.0
      %935 = vmatpush1.msra.mxu0 0.0
      %936 = vmatprep.subr.mxu0 0.0
      %937 = vmatpush1.msra.mxu0 0.0
      %938 = vmatprep.subr.mxu0 0.0
      %939 = vmatpush1.msra.mxu0 0.0
      %940 = vmatprep.subr.mxu0 0.0
      %941 = vmatpush1.msra.mxu0 0.0
      %942 = vmatprep.subr.mxu0 0.0
      %943 = vmatpush1.msra.mxu0 0.0
      %944 = vmatprep.subr.mxu0 0.0
      %945 = vmatpush1.msra.mxu0 0.0
      %946 = vmatprep.subr.mxu0 0.0
      %947 = vmatpush1.msra.mxu0 0.0
      %948 = vmatprep.subr.mxu0 0.0
      %949 = vmatpush1.msra.mxu0 0.0
      %950 = vmatprep.mubr.f32.mxu0 0.0
      %951 = vmatmul.mubr.f32.gmra.mrb[0].mxu0 %v835
      %v952 = vpop.f32.mrb[0].mxu0
      %v953 = vadd.f32 %v831, %v952
      %v954 = vpop.f32.mrb[0].mxu0
      %955 = vmatprep.mubr.f32.mxu0 0.0
      %956 = vmatmul.mubr.f32.gmra.mrb[0].mxu0 %v838
      %v957 = vpop.f32.mrb[0].mxu0
      %v958 = vadd.f32 %v831, %v957
      %v959 = vpop.f32.mrb[0].mxu0
      %960 = vmatprep.mubr.f32.mxu0 0.0
      %961 = vmatmul.mubr.f32.gmra.mrb[0].mxu0 %v841
      %v962 = vpop.f32.mrb[0].mxu0
      %v963 = vadd.f32 %v831, %v962
      %v964 = vpop.f32.mrb[0].mxu0
      %965 = vmatprep.mubr.f32.mxu0 0.0
      %966 = vmatmul.mubr.f32.gmra.mrb[0].mxu0 %v844
      %v967 = vpop.f32.mrb[0].mxu0
      %v968 = vadd.f32 %v831, %v967
      %v969 = vpop.f32.mrb[0].mxu0
      %970 = vmatprep.mubr.f32.mxu0 0.0
      %971 = vmatmul.mubr.f32.gmra.mrb[0].mxu0 %v847
      %v972 = vpop.f32.mrb[0].mxu0
      %v973 = vadd.f32 %v831, %v972
      %v974 = vpop.f32.mrb[0].mxu0
      %975 = vmatprep.mubr.f32.mxu0 0.0
      %976 = vmatmul.mubr.f32.gmra.mrb[0].mxu0 %v850
      %v977 = vpop.f32.mrb[0].mxu0
      %v978 = vadd.f32 %v831, %v977
      %v979 = vpop.f32.mrb[0].mxu0
      %980 = vmatprep.mubr.f32.mxu0 0.0
      %981 = vmatmul.mubr.f32.gmra.mrb[0].mxu0 %v853
      %v982 = vpop.f32.mrb[0].mxu0
      %v983 = vadd.f32 %v831, %v982
      %v984 = vpop.f32.mrb[0].mxu0
      %985 = vmatprep.mubr.f32.mxu0 0.0
      %986 = vmatmul.mubr.f32.gmra.mrb[0].mxu0 %v856
      %v987 = vpop.f32.mrb[0].mxu0
      %v988 = vadd.f32 %v831, %v987
      %v989 = vpop.f32.mrb[0].mxu0
      %990 = vmatprep.mubr.f32.mxu0 0.0
      %991 = vmatmul.mubr.f32.gmra.mrb[0].mxu0 %v859
      %v992 = vpop.f32.mrb[0].mxu0
      %v993 = vadd.f32 %v831, %v992
      %v994 = vpop.f32.mrb[0].mxu0
      %995 = vmatprep.mubr.f32.mxu0 0.0
      %996 = vmatmul.mubr.f32.gmra.mrb[0].mxu0 %v862
      %v997 = vpop.f32.mrb[0].mxu0
      %v998 = vadd.f32 %v831, %v997
      %v999 = vpop.f32.mrb[0].mxu0
      %1000 = vmatprep.mubr.f32.mxu0 0.0
      %1001 = vmatmul.mubr.f32.gmra.mrb[0].mxu0 %v865
      %v1002 = vpop.f32.mrb[0].mxu0
      %v1003 = vadd.f32 %v831, %v1002
      %v1004 = vpop.f32.mrb[0].mxu0
      %1005 = vmatprep.mubr.f32.mxu0 0.0
      %1006 = vmatmul.mubr.f32.gmra.mrb[0].mxu0 %v868
      %v1007 = vpop.f32.mrb[0].mxu0
      %v1008 = vadd.f32 %v831, %v1007
      %v1009 = vpop.f32.mrb[0].mxu0
      %1010 = vmatprep.mubr.f32.mxu0 0.0
      %1011 = vmatmul.mubr.f32.gmra.mrb[0].mxu0 %v871
      %v1012 = vpop.f32.mrb[0].mxu0
      %v1013 = vadd.f32 %v831, %v1012
      %v1014 = vpop.f32.mrb[0].mxu0
      %1015 = vmatprep.mubr.f32.mxu0 0.0
      %1016 = vmatmul.mubr.f32.gmra.mrb[0].mxu0 %v874
      %v1017 = vpop.f32.mrb[0].mxu0
      %v1018 = vadd.f32 %v831, %v1017
      %v1019 = vpop.f32.mrb[0].mxu0
      %1020 = vmatprep.mubr.f32.mxu0 0.0
      %1021 = vmatmul.mubr.f32.gmra.mrb[0].mxu0 %v877
      %v1022 = vpop.f32.mrb[0].mxu0
      %v1023 = vadd.f32 %v831, %v1022
      %v1024 = vpop.f32.mrb[0].mxu0
      %1025 = vmatprep.mubr.f32.mxu0 0.0
      %1026 = vmatmul.mubr.f32.gmra.mrb[0].mxu0 %v880
      %v1027 = vpop.f32.mrb[0].mxu0
      %v1028 = vadd.f32 %v831, %v1027
      %v1029 = vpop.f32.mrb[0].mxu0
      %1030 = vdwg.mxu0
      %v1031 = vld [vmem:[%s718] sm:$0xff]
      %v1032 = vld [vmem:[%s718 + $0x8] sm:$0xff]
      %v1034 = vsel %vm833, %v1031, 0
      %v1037 = vsel %vm833, %v1032, 0
      %1039 = vmatprep.subr.mxu0 0.0
      %1040 = vmatpush1.msra.mxu0 %v884
      %1041 = vmatprep.subr.mxu0 0.0
      %1042 = vmatpush1.msra.mxu0 0.0
      %1043 = vmatprep.subr.mxu0 0.0
      %1044 = vmatpush1.msra.mxu0 0.0
      %1045 = vmatprep.subr.mxu0 0.0
      %1046 = vmatpush1.msra.mxu0 0.0
      %1047 = vmatprep.subr.mxu0 0.0
      %1048 = vmatpush1.msra.mxu0 0.0
      %1049 = vmatprep.subr.mxu0 0.0
      %1050 = vmatpush1.msra.mxu0 0.0
      %1051 = vmatprep.subr.mxu0 0.0
      %1052 = vmatpush1.msra.mxu0 0.0
      %1053 = vmatprep.subr.mxu0 0.0
      %1054 = vmatpush1.msra.mxu0 0.0
      %1055 = vmatprep.subr.mxu0 0.0
      %1056 = vmatpush1.msra.mxu0 0.0
      %1057 = vmatprep.subr.mxu0 0.0
      %1058 = vmatpush1.msra.mxu0 0.0
      %1059 = vmatprep.subr.mxu0 0.0
      %1060 = vmatpush1.msra.mxu0 0.0
      %1061 = vmatprep.subr.mxu0 0.0
      %1062 = vmatpush1.msra.mxu0 0.0
      %1063 = vmatprep.subr.mxu0 0.0
      %1064 = vmatpush1.msra.mxu0 0.0
      %1065 = vmatprep.subr.mxu0 0.0
      %1066 = vmatpush1.msra.mxu0 0.0
      %1067 = vmatprep.subr.mxu0 0.0
      %1068 = vmatpush1.msra.mxu0 0.0
      %1069 = vmatprep.subr.mxu0 0.0
      %1070 = vmatpush1.msra.mxu0 0.0
      %1071 = vmatprep.subr.mxu0 0.0
      %1072 = vmatpush1.msra.mxu0 0.0
      %1073 = vmatprep.subr.mxu0 0.0
      %1074 = vmatpush1.msra.mxu0 0.0
      %1075 = vmatprep.subr.mxu0 0.0
      %1076 = vmatpush1.msra.mxu0 0.0
      %1077 = vmatprep.subr.mxu0 0.0
      %1078 = vmatpush1.msra.mxu0 0.0
      %1079 = vmatprep.subr.mxu0 0.0
      %1080 = vmatpush1.msra.mxu0 0.0
      %1081 = vmatprep.subr.mxu0 0.0
      %1082 = vmatpush1.msra.mxu0 0.0
      %1083 = vmatprep.subr.mxu0 0.0
      %1084 = vmatpush1.msra.mxu0 0.0
      %1085 = vmatprep.subr.mxu0 0.0
      %1086 = vmatpush1.msra.mxu0 0.0
      %1087 = vmatprep.subr.mxu0 0.0
      %1088 = vmatpush1.msra.mxu0 0.0
      %1089 = vmatprep.subr.mxu0 0.0
      %1090 = vmatpush1.msra.mxu0 0.0
      %1091 = vmatprep.subr.mxu0 0.0
      %1092 = vmatpush1.msra.mxu0 0.0
      %1093 = vmatprep.subr.mxu0 0.0
      %1094 = vmatpush1.msra.mxu0 0.0
      %1095 = vmatprep.subr.mxu0 0.0
      %1096 = vmatpush1.msra.mxu0 0.0
      %1097 = vmatprep.subr.mxu0 0.0
      %1098 = vmatpush1.msra.mxu0 0.0
      %1099 = vmatprep.subr.mxu0 0.0
      %1100 = vmatpush1.msra.mxu0 0.0
      %1101 = vmatprep.subr.mxu0 0.0
      %1102 = vmatpush1.msra.mxu0 0.0
      %1103 = vmatprep.mubr.f32.mxu0 0.0
      %1104 = vmatmul.mubr.f32.gmra.mrb[0].mxu0 %v1034
      %v1105 = vpop.f32.mrb[0].mxu0
      %v1106 = vadd.f32 %v831, %v1105
      %v1107 = vpop.f32.mrb[0].mxu0
      %1108 = vmatprep.mubr.f32.mxu0 0.0
      %1109 = vmatmul.mubr.f32.gmra.mrb[0].mxu0 %v1037
      %v1110 = vpop.f32.mrb[0].mxu0
      %v1111 = vadd.f32 %v831, %v1110
      %v1112 = vpop.f32.mrb[0].mxu0
      %1113 = vdwg.mxu0
      %v1114 = vld [vmem:[%s735] sm:$0xff]
      %v1115 = vld [vmem:[%s735 + $0x8] sm:$0xff]
      %v1117 = vsel %vm833, %v1114, 0
      %v1120 = vsel %vm833, %v1115, 0
      %1122 = vmatprep.subr.mxu0 0.0
      %1123 = vmatpush1.msra.mxu0 %v884
      %1124 = vmatprep.subr.mxu0 0.0
      %1125 = vmatpush1.msra.mxu0 0.0
      %1126 = vmatprep.subr.mxu0 0.0
      %1127 = vmatpush1.msra.mxu0 0.0
      %1128 = vmatprep.subr.mxu0 0.0
      %1129 = vmatpush1.msra.mxu0 0.0
      %1130 = vmatprep.subr.mxu0 0.0
      %1131 = vmatpush1.msra.mxu0 0.0
      %1132 = vmatprep.subr.mxu0 0.0
      %1133 = vmatpush1.msra.mxu0 0.0
      %1134 = vmatprep.subr.mxu0 0.0
      %1135 = vmatpush1.msra.mxu0 0.0
      %1136 = vmatprep.subr.mxu0 0.0
      %1137 = vmatpush1.msra.mxu0 0.0
      %1138 = vmatprep.subr.mxu0 0.0
      %1139 = vmatpush1.msra.mxu0 0.0
      %1140 = vmatprep.subr.mxu0 0.0
      %1141 = vmatpush1.msra.mxu0 0.0
      %1142 = vmatprep.subr.mxu0 0.0
      %1143 = vmatpush1.msra.mxu0 0.0
      %1144 = vmatprep.subr.mxu0 0.0
      %1145 = vmatpush1.msra.mxu0 0.0
      %1146 = vmatprep.subr.mxu0 0.0
      %1147 = vmatpush1.msra.mxu0 0.0
      %1148 = vmatprep.subr.mxu0 0.0
      %1149 = vmatpush1.msra.mxu0 0.0
      %1150 = vmatprep.subr.mxu0 0.0
      %1151 = vmatpush1.msra.mxu0 0.0
      %1152 = vmatprep.subr.mxu0 0.0
      %1153 = vmatpush1.msra.mxu0 0.0
      %1154 = vmatprep.subr.mxu0 0.0
      %1155 = vmatpush1.msra.mxu0 0.0
      %1156 = vmatprep.subr.mxu0 0.0
      %1157 = vmatpush1.msra.mxu0 0.0
      %1158 = vmatprep.subr.mxu0 0.0
      %1159 = vmatpush1.msra.mxu0 0.0
      %1160 = vmatprep.subr.mxu0 0.0
      %1161 = vmatpush1.msra.mxu0 0.0
      %1162 = vmatprep.subr.mxu0 0.0
      %1163 = vmatpush1.msra.mxu0 0.0
      %1164 = vmatprep.subr.mxu0 0.0
      %1165 = vmatpush1.msra.mxu0 0.0
      %1166 = vmatprep.subr.mxu0 0.0
      %1167 = vmatpush1.msra.mxu0 0.0
      %1168 = vmatprep.subr.mxu0 0.0
      %1169 = vmatpush1.msra.mxu0 0.0
      %1170 = vmatprep.subr.mxu0 0.0
      %1171 = vmatpush1.msra.mxu0 0.0
      %1172 = vmatprep.subr.mxu0 0.0
      %1173 = vmatpush1.msra.mxu0 0.0
      %1174 = vmatprep.subr.mxu0 0.0
      %1175 = vmatpush1.msra.mxu0 0.0
      %1176 = vmatprep.subr.mxu0 0.0
      %1177 = vmatpush1.msra.mxu0 0.0
      %1178 = vmatprep.subr.mxu0 0.0
      %1179 = vmatpush1.msra.mxu0 0.0
      %1180 = vmatprep.subr.mxu0 0.0
      %1181 = vmatpush1.msra.mxu0 0.0
      %1182 = vmatprep.subr.mxu0 0.0
      %1183 = vmatpush1.msra.mxu0 0.0
      %1184 = vmatprep.subr.mxu0 0.0
      %1185 = vmatpush1.msra.mxu0 0.0
      %1186 = vmatprep.mubr.f32.mxu0 0.0
      %1187 = vmatmul.mubr.f32.gmra.mrb[0].mxu0 %v1117
      %v1188 = vpop.f32.mrb[0].mxu0
      %v1189 = vadd.f32 %v831, %v1188
      %v1190 = vpop.f32.mrb[0].mxu0
      %1191 = vmatprep.mubr.f32.mxu0 0.0
      %1192 = vmatmul.mubr.f32.gmra.mrb[0].mxu0 %v1120
      %v1193 = vpop.f32.mrb[0].mxu0
      %v1194 = vadd.f32 %v831, %v1193
      %v1195 = vpop.f32.mrb[0].mxu0
      %1196 = vdwg.mxu0
      %v1197 = vld [vmem:[%s761] sm:$0xff]
      %v1198 = vld [vmem:[%s748] sm:$0xff]
      %v1199 = vld [vmem:[%s748 + $0x8] sm:$0xff]
      %v1200 = vld [vmem:[%s748 + $0x10] sm:$0xff]
      %v1201 = vld [vmem:[%s748 + $0x18] sm:$0xff]
      %v1202 = vld [vmem:[%s777] sm:$0xff]
      %v1203 = vld [vmem:[%s7] sm:$0xff]
      %v1204 = vld [vmem:[%s7 + $0x8] sm:$0xff]
      %v1205 = vcombine.low %v1197, %v1199
      %v1206 = vcombine.high %v1197, %v1199
      %v1208 = vunpack.c.l.s4 1983009808
      %v1209 = vunpack.c.0.s8 %v1208
      %v1210 = vlaneseq
      %v1211 = vshrl.u32 %v1210, 7
      %v1212 = vsub.s32 %v1209, %v1211
      %v1213 = vrot.slane %v1205, %v1212
      %v1215 = vunpack.c.l.s4 1983009808
      %v1216 = vunpack.c.0.s8 %v1215
      %v1217 = vlaneseq
      %v1218 = vshrl.u32 %v1217, 7
      %v1219 = vsub.s32 %v1216, %v1218
      %v1220 = vrot.slane %v1206, %v1219
      %v1221 = vcombine.low %v1198, %v1200
      %v1222 = vcombine.high %v1198, %v1200
      %v1224 = vunpack.c.l.s4 1983009808
      %v1225 = vunpack.c.0.s8 %v1224
      %v1226 = vlaneseq
      %v1227 = vshrl.u32 %v1226, 7
      %v1228 = vsub.s32 %v1225, %v1227
      %v1229 = vrot.slane %v1221, %v1228
      %v1231 = vunpack.c.l.s4 1983009808
      %v1232 = vunpack.c.0.s8 %v1231
      %v1233 = vlaneseq
      %v1234 = vshrl.u32 %v1233, 7
      %v1235 = vsub.s32 %v1232, %v1234
      %v1236 = vrot.slane %v1222, %v1235
      %v1237 = vld [vmem:[%s748 + $0x18] sm:$0xff]
      %v1238 = vcombine.high %v1201, 0.0
      %v1240 = vunpack.c.l.s4 1983009808
      %v1241 = vunpack.c.0.s8 %v1240
      %v1242 = vlaneseq
      %v1243 = vshrl.u32 %v1242, 7
      %v1244 = vsub.s32 %v1241, %v1243
      %v1245 = vrot.slane %v1237, %v1244
      %v1247 = vunpack.c.l.s4 1983009808
      %v1248 = vunpack.c.0.s8 %v1247
      %v1249 = vlaneseq
      %v1250 = vshrl.u32 %v1249, 7
      %v1251 = vsub.s32 %v1248, %v1250
      %v1252 = vrot.slane %v1238, %v1251
      %v1253 = vld [vmem:[%s777] sm:$0xff]
      %v1254 = vcombine.high %v1202, 0.0
      %v1256 = vunpack.c.l.s4 1983009808
      %v1257 = vunpack.c.0.s8 %v1256
      %v1258 = vlaneseq
      %v1259 = vshrl.u32 %v1258, 7
      %v1260 = vsub.s32 %v1257, %v1259
      %v1261 = vrot.slane %v1253, %v1260
      %v1263 = vunpack.c.l.s4 1983009808
      %v1264 = vunpack.c.0.s8 %v1263
      %v1265 = vlaneseq
      %v1266 = vshrl.u32 %v1265, 7
      %v1267 = vsub.s32 %v1264, %v1266
      %v1268 = vrot.slane %v1254, %v1267
      %v1269 = vcombine.low %v1213, %v1229
      %v1270 = vcombine.high %v1213, %v1229
      %v1272 = vunpack.c.l.s4 1934713408
      %v1273 = vunpack.c.0.s8 %v1272
      %v1274 = vlaneseq
      %v1275 = vshrl.u32 %v1274, 7
      %v1276 = vsub.s32 %v1273, %v1275
      %v1277 = vrot.slane %v1269, %v1276
      %v1279 = vunpack.c.l.s4 1934713408
      %v1280 = vunpack.c.0.s8 %v1279
      %v1281 = vlaneseq
      %v1282 = vshrl.u32 %v1281, 7
      %v1283 = vsub.s32 %v1280, %v1282
      %v1284 = vrot.slane %v1270, %v1283
      %v1285 = vcombine.low %v1220, %v1236
      %v1286 = vcombine.high %v1220, %v1236
      %v1288 = vunpack.c.l.s4 1934713408
      %v1289 = vunpack.c.0.s8 %v1288
      %v1290 = vlaneseq
      %v1291 = vshrl.u32 %v1290, 7
      %v1292 = vsub.s32 %v1289, %v1291
      %v1293 = vrot.slane %v1285, %v1292
      %v1295 = vunpack.c.l.s4 1934713408
      %v1296 = vunpack.c.0.s8 %v1295
      %v1297 = vlaneseq
      %v1298 = vshrl.u32 %v1297, 7
      %v1299 = vsub.s32 %v1296, %v1298
      %v1300 = vrot.slane %v1286, %v1299
      %v1301 = vcombine.low %v1245, %v1261
      %v1302 = vcombine.high %v1245, %v1261
      %v1304 = vunpack.c.l.s4 1934713408
      %v1305 = vunpack.c.0.s8 %v1304
      %v1306 = vlaneseq
      %v1307 = vshrl.u32 %v1306, 7
      %v1308 = vsub.s32 %v1305, %v1307
      %v1309 = vrot.slane %v1301, %v1308
      %v1311 = vunpack.c.l.s4 1934713408
      %v1312 = vunpack.c.0.s8 %v1311
      %v1313 = vlaneseq
      %v1314 = vshrl.u32 %v1313, 7
      %v1315 = vsub.s32 %v1312, %v1314
      %v1316 = vrot.slane %v1302, %v1315
      %v1317 = vcombine.low %v1252, %v1268
      %v1318 = vcombine.high %v1252, %v1268
      %v1320 = vunpack.c.l.s4 1934713408
      %v1321 = vunpack.c.0.s8 %v1320
      %v1322 = vlaneseq
      %v1323 = vshrl.u32 %v1322, 7
      %v1324 = vsub.s32 %v1321, %v1323
      %v1325 = vrot.slane %v1317, %v1324
      %v1327 = vunpack.c.l.s4 1934713408
      %v1328 = vunpack.c.0.s8 %v1327
      %v1329 = vlaneseq
      %v1330 = vshrl.u32 %v1329, 7
      %v1331 = vsub.s32 %v1328, %v1330
      %v1332 = vrot.slane %v1318, %v1331
      %v1333 = vcombine.low %v1277, %v1309
      %v1334 = vcombine.high %v1277, %v1309
      %v1335 = vcombine.low %v1284, %v1316
      %v1336 = vcombine.high %v1284, %v1316
      %v1337 = vcombine.low %v1293, %v1325
      %v1338 = vcombine.high %v1293, %v1325
      %v1339 = vcombine.low %v1300, %v1332
      %v1340 = vcombine.high %v1300, %v1332
      %v1341 = vcombine.low %v1333, %v1335
      %v1342 = vcombine.high %v1333, %v1335
      %v1344 = vunpack.c.l.s4 1983009808
      %v1345 = vunpack.c.0.s8 %v1344
      %v1346 = vlaneseq
      %v1347 = vshrl.u32 %v1346, 7
      %v1348 = vsub.s32 %v1345, %v1347
      %v1349 = vrot.slane %v1341, %v1348
      %v1351 = vunpack.c.l.s4 1983009808
      %v1352 = vunpack.c.0.s8 %v1351
      %v1353 = vlaneseq
      %v1354 = vshrl.u32 %v1353, 7
      %v1355 = vsub.s32 %v1352, %v1354
      %v1356 = vrot.slane %v1342, %v1355
      %v1357 = vcombine.low %v1334, %v1336
      %v1358 = vcombine.high %v1334, %v1336
      %v1360 = vunpack.c.l.s4 1983009808
      %v1361 = vunpack.c.0.s8 %v1360
      %v1362 = vlaneseq
      %v1363 = vshrl.u32 %v1362, 7
      %v1364 = vsub.s32 %v1361, %v1363
      %v1365 = vrot.slane %v1357, %v1364
      %v1367 = vunpack.c.l.s4 1983009808
      %v1368 = vunpack.c.0.s8 %v1367
      %v1369 = vlaneseq
      %v1370 = vshrl.u32 %v1369, 7
      %v1371 = vsub.s32 %v1368, %v1370
      %v1372 = vrot.slane %v1358, %v1371
      %v1373 = vcombine.low %v1337, %v1339
      %v1374 = vcombine.high %v1337, %v1339
      %v1376 = vunpack.c.l.s4 1983009808
      %v1377 = vunpack.c.0.s8 %v1376
      %v1378 = vlaneseq
      %v1379 = vshrl.u32 %v1378, 7
      %v1380 = vsub.s32 %v1377, %v1379
      %v1381 = vrot.slane %v1373, %v1380
      %v1383 = vunpack.c.l.s4 1983009808
      %v1384 = vunpack.c.0.s8 %v1383
      %v1385 = vlaneseq
      %v1386 = vshrl.u32 %v1385, 7
      %v1387 = vsub.s32 %v1384, %v1386
      %v1388 = vrot.slane %v1374, %v1387
      %v1389 = vcombine.low %v1338, %v1340
      %v1390 = vcombine.high %v1338, %v1340
      %v1392 = vunpack.c.l.s4 1983009808
      %v1393 = vunpack.c.0.s8 %v1392
      %v1394 = vlaneseq
      %v1395 = vshrl.u32 %v1394, 7
      %v1396 = vsub.s32 %v1393, %v1395
      %v1397 = vrot.slane %v1389, %v1396
      %v1399 = vunpack.c.l.s4 1983009808
      %v1400 = vunpack.c.0.s8 %v1399
      %v1401 = vlaneseq
      %v1402 = vshrl.u32 %v1401, 7
      %v1403 = vsub.s32 %v1400, %v1402
      %v1404 = vrot.slane %v1390, %v1403
      %v1405 = vcombine.low %v1349, %v1365
      %v1406 = vcombine.high %v1349, %v1365
      %v1408 = vunpack.c.l.s4 1934713408
      %v1409 = vunpack.c.0.s8 %v1408
      %v1410 = vlaneseq
      %v1411 = vshrl.u32 %v1410, 7
      %v1412 = vsub.s32 %v1409, %v1411
      %v1413 = vrot.slane %v1405, %v1412
      %v1415 = vunpack.c.l.s4 1934713408
      %v1416 = vunpack.c.0.s8 %v1415
      %v1417 = vlaneseq
      %v1418 = vshrl.u32 %v1417, 7
      %v1419 = vsub.s32 %v1416, %v1418
      %v1420 = vrot.slane %v1406, %v1419
      %v1421 = vcombine.low %v1356, %v1372
      %v1423 = vunpack.c.l.s4 1934713408
      %v1424 = vunpack.c.0.s8 %v1423
      %v1425 = vlaneseq
      %v1426 = vshrl.u32 %v1425, 7
      %v1427 = vsub.s32 %v1424, %v1426
      %v1428 = vrot.slane %v1421, %v1427
      %v1429 = vcombine.low %v1381, %v1397
      %v1430 = vcombine.high %v1381, %v1397
      %v1432 = vunpack.c.l.s4 1934713408
      %v1433 = vunpack.c.0.s8 %v1432
      %v1434 = vlaneseq
      %v1435 = vshrl.u32 %v1434, 7
      %v1436 = vsub.s32 %v1433, %v1435
      %v1437 = vrot.slane %v1429, %v1436
      %v1439 = vunpack.c.l.s4 1934713408
      %v1440 = vunpack.c.0.s8 %v1439
      %v1441 = vlaneseq
      %v1442 = vshrl.u32 %v1441, 7
      %v1443 = vsub.s32 %v1440, %v1442
      %v1444 = vrot.slane %v1430, %v1443
      %v1445 = vcombine.low %v1388, %v1404
      %v1447 = vunpack.c.l.s4 1934713408
      %v1448 = vunpack.c.0.s8 %v1447
      %v1449 = vlaneseq
      %v1450 = vshrl.u32 %v1449, 7
      %v1451 = vsub.s32 %v1448, %v1450
      %v1452 = vrot.slane %v1445, %v1451
      %v1453 = vcombine.low %v1413, %v1437
      %v1454 = vcombine.high %v1413, %v1437
      %v1455 = vcombine.low %v1420, %v1444
      %v1456 = vcombine.high %v1420, %v1444
      %v1457 = vcombine.low %v1428, %v1452
      %v1458 = vcombine.high %v1428, %v1452
      %1460 = vrot.lane.b32.xlu0 %v1454, 8
      %v1461 = vpop.permute.xlu0 %1460
      %1464 = vrot.lane.b32.xlu0 %v1455, 16
      %v1465 = vpop.permute.xlu0 %1464
      %1468 = vrot.lane.b32.xlu0 %v1456, 24
      %v1469 = vpop.permute.xlu0 %1468
      %1472 = vrot.lane.b32.xlu0 %v1457, 32
      %v1473 = vpop.permute.xlu0 %1472
      %1476 = vrot.lane.b32.xlu0 %v1458, 40
      %v1477 = vpop.permute.xlu0 %1476
      %vm1479 = vcmask 64512
      %v1480 = vsel %vm1479, %v1453, %v1461
      %vm1481 = vcmask 130048
      %v1482 = vsel %vm1481, %v1480, %v1465
      %vm1483 = vcmask 195584
      %v1484 = vsel %vm1483, %v1482, %v1469
      %vm1485 = vcmask 261120
      %v1486 = vsel %vm1485, %v1484, %v1473
      %vm1487 = vcmask 326656
      %v1488 = vsel %vm1487, %v1486, %v1477
      %v1489 = vcombine.low 0.0, 0.0
      %v1490 = vcombine.high 0.0, 0.0
      %v1492 = vunpack.c.l.s4 1983009808
      %v1493 = vunpack.c.0.s8 %v1492
      %v1494 = vlaneseq
      %v1495 = vshrl.u32 %v1494, 7
      %v1496 = vsub.s32 %v1493, %v1495
      %v1497 = vrot.slane %v1489, %v1496
      %v1499 = vunpack.c.l.s4 1983009808
      %v1500 = vunpack.c.0.s8 %v1499
      %v1501 = vlaneseq
      %v1502 = vshrl.u32 %v1501, 7
      %v1503 = vsub.s32 %v1500, %v1502
      %v1504 = vrot.slane %v1490, %v1503
      %v1505 = vcombine.low %v1497, %v1497
      %v1506 = vcombine.high %v1497, %v1497
      %v1508 = vunpack.c.l.s4 1934713408
      %v1509 = vunpack.c.0.s8 %v1508
      %v1510 = vlaneseq
      %v1511 = vshrl.u32 %v1510, 7
      %v1512 = vsub.s32 %v1509, %v1511
      %v1513 = vrot.slane %v1505, %v1512
      %v1515 = vunpack.c.l.s4 1934713408
      %v1516 = vunpack.c.0.s8 %v1515
      %v1517 = vlaneseq
      %v1518 = vshrl.u32 %v1517, 7
      %v1519 = vsub.s32 %v1516, %v1518
      %v1520 = vrot.slane %v1506, %v1519
      %v1521 = vcombine.low %v1504, %v1504
      %v1523 = vunpack.c.l.s4 1934713408
      %v1524 = vunpack.c.0.s8 %v1523
      %v1525 = vlaneseq
      %v1526 = vshrl.u32 %v1525, 7
      %v1527 = vsub.s32 %v1524, %v1526
      %v1528 = vrot.slane %v1521, %v1527
      %v1529 = vcombine.low %v1513, %v1513
      %v1530 = vcombine.high %v1513, %v1513
      %v1531 = vcombine.low %v1520, %v1520
      %v1532 = vcombine.high %v1520, %v1520
      %v1533 = vcombine.low %v1528, %v1528
      %v1534 = vcombine.high %v1528, %v1528
      %1536 = vrot.lane.b32.xlu0 %v1530, 8
      %v1537 = vpop.permute.xlu0 %1536
      %1540 = vrot.lane.b32.xlu0 %v1531, 16
      %v1541 = vpop.permute.xlu0 %1540
      %1544 = vrot.lane.b32.xlu0 %v1532, 24
      %v1545 = vpop.permute.xlu0 %1544
      %1548 = vrot.lane.b32.xlu0 %v1533, 32
      %v1549 = vpop.permute.xlu0 %1548
      %1552 = vrot.lane.b32.xlu0 %v1534, 40
      %v1553 = vpop.permute.xlu0 %1552
      %v1555 = vsel %vm1479, %v1529, %v1537
      %v1556 = vsel %vm1481, %v1555, %v1541
      %v1557 = vsel %vm1483, %v1556, %v1545
      %v1558 = vsel %vm1485, %v1557, %v1549
      %v1559 = vsel %vm1487, %v1558, %v1553
      %v1561 = vsel %vm1479, %v1203, 0
      %v1564 = vsel %vm1479, %v1204, 0
      %1566 = vmatprep.subr.mxu0 0.0
      %1567 = vmatpush1.msra.mxu0 %v1488
      %1568 = vmatprep.subr.mxu0 0.0
      %1569 = vmatpush1.msra.mxu0 0.0
      %1570 = vmatprep.subr.mxu0 0.0
      %1571 = vmatpush1.msra.mxu0 0.0
      %1572 = vmatprep.subr.mxu0 0.0
      %1573 = vmatpush1.msra.mxu0 0.0
      %1574 = vmatprep.subr.mxu0 0.0
      %1575 = vmatpush1.msra.mxu0 0.0
      %1576 = vmatprep.subr.mxu0 0.0
      %1577 = vmatpush1.msra.mxu0 0.0
      %1578 = vmatprep.subr.mxu0 0.0
      %1579 = vmatpush1.msra.mxu0 0.0
      %1580 = vmatprep.subr.mxu0 0.0
      %1581 = vmatpush1.msra.mxu0 0.0
      %1582 = vmatprep.subr.mxu0 0.0
      %1583 = vmatpush1.msra.mxu0 0.0
      %1584 = vmatprep.subr.mxu0 0.0
      %1585 = vmatpush1.msra.mxu0 0.0
      %1586 = vmatprep.subr.mxu0 0.0
      %1587 = vmatpush1.msra.mxu0 0.0
      %1588 = vmatprep.subr.mxu0 0.0
      %1589 = vmatpush1.msra.mxu0 0.0
      %1590 = vmatprep.subr.mxu0 0.0
      %1591 = vmatpush1.msra.mxu0 0.0
      %1592 = vmatprep.subr.mxu0 0.0
      %1593 = vmatpush1.msra.mxu0 0.0
      %1594 = vmatprep.subr.mxu0 0.0
      %1595 = vmatpush1.msra.mxu0 0.0
      %1596 = vmatprep.subr.mxu0 0.0
      %1597 = vmatpush1.msra.mxu0 0.0
      %1598 = vmatprep.subr.mxu0 0.0
      %1599 = vmatpush1.msra.mxu0 0.0
      %1600 = vmatprep.subr.mxu0 0.0
      %1601 = vmatpush1.msra.mxu0 0.0
      %1602 = vmatprep.subr.mxu0 0.0
      %1603 = vmatpush1.msra.mxu0 0.0
      %1604 = vmatprep.subr.mxu0 0.0
      %1605 = vmatpush1.msra.mxu0 0.0
      %1606 = vmatprep.subr.mxu0 0.0
      %1607 = vmatpush1.msra.mxu0 0.0
      %1608 = vmatprep.subr.mxu0 0.0
      %1609 = vmatpush1.msra.mxu0 0.0
      %1610 = vmatprep.subr.mxu0 0.0
      %1611 = vmatpush1.msra.mxu0 0.0
      %1612 = vmatprep.subr.mxu0 0.0
      %1613 = vmatpush1.msra.mxu0 0.0
      %1614 = vmatprep.subr.mxu0 0.0
      %1615 = vmatpush1.msra.mxu0 0.0
      %1616 = vmatprep.subr.mxu0 0.0
      %1617 = vmatpush1.msra.mxu0 0.0
      %1618 = vmatprep.subr.mxu0 0.0
      %1619 = vmatpush1.msra.mxu0 0.0
      %1620 = vmatprep.subr.mxu0 0.0
      %1621 = vmatpush1.msra.mxu0 0.0
      %1622 = vmatprep.subr.mxu0 0.0
      %1623 = vmatpush1.msra.mxu0 0.0
      %1624 = vmatprep.subr.mxu0 0.0
      %1625 = vmatpush1.msra.mxu0 0.0
      %1626 = vmatprep.subr.mxu0 0.0
      %1627 = vmatpush1.msra.mxu0 0.0
      %1628 = vmatprep.subr.mxu0 0.0
      %1629 = vmatpush1.msra.mxu0 0.0
      %1630 = vmatprep.mubr.f32.mxu0 0.0
      %1631 = vmatmul.mubr.f32.gmra.mrb[0].mxu0 %v1561
      %v1632 = vpop.f32.mrb[0].mxu0
      %v1633 = vadd.f32 %v1559, %v1632
      %v1634 = vpop.f32.mrb[0].mxu0
      %1635 = vmatprep.mubr.f32.mxu0 0.0
      %1636 = vmatmul.mubr.f32.gmra.mrb[0].mxu0 %v1564
      %v1637 = vpop.f32.mrb[0].mxu0
      %v1638 = vadd.f32 %v1559, %v1637
      %v1639 = vpop.f32.mrb[0].mxu0
      %1640 = vdwg.mxu0
      %1643 = vrot.lane.b32.xlu0 %v1633, 120
      %v1644 = vpop.permute.xlu0 %1643
      %1645 = vrot.lane.b32.xlu0 %v1638, 120
      %v1646 = vpop.permute.xlu0 %1645
      %1649 = vrot.lane.b32.xlu0 %v1633, 112
      %v1650 = vpop.permute.xlu0 %1649
      %1651 = vrot.lane.b32.xlu0 %v1638, 112
      %v1652 = vpop.permute.xlu0 %1651
      %1655 = vrot.lane.b32.xlu0 %v1633, 104
      %v1656 = vpop.permute.xlu0 %1655
      %1657 = vrot.lane.b32.xlu0 %v1638, 104
      %v1658 = vpop.permute.xlu0 %1657
      %1661 = vrot.lane.b32.xlu0 %v1633, 96
      %v1662 = vpop.permute.xlu0 %1661
      %1663 = vrot.lane.b32.xlu0 %v1638, 96
      %v1664 = vpop.permute.xlu0 %1663
      %1667 = vrot.lane.b32.xlu0 %v1633, 88
      %v1668 = vpop.permute.xlu0 %1667
      %1669 = vrot.lane.b32.xlu0 %v1638, 88
      %v1670 = vpop.permute.xlu0 %1669
      %v1673 = vcombine.low %v1633, %v1650
      %v1674 = vcombine.high %v1633, %v1650
      %v1676 = vunpack.c.l.s4 1983009808
      %v1677 = vunpack.c.0.s8 %v1676
      %v1678 = vlaneseq
      %v1679 = vshrl.u32 %v1678, 7
      %v1680 = vsub.s32 %v1677, %v1679
      %v1681 = vrot.slane %v1673, %v1680
      %v1683 = vunpack.c.l.s4 1983009808
      %v1684 = vunpack.c.0.s8 %v1683
      %v1685 = vlaneseq
      %v1686 = vshrl.u32 %v1685, 7
      %v1687 = vsub.s32 %v1684, %v1686
      %v1688 = vrot.slane %v1674, %v1687
      %v1689 = vcombine.low %v1644, %v1656
      %v1690 = vcombine.high %v1644, %v1656
      %v1692 = vunpack.c.l.s4 1983009808
      %v1693 = vunpack.c.0.s8 %v1692
      %v1694 = vlaneseq
      %v1695 = vshrl.u32 %v1694, 7
      %v1696 = vsub.s32 %v1693, %v1695
      %v1697 = vrot.slane %v1689, %v1696
      %v1699 = vunpack.c.l.s4 1983009808
      %v1700 = vunpack.c.0.s8 %v1699
      %v1701 = vlaneseq
      %v1702 = vshrl.u32 %v1701, 7
      %v1703 = vsub.s32 %v1700, %v1702
      %v1704 = vrot.slane %v1690, %v1703
      %v1705 = vcombine.high %v1662, 0.0
      %v1707 = vunpack.c.l.s4 1983009808
      %v1708 = vunpack.c.0.s8 %v1707
      %v1709 = vlaneseq
      %v1710 = vshrl.u32 %v1709, 7
      %v1711 = vsub.s32 %v1708, %v1710
      %v1712 = vrot.slane %v1662, %v1711
      %v1714 = vunpack.c.l.s4 1983009808
      %v1715 = vunpack.c.0.s8 %v1714
      %v1716 = vlaneseq
      %v1717 = vshrl.u32 %v1716, 7
      %v1718 = vsub.s32 %v1715, %v1717
      %v1719 = vrot.slane %v1705, %v1718
      %v1720 = vcombine.high %v1668, 0.0
      %v1722 = vunpack.c.l.s4 1983009808
      %v1723 = vunpack.c.0.s8 %v1722
      %v1724 = vlaneseq
      %v1725 = vshrl.u32 %v1724, 7
      %v1726 = vsub.s32 %v1723, %v1725
      %v1727 = vrot.slane %v1668, %v1726
      %v1729 = vunpack.c.l.s4 1983009808
      %v1730 = vunpack.c.0.s8 %v1729
      %v1731 = vlaneseq
      %v1732 = vshrl.u32 %v1731, 7
      %v1733 = vsub.s32 %v1730, %v1732
      %v1734 = vrot.slane %v1720, %v1733
      %v1735 = vcombine.low %v1681, %v1697
      %v1736 = vcombine.high %v1681, %v1697
      %v1738 = vunpack.c.l.s4 1934713408
      %v1739 = vunpack.c.0.s8 %v1738
      %v1740 = vlaneseq
      %v1741 = vshrl.u32 %v1740, 7
      %v1742 = vsub.s32 %v1739, %v1741
      %v1743 = vrot.slane %v1735, %v1742
      %v1745 = vunpack.c.l.s4 1934713408
      %v1746 = vunpack.c.0.s8 %v1745
      %v1747 = vlaneseq
      %v1748 = vshrl.u32 %v1747, 7
      %v1749 = vsub.s32 %v1746, %v1748
      %v1750 = vrot.slane %v1736, %v1749
      %v1751 = vcombine.low %v1688, %v1704
      %v1752 = vcombine.high %v1688, %v1704
      %v1754 = vunpack.c.l.s4 1934713408
      %v1755 = vunpack.c.0.s8 %v1754
      %v1756 = vlaneseq
      %v1757 = vshrl.u32 %v1756, 7
      %v1758 = vsub.s32 %v1755, %v1757
      %v1759 = vrot.slane %v1751, %v1758
      %v1761 = vunpack.c.l.s4 1934713408
      %v1762 = vunpack.c.0.s8 %v1761
      %v1763 = vlaneseq
      %v1764 = vshrl.u32 %v1763, 7
      %v1765 = vsub.s32 %v1762, %v1764
      %v1766 = vrot.slane %v1752, %v1765
      %v1767 = vcombine.low %v1712, %v1727
      %v1768 = vcombine.high %v1712, %v1727
      %v1770 = vunpack.c.l.s4 1934713408
      %v1771 = vunpack.c.0.s8 %v1770
      %v1772 = vlaneseq
      %v1773 = vshrl.u32 %v1772, 7
      %v1774 = vsub.s32 %v1771, %v1773
      %v1775 = vrot.slane %v1767, %v1774
      %v1777 = vunpack.c.l.s4 1934713408
      %v1778 = vunpack.c.0.s8 %v1777
      %v1779 = vlaneseq
      %v1780 = vshrl.u32 %v1779, 7
      %v1781 = vsub.s32 %v1778, %v1780
      %v1782 = vrot.slane %v1768, %v1781
      %v1783 = vcombine.low %v1719, %v1734
      %v1784 = vcombine.high %v1719, %v1734
      %v1786 = vunpack.c.l.s4 1934713408
      %v1787 = vunpack.c.0.s8 %v1786
      %v1788 = vlaneseq
      %v1789 = vshrl.u32 %v1788, 7
      %v1790 = vsub.s32 %v1787, %v1789
      %v1791 = vrot.slane %v1783, %v1790
      %v1793 = vunpack.c.l.s4 1934713408
      %v1794 = vunpack.c.0.s8 %v1793
      %v1795 = vlaneseq
      %v1796 = vshrl.u32 %v1795, 7
      %v1797 = vsub.s32 %v1794, %v1796
      %v1798 = vrot.slane %v1784, %v1797
      %v1799 = vcombine.low %v1743, %v1775
      %v1800 = vcombine.high %v1743, %v1775
      %v1801 = vcombine.low %v1750, %v1782
      %v1802 = vcombine.high %v1750, %v1782
      %v1803 = vcombine.low %v1759, %v1791
      %v1804 = vcombine.high %v1759, %v1791
      %v1805 = vcombine.low %v1766, %v1798
      %v1806 = vcombine.high %v1766, %v1798
      %v1807 = vcombine.low %v1638, %v1652
      %v1808 = vcombine.high %v1638, %v1652
      %v1810 = vunpack.c.l.s4 1983009808
      %v1811 = vunpack.c.0.s8 %v1810
      %v1812 = vlaneseq
      %v1813 = vshrl.u32 %v1812, 7
      %v1814 = vsub.s32 %v1811, %v1813
      %v1815 = vrot.slane %v1807, %v1814
      %v1817 = vunpack.c.l.s4 1983009808
      %v1818 = vunpack.c.0.s8 %v1817
      %v1819 = vlaneseq
      %v1820 = vshrl.u32 %v1819, 7
      %v1821 = vsub.s32 %v1818, %v1820
      %v1822 = vrot.slane %v1808, %v1821
      %v1823 = vcombine.low %v1646, %v1658
      %v1824 = vcombine.high %v1646, %v1658
      %v1826 = vunpack.c.l.s4 1983009808
      %v1827 = vunpack.c.0.s8 %v1826
      %v1828 = vlaneseq
      %v1829 = vshrl.u32 %v1828, 7
      %v1830 = vsub.s32 %v1827, %v1829
      %v1831 = vrot.slane %v1823, %v1830
      %v1833 = vunpack.c.l.s4 1983009808
      %v1834 = vunpack.c.0.s8 %v1833
      %v1835 = vlaneseq
      %v1836 = vshrl.u32 %v1835, 7
      %v1837 = vsub.s32 %v1834, %v1836
      %v1838 = vrot.slane %v1824, %v1837
      %v1839 = vcombine.high %v1664, 0.0
      %v1841 = vunpack.c.l.s4 1983009808
      %v1842 = vunpack.c.0.s8 %v1841
      %v1843 = vlaneseq
      %v1844 = vshrl.u32 %v1843, 7
      %v1845 = vsub.s32 %v1842, %v1844
      %v1846 = vrot.slane %v1664, %v1845
      %v1848 = vunpack.c.l.s4 1983009808
      %v1849 = vunpack.c.0.s8 %v1848
      %v1850 = vlaneseq
      %v1851 = vshrl.u32 %v1850, 7
      %v1852 = vsub.s32 %v1849, %v1851
      %v1853 = vrot.slane %v1839, %v1852
      %v1854 = vcombine.high %v1670, 0.0
      %v1856 = vunpack.c.l.s4 1983009808
      %v1857 = vunpack.c.0.s8 %v1856
      %v1858 = vlaneseq
      %v1859 = vshrl.u32 %v1858, 7
      %v1860 = vsub.s32 %v1857, %v1859
      %v1861 = vrot.slane %v1670, %v1860
      %v1863 = vunpack.c.l.s4 1983009808
      %v1864 = vunpack.c.0.s8 %v1863
      %v1865 = vlaneseq
      %v1866 = vshrl.u32 %v1865, 7
      %v1867 = vsub.s32 %v1864, %v1866
      %v1868 = vrot.slane %v1854, %v1867
      %v1869 = vcombine.low %v1815, %v1831
      %v1870 = vcombine.high %v1815, %v1831
      %v1872 = vunpack.c.l.s4 1934713408
      %v1873 = vunpack.c.0.s8 %v1872
      %v1874 = vlaneseq
      %v1875 = vshrl.u32 %v1874, 7
      %v1876 = vsub.s32 %v1873, %v1875
      %v1877 = vrot.slane %v1869, %v1876
      %v1879 = vunpack.c.l.s4 1934713408
      %v1880 = vunpack.c.0.s8 %v1879
      %v1881 = vlaneseq
      %v1882 = vshrl.u32 %v1881, 7
      %v1883 = vsub.s32 %v1880, %v1882
      %v1884 = vrot.slane %v1870, %v1883
      %v1885 = vcombine.low %v1822, %v1838
      %v1886 = vcombine.high %v1822, %v1838
      %v1888 = vunpack.c.l.s4 1934713408
      %v1889 = vunpack.c.0.s8 %v1888
      %v1890 = vlaneseq
      %v1891 = vshrl.u32 %v1890, 7
      %v1892 = vsub.s32 %v1889, %v1891
      %v1893 = vrot.slane %v1885, %v1892
      %v1895 = vunpack.c.l.s4 1934713408
      %v1896 = vunpack.c.0.s8 %v1895
      %v1897 = vlaneseq
      %v1898 = vshrl.u32 %v1897, 7
      %v1899 = vsub.s32 %v1896, %v1898
      %v1900 = vrot.slane %v1886, %v1899
      %v1901 = vcombine.low %v1846, %v1861
      %v1902 = vcombine.high %v1846, %v1861
      %v1904 = vunpack.c.l.s4 1934713408
      %v1905 = vunpack.c.0.s8 %v1904
      %v1906 = vlaneseq
      %v1907 = vshrl.u32 %v1906, 7
      %v1908 = vsub.s32 %v1905, %v1907
      %v1909 = vrot.slane %v1901, %v1908
      %v1911 = vunpack.c.l.s4 1934713408
      %v1912 = vunpack.c.0.s8 %v1911
      %v1913 = vlaneseq
      %v1914 = vshrl.u32 %v1913, 7
      %v1915 = vsub.s32 %v1912, %v1914
      %v1916 = vrot.slane %v1902, %v1915
      %v1917 = vcombine.low %v1853, %v1868
      %v1918 = vcombine.high %v1853, %v1868
      %v1920 = vunpack.c.l.s4 1934713408
      %v1921 = vunpack.c.0.s8 %v1920
      %v1922 = vlaneseq
      %v1923 = vshrl.u32 %v1922, 7
      %v1924 = vsub.s32 %v1921, %v1923
      %v1925 = vrot.slane %v1917, %v1924
      %v1927 = vunpack.c.l.s4 1934713408
      %v1928 = vunpack.c.0.s8 %v1927
      %v1929 = vlaneseq
      %v1930 = vshrl.u32 %v1929, 7
      %v1931 = vsub.s32 %v1928, %v1930
      %v1932 = vrot.slane %v1918, %v1931
      %v1933 = vcombine.low %v1877, %v1909
      %v1934 = vcombine.high %v1877, %v1909
      %v1935 = vcombine.low %v1884, %v1916
      %v1936 = vcombine.high %v1884, %v1916
      %v1937 = vcombine.low %v1893, %v1925
      %v1938 = vcombine.high %v1893, %v1925
      %v1939 = vcombine.low %v1900, %v1932
      %v1940 = vcombine.high %v1900, %v1932
      %v1941 = vcombine.low %v1799, %v1801
      %v1942 = vcombine.high %v1799, %v1801
      %v1944 = vunpack.c.l.s4 1983009808
      %v1945 = vunpack.c.0.s8 %v1944
      %v1946 = vlaneseq
      %v1947 = vshrl.u32 %v1946, 7
      %v1948 = vsub.s32 %v1945, %v1947
      %v1949 = vrot.slane %v1941, %v1948
      %v1951 = vunpack.c.l.s4 1983009808
      %v1952 = vunpack.c.0.s8 %v1951
      %v1953 = vlaneseq
      %v1954 = vshrl.u32 %v1953, 7
      %v1955 = vsub.s32 %v1952, %v1954
      %v1956 = vrot.slane %v1942, %v1955
      %v1957 = vcombine.low %v1800, %v1802
      %v1958 = vcombine.high %v1800, %v1802
      %v1960 = vunpack.c.l.s4 1983009808
      %v1961 = vunpack.c.0.s8 %v1960
      %v1962 = vlaneseq
      %v1963 = vshrl.u32 %v1962, 7
      %v1964 = vsub.s32 %v1961, %v1963
      %v1965 = vrot.slane %v1957, %v1964
      %v1967 = vunpack.c.l.s4 1983009808
      %v1968 = vunpack.c.0.s8 %v1967
      %v1969 = vlaneseq
      %v1970 = vshrl.u32 %v1969, 7
      %v1971 = vsub.s32 %v1968, %v1970
      %v1972 = vrot.slane %v1958, %v1971
      %v1973 = vcombine.low %v1803, %v1805
      %v1974 = vcombine.high %v1803, %v1805
      %v1976 = vunpack.c.l.s4 1983009808
      %v1977 = vunpack.c.0.s8 %v1976
      %v1978 = vlaneseq
      %v1979 = vshrl.u32 %v1978, 7
      %v1980 = vsub.s32 %v1977, %v1979
      %v1981 = vrot.slane %v1973, %v1980
      %v1983 = vunpack.c.l.s4 1983009808
      %v1984 = vunpack.c.0.s8 %v1983
      %v1985 = vlaneseq
      %v1986 = vshrl.u32 %v1985, 7
      %v1987 = vsub.s32 %v1984, %v1986
      %v1988 = vrot.slane %v1974, %v1987
      %v1989 = vcombine.low %v1804, %v1806
      %v1990 = vcombine.high %v1804, %v1806
      %v1992 = vunpack.c.l.s4 1983009808
      %v1993 = vunpack.c.0.s8 %v1992
      %v1994 = vlaneseq
      %v1995 = vshrl.u32 %v1994, 7
      %v1996 = vsub.s32 %v1993, %v1995
      %v1997 = vrot.slane %v1989, %v1996
      %v1999 = vunpack.c.l.s4 1983009808
      %v2000 = vunpack.c.0.s8 %v1999
      %v2001 = vlaneseq
      %v2002 = vshrl.u32 %v2001, 7
      %v2003 = vsub.s32 %v2000, %v2002
      %v2004 = vrot.slane %v1990, %v2003
      %v2005 = vcombine.low %v1949, %v1965
      %v2006 = vcombine.high %v1949, %v1965
      %v2008 = vunpack.c.l.s4 1934713408
      %v2009 = vunpack.c.0.s8 %v2008
      %v2010 = vlaneseq
      %v2011 = vshrl.u32 %v2010, 7
      %v2012 = vsub.s32 %v2009, %v2011
      %v2013 = vrot.slane %v2005, %v2012
      %v2015 = vunpack.c.l.s4 1934713408
      %v2016 = vunpack.c.0.s8 %v2015
      %v2017 = vlaneseq
      %v2018 = vshrl.u32 %v2017, 7
      %v2019 = vsub.s32 %v2016, %v2018
      %v2020 = vrot.slane %v2006, %v2019
      %v2021 = vcombine.low %v1956, %v1972
      %v2023 = vunpack.c.l.s4 1934713408
      %v2024 = vunpack.c.0.s8 %v2023
      %v2025 = vlaneseq
      %v2026 = vshrl.u32 %v2025, 7
      %v2027 = vsub.s32 %v2024, %v2026
      %v2028 = vrot.slane %v2021, %v2027
      %v2029 = vcombine.low %v1981, %v1997
      %v2030 = vcombine.high %v1981, %v1997
      %v2032 = vunpack.c.l.s4 1934713408
      %v2033 = vunpack.c.0.s8 %v2032
      %v2034 = vlaneseq
      %v2035 = vshrl.u32 %v2034, 7
      %v2036 = vsub.s32 %v2033, %v2035
      %v2037 = vrot.slane %v2029, %v2036
      %v2039 = vunpack.c.l.s4 1934713408
      %v2040 = vunpack.c.0.s8 %v2039
      %v2041 = vlaneseq
      %v2042 = vshrl.u32 %v2041, 7
      %v2043 = vsub.s32 %v2040, %v2042
      %v2044 = vrot.slane %v2030, %v2043
      %v2045 = vcombine.low %v1988, %v2004
      %v2047 = vunpack.c.l.s4 1934713408
      %v2048 = vunpack.c.0.s8 %v2047
      %v2049 = vlaneseq
      %v2050 = vshrl.u32 %v2049, 7
      %v2051 = vsub.s32 %v2048, %v2050
      %v2052 = vrot.slane %v2045, %v2051
      %v2053 = vcombine.low %v2013, %v2037
      %v2054 = vcombine.high %v2013, %v2037
      %v2055 = vcombine.low %v2020, %v2044
      %v2056 = vcombine.high %v2020, %v2044
      %v2057 = vcombine.low %v2028, %v2052
      %v2058 = vcombine.high %v2028, %v2052
      %v2059 = vcombine.low %v1933, %v1935
      %v2060 = vcombine.high %v1933, %v1935
      %v2062 = vunpack.c.l.s4 1983009808
      %v2063 = vunpack.c.0.s8 %v2062
      %v2064 = vlaneseq
      %v2065 = vshrl.u32 %v2064, 7
      %v2066 = vsub.s32 %v2063, %v2065
      %v2067 = vrot.slane %v2059, %v2066
      %v2069 = vunpack.c.l.s4 1983009808
      %v2070 = vunpack.c.0.s8 %v2069
      %v2071 = vlaneseq
      %v2072 = vshrl.u32 %v2071, 7
      %v2073 = vsub.s32 %v2070, %v2072
      %v2074 = vrot.slane %v2060, %v2073
      %v2075 = vcombine.low %v1934, %v1936
      %v2076 = vcombine.high %v1934, %v1936
      %v2078 = vunpack.c.l.s4 1983009808
      %v2079 = vunpack.c.0.s8 %v2078
      %v2080 = vlaneseq
      %v2081 = vshrl.u32 %v2080, 7
      %v2082 = vsub.s32 %v2079, %v2081
      %v2083 = vrot.slane %v2075, %v2082
      %v2085 = vunpack.c.l.s4 1983009808
      %v2086 = vunpack.c.0.s8 %v2085
      %v2087 = vlaneseq
      %v2088 = vshrl.u32 %v2087, 7
      %v2089 = vsub.s32 %v2086, %v2088
      %v2090 = vrot.slane %v2076, %v2089
      %v2091 = vcombine.low %v1937, %v1939
      %v2092 = vcombine.high %v1937, %v1939
      %v2094 = vunpack.c.l.s4 1983009808
      %v2095 = vunpack.c.0.s8 %v2094
      %v2096 = vlaneseq
      %v2097 = vshrl.u32 %v2096, 7
      %v2098 = vsub.s32 %v2095, %v2097
      %v2099 = vrot.slane %v2091, %v2098
      %v2101 = vunpack.c.l.s4 1983009808
      %v2102 = vunpack.c.0.s8 %v2101
      %v2103 = vlaneseq
      %v2104 = vshrl.u32 %v2103, 7
      %v2105 = vsub.s32 %v2102, %v2104
      %v2106 = vrot.slane %v2092, %v2105
      %v2107 = vcombine.low %v1938, %v1940
      %v2108 = vcombine.high %v1938, %v1940
      %v2110 = vunpack.c.l.s4 1983009808
      %v2111 = vunpack.c.0.s8 %v2110
      %v2112 = vlaneseq
      %v2113 = vshrl.u32 %v2112, 7
      %v2114 = vsub.s32 %v2111, %v2113
      %v2115 = vrot.slane %v2107, %v2114
      %v2117 = vunpack.c.l.s4 1983009808
      %v2118 = vunpack.c.0.s8 %v2117
      %v2119 = vlaneseq
      %v2120 = vshrl.u32 %v2119, 7
      %v2121 = vsub.s32 %v2118, %v2120
      %v2122 = vrot.slane %v2108, %v2121
      %v2123 = vcombine.low %v2067, %v2083
      %v2124 = vcombine.high %v2067, %v2083
      %v2126 = vunpack.c.l.s4 1934713408
      %v2127 = vunpack.c.0.s8 %v2126
      %v2128 = vlaneseq
      %v2129 = vshrl.u32 %v2128, 7
      %v2130 = vsub.s32 %v2127, %v2129
      %v2131 = vrot.slane %v2123, %v2130
      %v2133 = vunpack.c.l.s4 1934713408
      %v2134 = vunpack.c.0.s8 %v2133
      %v2135 = vlaneseq
      %v2136 = vshrl.u32 %v2135, 7
      %v2137 = vsub.s32 %v2134, %v2136
      %v2138 = vrot.slane %v2124, %v2137
      %v2139 = vcombine.low %v2074, %v2090
      %v2141 = vunpack.c.l.s4 1934713408
      %v2142 = vunpack.c.0.s8 %v2141
      %v2143 = vlaneseq
      %v2144 = vshrl.u32 %v2143, 7
      %v2145 = vsub.s32 %v2142, %v2144
      %v2146 = vrot.slane %v2139, %v2145
      %v2147 = vcombine.low %v2099, %v2115
      %v2148 = vcombine.high %v2099, %v2115
      %v2150 = vunpack.c.l.s4 1934713408
      %v2151 = vunpack.c.0.s8 %v2150
      %v2152 = vlaneseq
      %v2153 = vshrl.u32 %v2152, 7
      %v2154 = vsub.s32 %v2151, %v2153
      %v2155 = vrot.slane %v2147, %v2154
      %v2157 = vunpack.c.l.s4 1934713408
      %v2158 = vunpack.c.0.s8 %v2157
      %v2159 = vlaneseq
      %v2160 = vshrl.u32 %v2159, 7
      %v2161 = vsub.s32 %v2158, %v2160
      %v2162 = vrot.slane %v2148, %v2161
      %v2163 = vcombine.low %v2106, %v2122
      %v2165 = vunpack.c.l.s4 1934713408
      %v2166 = vunpack.c.0.s8 %v2165
      %v2167 = vlaneseq
      %v2168 = vshrl.u32 %v2167, 7
      %v2169 = vsub.s32 %v2166, %v2168
      %v2170 = vrot.slane %v2163, %v2169
      %v2171 = vcombine.low %v2131, %v2155
      %v2172 = vcombine.high %v2131, %v2155
      %v2173 = vcombine.low %v2138, %v2162
      %v2174 = vcombine.high %v2138, %v2162
      %v2175 = vcombine.low %v2146, %v2170
      %v2176 = vcombine.high %v2146, %v2170
      %v2177 = vld [vmem:[%s786] sm:$0xff]
      %v2178 = vld [vmem:[%s786 + $0x8] sm:$0x3]
      %v2179 = vcombine.low %v2053, %v2055
      %v2180 = vcombine.high %v2053, %v2055
      %v2182 = vunpack.c.l.s4 1983009808
      %v2183 = vunpack.c.0.s8 %v2182
      %v2184 = vlaneseq
      %v2185 = vshrl.u32 %v2184, 7
      %v2186 = vsub.s32 %v2183, %v2185
      %v2187 = vrot.slane %v2179, %v2186
      %v2189 = vunpack.c.l.s4 1983009808
      %v2190 = vunpack.c.0.s8 %v2189
      %v2191 = vlaneseq
      %v2192 = vshrl.u32 %v2191, 7
      %v2193 = vsub.s32 %v2190, %v2192
      %v2194 = vrot.slane %v2180, %v2193
      %v2195 = vcombine.low %v2054, %v2056
      %v2196 = vcombine.high %v2054, %v2056
      %v2198 = vunpack.c.l.s4 1983009808
      %v2199 = vunpack.c.0.s8 %v2198
      %v2200 = vlaneseq
      %v2201 = vshrl.u32 %v2200, 7
      %v2202 = vsub.s32 %v2199, %v2201
      %v2203 = vrot.slane %v2195, %v2202
      %v2205 = vunpack.c.l.s4 1983009808
      %v2206 = vunpack.c.0.s8 %v2205
      %v2207 = vlaneseq
      %v2208 = vshrl.u32 %v2207, 7
      %v2209 = vsub.s32 %v2206, %v2208
      %v2210 = vrot.slane %v2196, %v2209
      %v2211 = vcombine.high %v2057, 0.0
      %v2213 = vunpack.c.l.s4 1983009808
      %v2214 = vunpack.c.0.s8 %v2213
      %v2215 = vlaneseq
      %v2216 = vshrl.u32 %v2215, 7
      %v2217 = vsub.s32 %v2214, %v2216
      %v2218 = vrot.slane %v2057, %v2217
      %v2220 = vunpack.c.l.s4 1983009808
      %v2221 = vunpack.c.0.s8 %v2220
      %v2222 = vlaneseq
      %v2223 = vshrl.u32 %v2222, 7
      %v2224 = vsub.s32 %v2221, %v2223
      %v2225 = vrot.slane %v2211, %v2224
      %v2226 = vcombine.high %v2058, 0.0
      %v2228 = vunpack.c.l.s4 1983009808
      %v2229 = vunpack.c.0.s8 %v2228
      %v2230 = vlaneseq
      %v2231 = vshrl.u32 %v2230, 7
      %v2232 = vsub.s32 %v2229, %v2231
      %v2233 = vrot.slane %v2058, %v2232
      %v2235 = vunpack.c.l.s4 1983009808
      %v2236 = vunpack.c.0.s8 %v2235
      %v2237 = vlaneseq
      %v2238 = vshrl.u32 %v2237, 7
      %v2239 = vsub.s32 %v2236, %v2238
      %v2240 = vrot.slane %v2226, %v2239
      %v2241 = vcombine.low %v2187, %v2203
      %v2242 = vcombine.high %v2187, %v2203
      %v2244 = vunpack.c.l.s4 1934713408
      %v2245 = vunpack.c.0.s8 %v2244
      %v2246 = vlaneseq
      %v2247 = vshrl.u32 %v2246, 7
      %v2248 = vsub.s32 %v2245, %v2247
      %v2249 = vrot.slane %v2241, %v2248
      %v2251 = vunpack.c.l.s4 1934713408
      %v2252 = vunpack.c.0.s8 %v2251
      %v2253 = vlaneseq
      %v2254 = vshrl.u32 %v2253, 7
      %v2255 = vsub.s32 %v2252, %v2254
      %v2256 = vrot.slane %v2242, %v2255
      %v2257 = vcombine.low %v2194, %v2210
      %v2258 = vcombine.high %v2194, %v2210
      %v2260 = vunpack.c.l.s4 1934713408
      %v2261 = vunpack.c.0.s8 %v2260
      %v2262 = vlaneseq
      %v2263 = vshrl.u32 %v2262, 7
      %v2264 = vsub.s32 %v2261, %v2263
      %v2265 = vrot.slane %v2257, %v2264
      %v2267 = vunpack.c.l.s4 1934713408
      %v2268 = vunpack.c.0.s8 %v2267
      %v2269 = vlaneseq
      %v2270 = vshrl.u32 %v2269, 7
      %v2271 = vsub.s32 %v2268, %v2270
      %v2272 = vrot.slane %v2258, %v2271
      %v2273 = vcombine.low %v2218, %v2233
      %v2274 = vcombine.high %v2218, %v2233
      %v2276 = vunpack.c.l.s4 1934713408
      %v2277 = vunpack.c.0.s8 %v2276
      %v2278 = vlaneseq
      %v2279 = vshrl.u32 %v2278, 7
      %v2280 = vsub.s32 %v2277, %v2279
      %v2281 = vrot.slane %v2273, %v2280
      %v2283 = vunpack.c.l.s4 1934713408
      %v2284 = vunpack.c.0.s8 %v2283
      %v2285 = vlaneseq
      %v2286 = vshrl.u32 %v2285, 7
      %v2287 = vsub.s32 %v2284, %v2286
      %v2288 = vrot.slane %v2274, %v2287
      %v2289 = vcombine.low %v2225, %v2240
      %v2290 = vcombine.high %v2225, %v2240
      %v2292 = vunpack.c.l.s4 1934713408
      %v2293 = vunpack.c.0.s8 %v2292
      %v2294 = vlaneseq
      %v2295 = vshrl.u32 %v2294, 7
      %v2296 = vsub.s32 %v2293, %v2295
      %v2297 = vrot.slane %v2289, %v2296
      %v2299 = vunpack.c.l.s4 1934713408
      %v2300 = vunpack.c.0.s8 %v2299
      %v2301 = vlaneseq
      %v2302 = vshrl.u32 %v2301, 7
      %v2303 = vsub.s32 %v2300, %v2302
      %v2304 = vrot.slane %v2290, %v2303
      %v2305 = vcombine.low %v2249, %v2281
      %v2306 = vcombine.high %v2249, %v2281
      %v2307 = vcombine.low %v2256, %v2288
      %v2308 = vcombine.high %v2256, %v2288
      %v2309 = vcombine.low %v2265, %v2297
      %v2310 = vcombine.high %v2265, %v2297
      %v2311 = vcombine.low %v2272, %v2304
      %v2312 = vcombine.high %v2272, %v2304
      %v2313 = vcombine.low %v2171, %v2173
      %v2314 = vcombine.high %v2171, %v2173
      %v2316 = vunpack.c.l.s4 1983009808
      %v2317 = vunpack.c.0.s8 %v2316
      %v2318 = vlaneseq
      %v2319 = vshrl.u32 %v2318, 7
      %v2320 = vsub.s32 %v2317, %v2319
      %v2321 = vrot.slane %v2313, %v2320
      %v2323 = vunpack.c.l.s4 1983009808
      %v2324 = vunpack.c.0.s8 %v2323
      %v2325 = vlaneseq
      %v2326 = vshrl.u32 %v2325, 7
      %v2327 = vsub.s32 %v2324, %v2326
      %v2328 = vrot.slane %v2314, %v2327
      %v2329 = vcombine.low %v2172, %v2174
      %v2330 = vcombine.high %v2172, %v2174
      %v2332 = vunpack.c.l.s4 1983009808
      %v2333 = vunpack.c.0.s8 %v2332
      %v2334 = vlaneseq
      %v2335 = vshrl.u32 %v2334, 7
      %v2336 = vsub.s32 %v2333, %v2335
      %v2337 = vrot.slane %v2329, %v2336
      %v2339 = vunpack.c.l.s4 1983009808
      %v2340 = vunpack.c.0.s8 %v2339
      %v2341 = vlaneseq
      %v2342 = vshrl.u32 %v2341, 7
      %v2343 = vsub.s32 %v2340, %v2342
      %v2344 = vrot.slane %v2330, %v2343
      %v2345 = vcombine.high %v2175, 0.0
      %v2347 = vunpack.c.l.s4 1983009808
      %v2348 = vunpack.c.0.s8 %v2347
      %v2349 = vlaneseq
      %v2350 = vshrl.u32 %v2349, 7
      %v2351 = vsub.s32 %v2348, %v2350
      %v2352 = vrot.slane %v2175, %v2351
      %v2354 = vunpack.c.l.s4 1983009808
      %v2355 = vunpack.c.0.s8 %v2354
      %v2356 = vlaneseq
      %v2357 = vshrl.u32 %v2356, 7
      %v2358 = vsub.s32 %v2355, %v2357
      %v2359 = vrot.slane %v2345, %v2358
      %v2360 = vcombine.high %v2176, 0.0
      %v2362 = vunpack.c.l.s4 1983009808
      %v2363 = vunpack.c.0.s8 %v2362
      %v2364 = vlaneseq
      %v2365 = vshrl.u32 %v2364, 7
      %v2366 = vsub.s32 %v2363, %v2365
      %v2367 = vrot.slane %v2176, %v2366
      %v2369 = vunpack.c.l.s4 1983009808
      %v2370 = vunpack.c.0.s8 %v2369
      %v2371 = vlaneseq
      %v2372 = vshrl.u32 %v2371, 7
      %v2373 = vsub.s32 %v2370, %v2372
      %v2374 = vrot.slane %v2360, %v2373
      %v2375 = vcombine.low %v2321, %v2337
      %v2376 = vcombine.high %v2321, %v2337
      %v2378 = vunpack.c.l.s4 1934713408
      %v2379 = vunpack.c.0.s8 %v2378
      %v2380 = vlaneseq
      %v2381 = vshrl.u32 %v2380, 7
      %v2382 = vsub.s32 %v2379, %v2381
      %v2383 = vrot.slane %v2375, %v2382
      %v2385 = vunpack.c.l.s4 1934713408
      %v2386 = vunpack.c.0.s8 %v2385
      %v2387 = vlaneseq
      %v2388 = vshrl.u32 %v2387, 7
      %v2389 = vsub.s32 %v2386, %v2388
      %v2390 = vrot.slane %v2376, %v2389
      %v2391 = vcombine.low %v2328, %v2344
      %v2392 = vcombine.high %v2328, %v2344
      %v2394 = vunpack.c.l.s4 1934713408
      %v2395 = vunpack.c.0.s8 %v2394
      %v2396 = vlaneseq
      %v2397 = vshrl.u32 %v2396, 7
      %v2398 = vsub.s32 %v2395, %v2397
      %v2399 = vrot.slane %v2391, %v2398
      %v2401 = vunpack.c.l.s4 1934713408
      %v2402 = vunpack.c.0.s8 %v2401
      %v2403 = vlaneseq
      %v2404 = vshrl.u32 %v2403, 7
      %v2405 = vsub.s32 %v2402, %v2404
      %v2406 = vrot.slane %v2392, %v2405
      %v2407 = vcombine.low %v2352, %v2367
      %v2408 = vcombine.high %v2352, %v2367
      %v2410 = vunpack.c.l.s4 1934713408
      %v2411 = vunpack.c.0.s8 %v2410
      %v2412 = vlaneseq
      %v2413 = vshrl.u32 %v2412, 7
      %v2414 = vsub.s32 %v2411, %v2413
      %v2415 = vrot.slane %v2407, %v2414
      %v2417 = vunpack.c.l.s4 1934713408
      %v2418 = vunpack.c.0.s8 %v2417
      %v2419 = vlaneseq
      %v2420 = vshrl.u32 %v2419, 7
      %v2421 = vsub.s32 %v2418, %v2420
      %v2422 = vrot.slane %v2408, %v2421
      %v2423 = vcombine.low %v2359, %v2374
      %v2424 = vcombine.high %v2359, %v2374
      %v2426 = vunpack.c.l.s4 1934713408
      %v2427 = vunpack.c.0.s8 %v2426
      %v2428 = vlaneseq
      %v2429 = vshrl.u32 %v2428, 7
      %v2430 = vsub.s32 %v2427, %v2429
      %v2431 = vrot.slane %v2423, %v2430
      %v2433 = vunpack.c.l.s4 1934713408
      %v2434 = vunpack.c.0.s8 %v2433
      %v2435 = vlaneseq
      %v2436 = vshrl.u32 %v2435, 7
      %v2437 = vsub.s32 %v2434, %v2436
      %v2438 = vrot.slane %v2424, %v2437
      %v2439 = vcombine.low %v2383, %v2415
      %v2440 = vcombine.high %v2383, %v2415
      %v2441 = vcombine.low %v2390, %v2422
      %v2442 = vcombine.high %v2390, %v2422
      %v2443 = vcombine.low %v2399, %v2431
      %v2444 = vcombine.high %v2399, %v2431
      %v2445 = vcombine.low %v2406, %v2438
      %v2446 = vcombine.high %v2406, %v2438
      %2448 = vrot.lane.b32.xlu0 %v2306, 8
      %v2449 = vpop.permute.xlu0 %2448
      %2452 = vrot.lane.b32.xlu0 %v2307, 16
      %v2453 = vpop.permute.xlu0 %2452
      %2456 = vrot.lane.b32.xlu0 %v2308, 24
      %v2457 = vpop.permute.xlu0 %2456
      %2460 = vrot.lane.b32.xlu0 %v2309, 32
      %v2461 = vpop.permute.xlu0 %2460
      %2464 = vrot.lane.b32.xlu0 %v2310, 40
      %v2465 = vpop.permute.xlu0 %2464
      %2468 = vrot.lane.b32.xlu0 %v2311, 48
      %v2469 = vpop.permute.xlu0 %2468
      %2472 = vrot.lane.b32.xlu0 %v2312, 56
      %v2473 = vpop.permute.xlu0 %2472
      %2476 = vrot.lane.b32.xlu0 %v2439, 64
      %v2477 = vpop.permute.xlu0 %2476
      %2480 = vrot.lane.b32.xlu0 %v2440, 72
      %v2481 = vpop.permute.xlu0 %2480
      %2484 = vrot.lane.b32.xlu0 %v2441, 80
      %v2485 = vpop.permute.xlu0 %2484
      %2488 = vrot.lane.b32.xlu0 %v2442, 88
      %v2489 = vpop.permute.xlu0 %2488
      %2492 = vrot.lane.b32.xlu0 %v2443, 96
      %v2493 = vpop.permute.xlu0 %2492
      %2496 = vrot.lane.b32.xlu0 %v2444, 104
      %v2497 = vpop.permute.xlu0 %2496
      %2500 = vrot.lane.b32.xlu0 %v2445, 112
      %v2501 = vpop.permute.xlu0 %2500
      %2504 = vrot.lane.b32.xlu0 %v2446, 120
      %v2505 = vpop.permute.xlu0 %2504
      %v2507 = vsel %vm1479, %v2305, %v2449
      %v2508 = vsel %vm1481, %v2507, %v2453
      %v2509 = vsel %vm1483, %v2508, %v2457
      %v2510 = vsel %vm1485, %v2509, %v2461
      %v2511 = vsel %vm1487, %v2510, %v2465
      %vm2512 = vcmask 392192
      %v2513 = vsel %vm2512, %v2511, %v2469
      %vm2514 = vcmask 457728
      %v2515 = vsel %vm2514, %v2513, %v2473
      %vm2516 = vcmask 523264
      %v2517 = vsel %vm2516, %v2515, %v2477
      %vm2518 = vcmask 588800
      %v2519 = vsel %vm2518, %v2517, %v2481
      %vm2520 = vcmask 654336
      %v2521 = vsel %vm2520, %v2519, %v2485
      %vm2522 = vcmask 719872
      %v2523 = vsel %vm2522, %v2521, %v2489
      %vm2524 = vcmask 785408
      %v2525 = vsel %vm2524, %v2523, %v2493
      %vm2526 = vcmask 850944
      %v2527 = vsel %vm2526, %v2525, %v2497
      %vm2528 = vcmask 916480
      %v2529 = vsel %vm2528, %v2527, %v2501
      %vm2530 = vcmask 982016
      %v2531 = vsel %vm2530, %v2529, %v2505
      %vm2532 = vcmask 48128
      %v2534 = vsel %vm2532, %v2177, 0
      %v2537 = vsel %vm2532, %v2178, 0
      %vm2539 = vcmask 1045504
      %v2541 = vsel %vm2539, %v2531, 0
      %2543 = vmatprep.subr.mxu0 0.0
      %2544 = vmatpush1.msra.mxu0 %v2541
      %2545 = vmatprep.subr.mxu0 0.0
      %2546 = vmatpush1.msra.mxu0 0.0
      %2547 = vmatprep.subr.mxu0 0.0
      %2548 = vmatpush1.msra.mxu0 0.0
      %2549 = vmatprep.subr.mxu0 0.0
      %2550 = vmatpush1.msra.mxu0 0.0
      %2551 = vmatprep.subr.mxu0 0.0
      %2552 = vmatpush1.msra.mxu0 0.0
      %2553 = vmatprep.subr.mxu0 0.0
      %2554 = vmatpush1.msra.mxu0 0.0
      %2555 = vmatprep.subr.mxu0 0.0
      %2556 = vmatpush1.msra.mxu0 0.0
      %2557 = vmatprep.subr.mxu0 0.0
      %2558 = vmatpush1.msra.mxu0 0.0
      %2559 = vmatprep.subr.mxu0 0.0
      %2560 = vmatpush1.msra.mxu0 0.0
      %2561 = vmatprep.subr.mxu0 0.0
      %2562 = vmatpush1.msra.mxu0 0.0
      %2563 = vmatprep.subr.mxu0 0.0
      %2564 = vmatpush1.msra.mxu0 0.0
      %2565 = vmatprep.subr.mxu0 0.0
      %2566 = vmatpush1.msra.mxu0 0.0
      %2567 = vmatprep.subr.mxu0 0.0
      %2568 = vmatpush1.msra.mxu0 0.0
      %2569 = vmatprep.subr.mxu0 0.0
      %2570 = vmatpush1.msra.mxu0 0.0
      %2571 = vmatprep.subr.mxu0 0.0
      %2572 = vmatpush1.msra.mxu0 0.0
      %2573 = vmatprep.subr.mxu0 0.0
      %2574 = vmatpush1.msra.mxu0 0.0
      %2575 = vmatprep.subr.mxu0 0.0
      %2576 = vmatpush1.msra.mxu0 0.0
      %2577 = vmatprep.subr.mxu0 0.0
      %2578 = vmatpush1.msra.mxu0 0.0
      %2579 = vmatprep.subr.mxu0 0.0
      %2580 = vmatpush1.msra.mxu0 0.0
      %2581 = vmatprep.subr.mxu0 0.0
      %2582 = vmatpush1.msra.mxu0 0.0
      %2583 = vmatprep.subr.mxu0 0.0
      %2584 = vmatpush1.msra.mxu0 0.0
      %2585 = vmatprep.subr.mxu0 0.0
      %2586 = vmatpush1.msra.mxu0 0.0
      %2587 = vmatprep.subr.mxu0 0.0
      %2588 = vmatpush1.msra.mxu0 0.0
      %2589 = vmatprep.subr.mxu0 0.0
      %2590 = vmatpush1.msra.mxu0 0.0
      %2591 = vmatprep.subr.mxu0 0.0
      %2592 = vmatpush1.msra.mxu0 0.0
      %2593 = vmatprep.subr.mxu0 0.0
      %2594 = vmatpush1.msra.mxu0 0.0
      %2595 = vmatprep.subr.mxu0 0.0
      %2596 = vmatpush1.msra.mxu0 0.0
      %2597 = vmatprep.subr.mxu0 0.0
      %2598 = vmatpush1.msra.mxu0 0.0
      %2599 = vmatprep.subr.mxu0 0.0
      %2600 = vmatpush1.msra.mxu0 0.0
      %2601 = vmatprep.subr.mxu0 0.0
      %2602 = vmatpush1.msra.mxu0 0.0
      %2603 = vmatprep.subr.mxu0 0.0
      %2604 = vmatpush1.msra.mxu0 0.0
      %2605 = vmatprep.subr.mxu0 0.0
      %2606 = vmatpush1.msra.mxu0 0.0
      %2607 = vmatprep.mubr.f32.mxu0 0.0
      %2608 = vmatmul.mubr.f32.gmra.mrb[0].mxu0 %v2534
      %v2609 = vpop.f32.mrb[0].mxu0
      %v2610 = vadd.f32 0.0, %v2609
      %v2611 = vpop.f32.mrb[0].mxu0
      %2612 = vmatprep.mubr.f32.mxu0 0.0
      %2613 = vmatmul.mubr.f32.gmra.mrb[0].mxu0 %v2537
      %v2614 = vpop.f32.mrb[0].mxu0
      %v2615 = vadd.f32 0.0, %v2614
      %v2616 = vpop.f32.mrb[0].mxu0
      %2617 = vdwg.mxu0
      %2620 = vrot.lane.b32.xlu0 %v2610, 120
      %v2621 = vpop.permute.xlu0 %2620
      %2622 = vrot.lane.b32.xlu0 %v2615, 120
      %v2623 = vpop.permute.xlu0 %2622
      %2626 = vrot.lane.b32.xlu0 %v2610, 112
      %v2627 = vpop.permute.xlu0 %2626
      %2628 = vrot.lane.b32.xlu0 %v2615, 112
      %v2629 = vpop.permute.xlu0 %2628
      %2632 = vrot.lane.b32.xlu0 %v2610, 104
      %v2633 = vpop.permute.xlu0 %2632
      %2634 = vrot.lane.b32.xlu0 %v2615, 104
      %v2635 = vpop.permute.xlu0 %2634
      %2638 = vrot.lane.b32.xlu0 %v2610, 96
      %v2639 = vpop.permute.xlu0 %2638
      %2640 = vrot.lane.b32.xlu0 %v2615, 96
      %v2641 = vpop.permute.xlu0 %2640
      %2644 = vrot.lane.b32.xlu0 %v2610, 88
      %v2645 = vpop.permute.xlu0 %2644
      %2646 = vrot.lane.b32.xlu0 %v2615, 88
      %v2647 = vpop.permute.xlu0 %2646
      %2650 = vrot.lane.b32.xlu0 %v2610, 80
      %v2651 = vpop.permute.xlu0 %2650
      %2652 = vrot.lane.b32.xlu0 %v2615, 80
      %v2653 = vpop.permute.xlu0 %2652
      %2656 = vrot.lane.b32.xlu0 %v2610, 72
      %v2657 = vpop.permute.xlu0 %2656
      %2658 = vrot.lane.b32.xlu0 %v2615, 72
      %v2659 = vpop.permute.xlu0 %2658
      %2662 = vrot.lane.b32.xlu0 %v2610, 64
      %v2663 = vpop.permute.xlu0 %2662
      %2664 = vrot.lane.b32.xlu0 %v2615, 64
      %v2665 = vpop.permute.xlu0 %2664
      %2668 = vrot.lane.b32.xlu0 %v2610, 56
      %v2669 = vpop.permute.xlu0 %2668
      %2670 = vrot.lane.b32.xlu0 %v2615, 56
      %v2671 = vpop.permute.xlu0 %2670
      %2674 = vrot.lane.b32.xlu0 %v2610, 48
      %v2675 = vpop.permute.xlu0 %2674
      %2676 = vrot.lane.b32.xlu0 %v2615, 48
      %v2677 = vpop.permute.xlu0 %2676
      %2680 = vrot.lane.b32.xlu0 %v2610, 40
      %v2681 = vpop.permute.xlu0 %2680
      %2682 = vrot.lane.b32.xlu0 %v2615, 40
      %v2683 = vpop.permute.xlu0 %2682
      %2686 = vrot.lane.b32.xlu0 %v2610, 32
      %v2687 = vpop.permute.xlu0 %2686
      %2688 = vrot.lane.b32.xlu0 %v2615, 32
      %v2689 = vpop.permute.xlu0 %2688
      %2692 = vrot.lane.b32.xlu0 %v2610, 24
      %v2693 = vpop.permute.xlu0 %2692
      %2694 = vrot.lane.b32.xlu0 %v2615, 24
      %v2695 = vpop.permute.xlu0 %2694
      %2698 = vrot.lane.b32.xlu0 %v2610, 16
      %v2699 = vpop.permute.xlu0 %2698
      %2700 = vrot.lane.b32.xlu0 %v2615, 16
      %v2701 = vpop.permute.xlu0 %2700
      %2704 = vrot.lane.b32.xlu0 %v2610, 8
      %v2705 = vpop.permute.xlu0 %2704
      %2706 = vrot.lane.b32.xlu0 %v2615, 8
      %v2707 = vpop.permute.xlu0 %2706
      %v2710 = vcombine.low %v2610, %v2627
      %v2711 = vcombine.high %v2610, %v2627
      %v2713 = vunpack.c.l.s4 1983009808
      %v2714 = vunpack.c.0.s8 %v2713
      %v2715 = vlaneseq
      %v2716 = vshrl.u32 %v2715, 7
      %v2717 = vsub.s32 %v2714, %v2716
      %v2718 = vrot.slane %v2710, %v2717
      %v2720 = vunpack.c.l.s4 1983009808
      %v2721 = vunpack.c.0.s8 %v2720
      %v2722 = vlaneseq
      %v2723 = vshrl.u32 %v2722, 7
      %v2724 = vsub.s32 %v2721, %v2723
      %v2725 = vrot.slane %v2711, %v2724
      %v2726 = vcombine.low %v2621, %v2633
      %v2727 = vcombine.high %v2621, %v2633
      %v2729 = vunpack.c.l.s4 1983009808
      %v2730 = vunpack.c.0.s8 %v2729
      %v2731 = vlaneseq
      %v2732 = vshrl.u32 %v2731, 7
      %v2733 = vsub.s32 %v2730, %v2732
      %v2734 = vrot.slane %v2726, %v2733
      %v2736 = vunpack.c.l.s4 1983009808
      %v2737 = vunpack.c.0.s8 %v2736
      %v2738 = vlaneseq
      %v2739 = vshrl.u32 %v2738, 7
      %v2740 = vsub.s32 %v2737, %v2739
      %v2741 = vrot.slane %v2727, %v2740
      %v2742 = vcombine.low %v2639, %v2651
      %v2743 = vcombine.high %v2639, %v2651
      %v2745 = vunpack.c.l.s4 1983009808
      %v2746 = vunpack.c.0.s8 %v2745
      %v2747 = vlaneseq
      %v2748 = vshrl.u32 %v2747, 7
      %v2749 = vsub.s32 %v2746, %v2748
      %v2750 = vrot.slane %v2742, %v2749
      %v2752 = vunpack.c.l.s4 1983009808
      %v2753 = vunpack.c.0.s8 %v2752
      %v2754 = vlaneseq
      %v2755 = vshrl.u32 %v2754, 7
      %v2756 = vsub.s32 %v2753, %v2755
      %v2757 = vrot.slane %v2743, %v2756
      %v2758 = vcombine.low %v2645, %v2657
      %v2759 = vcombine.high %v2645, %v2657
      %v2761 = vunpack.c.l.s4 1983009808
      %v2762 = vunpack.c.0.s8 %v2761
      %v2763 = vlaneseq
      %v2764 = vshrl.u32 %v2763, 7
      %v2765 = vsub.s32 %v2762, %v2764
      %v2766 = vrot.slane %v2758, %v2765
      %v2768 = vunpack.c.l.s4 1983009808
      %v2769 = vunpack.c.0.s8 %v2768
      %v2770 = vlaneseq
      %v2771 = vshrl.u32 %v2770, 7
      %v2772 = vsub.s32 %v2769, %v2771
      %v2773 = vrot.slane %v2759, %v2772
      %v2774 = vcombine.low %v2718, %v2734
      %v2775 = vcombine.high %v2718, %v2734
      %v2777 = vunpack.c.l.s4 1934713408
      %v2778 = vunpack.c.0.s8 %v2777
      %v2779 = vlaneseq
      %v2780 = vshrl.u32 %v2779, 7
      %v2781 = vsub.s32 %v2778, %v2780
      %v2782 = vrot.slane %v2774, %v2781
      %v2784 = vunpack.c.l.s4 1934713408
      %v2785 = vunpack.c.0.s8 %v2784
      %v2786 = vlaneseq
      %v2787 = vshrl.u32 %v2786, 7
      %v2788 = vsub.s32 %v2785, %v2787
      %v2789 = vrot.slane %v2775, %v2788
      %v2790 = vcombine.low %v2725, %v2741
      %v2791 = vcombine.high %v2725, %v2741
      %v2793 = vunpack.c.l.s4 1934713408
      %v2794 = vunpack.c.0.s8 %v2793
      %v2795 = vlaneseq
      %v2796 = vshrl.u32 %v2795, 7
      %v2797 = vsub.s32 %v2794, %v2796
      %v2798 = vrot.slane %v2790, %v2797
      %v2800 = vunpack.c.l.s4 1934713408
      %v2801 = vunpack.c.0.s8 %v2800
      %v2802 = vlaneseq
      %v2803 = vshrl.u32 %v2802, 7
      %v2804 = vsub.s32 %v2801, %v2803
      %v2805 = vrot.slane %v2791, %v2804
      %v2806 = vcombine.low %v2750, %v2766
      %v2807 = vcombine.high %v2750, %v2766
      %v2809 = vunpack.c.l.s4 1934713408
      %v2810 = vunpack.c.0.s8 %v2809
      %v2811 = vlaneseq
      %v2812 = vshrl.u32 %v2811, 7
      %v2813 = vsub.s32 %v2810, %v2812
      %v2814 = vrot.slane %v2806, %v2813
      %v2816 = vunpack.c.l.s4 1934713408
      %v2817 = vunpack.c.0.s8 %v2816
      %v2818 = vlaneseq
      %v2819 = vshrl.u32 %v2818, 7
      %v2820 = vsub.s32 %v2817, %v2819
      %v2821 = vrot.slane %v2807, %v2820
      %v2822 = vcombine.low %v2757, %v2773
      %v2823 = vcombine.high %v2757, %v2773
      %v2825 = vunpack.c.l.s4 1934713408
      %v2826 = vunpack.c.0.s8 %v2825
      %v2827 = vlaneseq
      %v2828 = vshrl.u32 %v2827, 7
      %v2829 = vsub.s32 %v2826, %v2828
      %v2830 = vrot.slane %v2822, %v2829
      %v2832 = vunpack.c.l.s4 1934713408
      %v2833 = vunpack.c.0.s8 %v2832
      %v2834 = vlaneseq
      %v2835 = vshrl.u32 %v2834, 7
      %v2836 = vsub.s32 %v2833, %v2835
      %v2837 = vrot.slane %v2823, %v2836
      %v2838 = vcombine.low %v2782, %v2814
      %v2839 = vcombine.high %v2782, %v2814
      %v2840 = vcombine.low %v2789, %v2821
      %v2841 = vcombine.high %v2789, %v2821
      %v2842 = vcombine.low %v2798, %v2830
      %v2843 = vcombine.high %v2798, %v2830
      %v2844 = vcombine.low %v2805, %v2837
      %v2845 = vcombine.high %v2805, %v2837
      %v2846 = vcombine.low %v2663, %v2675
      %v2847 = vcombine.high %v2663, %v2675
      %v2849 = vunpack.c.l.s4 1983009808
      %v2850 = vunpack.c.0.s8 %v2849
      %v2851 = vlaneseq
      %v2852 = vshrl.u32 %v2851, 7
      %v2853 = vsub.s32 %v2850, %v2852
      %v2854 = vrot.slane %v2846, %v2853
      %v2856 = vunpack.c.l.s4 1983009808
      %v2857 = vunpack.c.0.s8 %v2856
      %v2858 = vlaneseq
      %v2859 = vshrl.u32 %v2858, 7
      %v2860 = vsub.s32 %v2857, %v2859
      %v2861 = vrot.slane %v2847, %v2860
      %v2862 = vcombine.low %v2669, %v2681
      %v2863 = vcombine.high %v2669, %v2681
      %v2865 = vunpack.c.l.s4 1983009808
      %v2866 = vunpack.c.0.s8 %v2865
      %v2867 = vlaneseq
      %v2868 = vshrl.u32 %v2867, 7
      %v2869 = vsub.s32 %v2866, %v2868
      %v2870 = vrot.slane %v2862, %v2869
      %v2872 = vunpack.c.l.s4 1983009808
      %v2873 = vunpack.c.0.s8 %v2872
      %v2874 = vlaneseq
      %v2875 = vshrl.u32 %v2874, 7
      %v2876 = vsub.s32 %v2873, %v2875
      %v2877 = vrot.slane %v2863, %v2876
      %v2878 = vcombine.low %v2687, %v2699
      %v2879 = vcombine.high %v2687, %v2699
      %v2881 = vunpack.c.l.s4 1983009808
      %v2882 = vunpack.c.0.s8 %v2881
      %v2883 = vlaneseq
      %v2884 = vshrl.u32 %v2883, 7
      %v2885 = vsub.s32 %v2882, %v2884
      %v2886 = vrot.slane %v2878, %v2885
      %v2888 = vunpack.c.l.s4 1983009808
      %v2889 = vunpack.c.0.s8 %v2888
      %v2890 = vlaneseq
      %v2891 = vshrl.u32 %v2890, 7
      %v2892 = vsub.s32 %v2889, %v2891
      %v2893 = vrot.slane %v2879, %v2892
      %v2894 = vcombine.low %v2693, %v2705
      %v2895 = vcombine.high %v2693, %v2705
      %v2897 = vunpack.c.l.s4 1983009808
      %v2898 = vunpack.c.0.s8 %v2897
      %v2899 = vlaneseq
      %v2900 = vshrl.u32 %v2899, 7
      %v2901 = vsub.s32 %v2898, %v2900
      %v2902 = vrot.slane %v2894, %v2901
      %v2904 = vunpack.c.l.s4 1983009808
      %v2905 = vunpack.c.0.s8 %v2904
      %v2906 = vlaneseq
      %v2907 = vshrl.u32 %v2906, 7
      %v2908 = vsub.s32 %v2905, %v2907
      %v2909 = vrot.slane %v2895, %v2908
      %v2910 = vcombine.low %v2854, %v2870
      %v2911 = vcombine.high %v2854, %v2870
      %v2913 = vunpack.c.l.s4 1934713408
      %v2914 = vunpack.c.0.s8 %v2913
      %v2915 = vlaneseq
      %v2916 = vshrl.u32 %v2915, 7
      %v2917 = vsub.s32 %v2914, %v2916
      %v2918 = vrot.slane %v2910, %v2917
      %v2920 = vunpack.c.l.s4 1934713408
      %v2921 = vunpack.c.0.s8 %v2920
      %v2922 = vlaneseq
      %v2923 = vshrl.u32 %v2922, 7
      %v2924 = vsub.s32 %v2921, %v2923
      %v2925 = vrot.slane %v2911, %v2924
      %v2926 = vcombine.low %v2861, %v2877
      %v2927 = vcombine.high %v2861, %v2877
      %v2929 = vunpack.c.l.s4 1934713408
      %v2930 = vunpack.c.0.s8 %v2929
      %v2931 = vlaneseq
      %v2932 = vshrl.u32 %v2931, 7
      %v2933 = vsub.s32 %v2930, %v2932
      %v2934 = vrot.slane %v2926, %v2933
      %v2936 = vunpack.c.l.s4 1934713408
      %v2937 = vunpack.c.0.s8 %v2936
      %v2938 = vlaneseq
      %v2939 = vshrl.u32 %v2938, 7
      %v2940 = vsub.s32 %v2937, %v2939
      %v2941 = vrot.slane %v2927, %v2940
      %v2942 = vcombine.low %v2886, %v2902
      %v2943 = vcombine.high %v2886, %v2902
      %v2945 = vunpack.c.l.s4 1934713408
      %v2946 = vunpack.c.0.s8 %v2945
      %v2947 = vlaneseq
      %v2948 = vshrl.u32 %v2947, 7
      %v2949 = vsub.s32 %v2946, %v2948
      %v2950 = vrot.slane %v2942, %v2949
      %v2952 = vunpack.c.l.s4 1934713408
      %v2953 = vunpack.c.0.s8 %v2952
      %v2954 = vlaneseq
      %v2955 = vshrl.u32 %v2954, 7
      %v2956 = vsub.s32 %v2953, %v2955
      %v2957 = vrot.slane %v2943, %v2956
      %v2958 = vcombine.low %v2893, %v2909
      %v2959 = vcombine.high %v2893, %v2909
      %v2961 = vunpack.c.l.s4 1934713408
      %v2962 = vunpack.c.0.s8 %v2961
      %v2963 = vlaneseq
      %v2964 = vshrl.u32 %v2963, 7
      %v2965 = vsub.s32 %v2962, %v2964
      %v2966 = vrot.slane %v2958, %v2965
      %v2968 = vunpack.c.l.s4 1934713408
      %v2969 = vunpack.c.0.s8 %v2968
      %v2970 = vlaneseq
      %v2971 = vshrl.u32 %v2970, 7
      %v2972 = vsub.s32 %v2969, %v2971
      %v2973 = vrot.slane %v2959, %v2972
      %v2974 = vcombine.low %v2918, %v2950
      %v2975 = vcombine.high %v2918, %v2950
      %v2976 = vcombine.low %v2925, %v2957
      %v2977 = vcombine.high %v2925, %v2957
      %v2978 = vcombine.low %v2934, %v2966
      %v2979 = vcombine.high %v2934, %v2966
      %v2980 = vcombine.low %v2941, %v2973
      %v2981 = vcombine.high %v2941, %v2973
      %v2982 = vcombine.low %v2615, %v2629
      %v2984 = vunpack.c.l.s4 1983009808
      %v2985 = vunpack.c.0.s8 %v2984
      %v2986 = vlaneseq
      %v2987 = vshrl.u32 %v2986, 7
      %v2988 = vsub.s32 %v2985, %v2987
      %v2989 = vrot.slane %v2982, %v2988
      %v2990 = vcombine.low %v2623, %v2635
      %v2992 = vunpack.c.l.s4 1983009808
      %v2993 = vunpack.c.0.s8 %v2992
      %v2994 = vlaneseq
      %v2995 = vshrl.u32 %v2994, 7
      %v2996 = vsub.s32 %v2993, %v2995
      %v2997 = vrot.slane %v2990, %v2996
      %v2998 = vcombine.low %v2641, %v2653
      %v3000 = vunpack.c.l.s4 1983009808
      %v3001 = vunpack.c.0.s8 %v3000
      %v3002 = vlaneseq
      %v3003 = vshrl.u32 %v3002, 7
      %v3004 = vsub.s32 %v3001, %v3003
      %v3005 = vrot.slane %v2998, %v3004
      %v3006 = vcombine.low %v2647, %v2659
      %v3008 = vunpack.c.l.s4 1983009808
      %v3009 = vunpack.c.0.s8 %v3008
      %v3010 = vlaneseq
      %v3011 = vshrl.u32 %v3010, 7
      %v3012 = vsub.s32 %v3009, %v3011
      %v3013 = vrot.slane %v3006, %v3012
      %v3014 = vcombine.low %v2989, %v2997
      %v3016 = vunpack.c.l.s4 1934713408
      %v3017 = vunpack.c.0.s8 %v3016
      %v3018 = vlaneseq
      %v3019 = vshrl.u32 %v3018, 7
      %v3020 = vsub.s32 %v3017, %v3019
      %v3021 = vrot.slane %v3014, %v3020
      %v3022 = vcombine.low %v3005, %v3013
      %v3024 = vunpack.c.l.s4 1934713408
      %v3025 = vunpack.c.0.s8 %v3024
      %v3026 = vlaneseq
      %v3027 = vshrl.u32 %v3026, 7
      %v3028 = vsub.s32 %v3025, %v3027
      %v3029 = vrot.slane %v3022, %v3028
      %v3030 = vcombine.low %v3021, %v3029
      %v3031 = vcombine.high %v3021, %v3029
      %v3032 = vcombine.low %v2665, %v2677
      %v3034 = vunpack.c.l.s4 1983009808
      %v3035 = vunpack.c.0.s8 %v3034
      %v3036 = vlaneseq
      %v3037 = vshrl.u32 %v3036, 7
      %v3038 = vsub.s32 %v3035, %v3037
      %v3039 = vrot.slane %v3032, %v3038
      %v3040 = vcombine.low %v2671, %v2683
      %v3042 = vunpack.c.l.s4 1983009808
      %v3043 = vunpack.c.0.s8 %v3042
      %v3044 = vlaneseq
      %v3045 = vshrl.u32 %v3044, 7
      %v3046 = vsub.s32 %v3043, %v3045
      %v3047 = vrot.slane %v3040, %v3046
      %v3048 = vcombine.low %v2689, %v2701
      %v3050 = vunpack.c.l.s4 1983009808
      %v3051 = vunpack.c.0.s8 %v3050
      %v3052 = vlaneseq
      %v3053 = vshrl.u32 %v3052, 7
      %v3054 = vsub.s32 %v3051, %v3053
      %v3055 = vrot.slane %v3048, %v3054
      %v3056 = vcombine.low %v2695, %v2707
      %v3058 = vunpack.c.l.s4 1983009808
      %v3059 = vunpack.c.0.s8 %v3058
      %v3060 = vlaneseq
      %v3061 = vshrl.u32 %v3060, 7
      %v3062 = vsub.s32 %v3059, %v3061
      %v3063 = vrot.slane %v3056, %v3062
      %v3064 = vcombine.low %v3039, %v3047
      %v3066 = vunpack.c.l.s4 1934713408
      %v3067 = vunpack.c.0.s8 %v3066
      %v3068 = vlaneseq
      %v3069 = vshrl.u32 %v3068, 7
      %v3070 = vsub.s32 %v3067, %v3069
      %v3071 = vrot.slane %v3064, %v3070
      %v3072 = vcombine.low %v3055, %v3063
      %v3074 = vunpack.c.l.s4 1934713408
      %v3075 = vunpack.c.0.s8 %v3074
      %v3076 = vlaneseq
      %v3077 = vshrl.u32 %v3076, 7
      %v3078 = vsub.s32 %v3075, %v3077
      %v3079 = vrot.slane %v3072, %v3078
      %v3080 = vcombine.low %v3071, %v3079
      %v3081 = vcombine.high %v3071, %v3079
      %v3082 = vadd.f32 %v953, %v2839
      %v3083 = vadd.f32 %v958, %v2975
      %v3084 = vadd.f32 %v963, %v2840
      %v3085 = vadd.f32 %v968, %v2976
      %v3086 = vadd.f32 %v973, %v2841
      %v3087 = vadd.f32 %v978, %v2977
      %v3088 = vadd.f32 %v983, %v2842
      %v3089 = vadd.f32 %v988, %v2978
      %v3090 = vadd.f32 %v993, %v2843
      %v3091 = vadd.f32 %v998, %v2979
      %v3092 = vadd.f32 %v1003, %v2844
      %v3093 = vadd.f32 %v1008, %v2980
      %v3094 = vadd.f32 %v1013, %v2845
      %v3095 = vadd.f32 %v1018, %v2981
      %v3096 = vadd.f32 %v1023, %v3030
      %v3097 = vadd.f32 %v1028, %v3080
      %v3098 = vadd.f32 %v1106, %v2838
      %v3099 = vadd.f32 %v1111, %v2974
      %v3100 = vadd.f32 %v1189, %v3031
      %v3101 = vadd.f32 %v1194, %v3081
      %3102 = vst.msk [vmem:[%s796] sm:$0xff] %vm1479, %v3082
      %3103 = vst.msk [vmem:[%s796 + $0x8] sm:$0xff] %vm1479, %v3083
      %3104 = vst.msk [vmem:[%s796 + $0x10] sm:$0xff] %vm1479, %v3084
      %3105 = vst.msk [vmem:[%s796 + $0x18] sm:$0xff] %vm1479, %v3085
      %3106 = vst.msk [vmem:[%s796 + $0x20] sm:$0xff] %vm1479, %v3086
      %3107 = vst.msk [vmem:[%s796 + $0x28] sm:$0xff] %vm1479, %v3087
      %3108 = vst.msk [vmem:[%s796 + $0x30] sm:$0xff] %vm1479, %v3088
      %3109 = vst.msk [vmem:[%s796 + $0x38] sm:$0xff] %vm1479, %v3089
      %3110 = vst.msk [vmem:[%s796 + $0x40] sm:$0xff] %vm1479, %v3090
      %3111 = vst.msk [vmem:[%s796 + $0x48] sm:$0xff] %vm1479, %v3091
      %3112 = vst.msk [vmem:[%s796 + $0x50] sm:$0xff] %vm1479, %v3092
      %3113 = vst.msk [vmem:[%s796 + $0x58] sm:$0xff] %vm1479, %v3093
      %3114 = vst.msk [vmem:[%s796 + $0x60] sm:$0xff] %vm1479, %v3094
      %3115 = vst.msk [vmem:[%s796 + $0x68] sm:$0xff] %vm1479, %v3095
      %3116 = vst.msk [vmem:[%s796 + $0x70] sm:$0xff] %vm1479, %v3096
      %3117 = vst.msk [vmem:[%s796 + $0x78] sm:$0xff] %vm1479, %v3097
      %s3118 = scalar_lea.vmem [#allocation2], 32
      %3119 = vst.msk [vmem:[%s3118 + $0x8] sm:$0xff] %vm1479, %v3082
      %3120 = vst.msk [vmem:[%s3118 + $0x10] sm:$0xff] %vm1479, %v3083
      %3121 = vst.msk [vmem:[%s3118 + $0x28] sm:$0xff] %vm1479, %v3084
      %3122 = vst.msk [vmem:[%s3118 + $0x30] sm:$0xff] %vm1479, %v3085
      %3123 = vst.msk [vmem:[%s3118 + $0x48] sm:$0xff] %vm1479, %v3086
      %3124 = vst.msk [vmem:[%s3118 + $0x50] sm:$0xff] %vm1479, %v3087
      %3125 = vst.msk [vmem:[%s3118 + $0x68] sm:$0xff] %vm1479, %v3088
      %3126 = vst.msk [vmem:[%s3118 + $0x70] sm:$0xff] %vm1479, %v3089
      %3127 = vst.msk [vmem:[%s3118 + $0x88] sm:$0xff] %vm1479, %v3090
      %3128 = vst.msk [vmem:[%s3118 + $0x90] sm:$0xff] %vm1479, %v3091
      %3129 = vst.msk [vmem:[%s3118 + $0xa8] sm:$0xff] %vm1479, %v3092
      %3130 = vst.msk [vmem:[%s3118 + $0xb0] sm:$0xff] %vm1479, %v3093
      %3131 = vst.msk [vmem:[%s3118 + $0xc8] sm:$0xff] %vm1479, %v3094
      %3132 = vst.msk [vmem:[%s3118 + $0xd0] sm:$0xff] %vm1479, %v3095
      %3133 = vst.msk [vmem:[%s3118 + $0xe8] sm:$0xff] %vm1479, %v3096
      %3134 = vst.msk [vmem:[%s3118 + $0xf0] sm:$0xff] %vm1479, %v3097
      %3135 = vst.msk [vmem:[#allocation2 + $0x8] sm:$0xff] %vm1479, %v3098
      %3136 = vst.msk [vmem:[#allocation2 + $0x10] sm:$0xff] %vm1479, %v3099
      %s3137 = scalar_lea.vmem [#allocation2], 288
      %3138 = vst.msk [vmem:[%s3137 + $0x8] sm:$0xff] %vm1479, %v3100
      %3139 = vst.msk [vmem:[%s3137 + $0x10] sm:$0xff] %vm1479, %v3101
      %3140 = vst.msk [vmem:[#allocation2] sm:$0xff] %vm1479, 0.0
      %3141 = vst.msk [vmem:[#allocation2 + $0x20] sm:$0xff] %vm1479, 0.0
      %3142 = vst.msk [vmem:[#allocation2 + $0x40] sm:$0xff] %vm1479, 0.0
      %3143 = vst.msk [vmem:[#allocation2 + $0x60] sm:$0xff] %vm1479, 0.0
      %3144 = vst.msk [vmem:[#allocation2 + $0x80] sm:$0xff] %vm1479, 0.0
      %3145 = vst.msk [vmem:[#allocation2 + $0xa0] sm:$0xff] %vm1479, 0.0
      %3146 = vst.msk [vmem:[#allocation2 + $0xc0] sm:$0xff] %vm1479, 0.0
      %3147 = vst.msk [vmem:[#allocation2 + $0xe0] sm:$0xff] %vm1479, 0.0
      %3148 = vst.msk [vmem:[#allocation2 + $0x100] sm:$0xff] %vm1479, 0.0
      %3149 = vst.msk [vmem:[#allocation2 + $0x120] sm:$0xff] %vm1479, 0.0
      %3150 = vst.msk [vmem:[#allocation2 + $0x18] sm:$0xff] %vm1479, 0.0
      %3151 = vst.msk [vmem:[#allocation2 + $0x38] sm:$0xff] %vm1479, 0.0
      %3152 = vst.msk [vmem:[#allocation2 + $0x58] sm:$0xff] %vm1479, 0.0
      %3153 = vst.msk [vmem:[#allocation2 + $0x78] sm:$0xff] %vm1479, 0.0
      %3154 = vst.msk [vmem:[#allocation2 + $0x98] sm:$0xff] %vm1479, 0.0
      %3155 = vst.msk [vmem:[#allocation2 + $0xb8] sm:$0xff] %vm1479, 0.0
      %3156 = vst.msk [vmem:[#allocation2 + $0xd8] sm:$0xff] %vm1479, 0.0
      %3157 = vst.msk [vmem:[#allocation2 + $0xf8] sm:$0xff] %vm1479, 0.0
      %3158 = vst.msk [vmem:[#allocation2 + $0x118] sm:$0xff] %vm1479, 0.0
      %3159 = vst.msk [vmem:[#allocation2 + $0x138] sm:$0xff] %vm1479, 0.0
      %p3160 = scmp.eq.s32.totalorder %s30, 0
      // Predicated region
      $region69: #{fpn_block_forward_nhwc.1} parent=67 // pred_check
        %p3161 = pneg %p3160
      $region70: #{fpn_block_forward_nhwc.1} parent=67 // pred_check_branch
        %3163 = sbr.rel (%p3161) target = $region72
      $region71: #{fpn_block_forward_nhwc.1} parent=67 // pred_region
        %3164 = vst.msk [vmem:[#allocation2] sm:$0xff] %vm1479, 0.0
        %3165 = vst.msk [vmem:[#allocation2 + $0x8] sm:$0xff] %vm1479, 0.0
        %3166 = vst.msk [vmem:[#allocation2 + $0x10] sm:$0xff] %vm1479, 0.0
        %3167 = vst.msk [vmem:[#allocation2 + $0x18] sm:$0xff] %vm1479, 0.0
      $region72: #{fpn_block_forward_nhwc.1} parent=67 // pred_fallthru
        _
      %p3168 = scmp.eq.s32.totalorder %s30, 1
      // Predicated region
      $region73: #{fpn_block_forward_nhwc.1} parent=67 // pred_check
        %p3169 = pneg %p3168
      $region74: #{fpn_block_forward_nhwc.1} parent=67 // pred_check_branch
        %3171 = sbr.rel (%p3169) target = $region76
      $region75: #{fpn_block_forward_nhwc.1} parent=67 // pred_region
        %3172 = vst.msk [vmem:[%s3137] sm:$0xff] %vm1479, 0.0
        %3173 = vst.msk [vmem:[%s3137 + $0x8] sm:$0xff] %vm1479, 0.0
        %3174 = vst.msk [vmem:[%s3137 + $0x10] sm:$0xff] %vm1479, 0.0
        %3175 = vst.msk [vmem:[%s3137 + $0x18] sm:$0xff] %vm1479, 0.0
      $region76: #{fpn_block_forward_nhwc.1} parent=67 // pred_fallthru
        _
      %v3176 = vld [vmem:[#allocation2] sm:$0xff]
      %v3177 = vld [vmem:[#allocation2 + $0x8] sm:$0xff]
      %v3178 = vld [vmem:[#allocation2 + $0x10] sm:$0xff]
      %v3179 = vld [vmem:[#allocation2 + $0x18] sm:$0xff]
      %v3180 = vld [vmem:[#allocation2 + $0x20] sm:$0xff]
      %v3181 = vld [vmem:[#allocation2 + $0x28] sm:$0xff]
      %v3182 = vld [vmem:[#allocation2 + $0x30] sm:$0xff]
      %v3183 = vld [vmem:[#allocation2 + $0x38] sm:$0xff]
      %v3184 = vld [vmem:[#allocation2 + $0x40] sm:$0xff]
      %v3185 = vld [vmem:[#allocation2 + $0x48] sm:$0xff]
      %v3186 = vld [vmem:[#allocation2 + $0x50] sm:$0xff]
      %v3187 = vld [vmem:[#allocation2 + $0x58] sm:$0xff]
      %v3188 = vld [vmem:[#allocation2 + $0x60] sm:$0xff]
      %v3189 = vld [vmem:[#allocation2 + $0x68] sm:$0xff]
      %v3190 = vld [vmem:[#allocation2 + $0x70] sm:$0xff]
      %v3191 = vld [vmem:[#allocation2 + $0x78] sm:$0xff]
      %v3192 = vld [vmem:[#allocation2 + $0x80] sm:$0xff]
      %v3193 = vld [vmem:[#allocation2 + $0x88] sm:$0xff]
      %v3194 = vld [vmem:[#allocation2 + $0x90] sm:$0xff]
      %v3195 = vld [vmem:[#allocation2 + $0x98] sm:$0xff]
      %v3196 = vld [vmem:[#allocation2 + $0xa0] sm:$0xff]
      %v3197 = vld [vmem:[#allocation2 + $0xa8] sm:$0xff]
      %v3198 = vld [vmem:[#allocation2 + $0xb0] sm:$0xff]
      %v3199 = vld [vmem:[#allocation2 + $0xb8] sm:$0xff]
      %v3200 = vld [vmem:[#allocation2 + $0xc0] sm:$0xff]
      %v3201 = vld [vmem:[#allocation2 + $0xc8] sm:$0xff]
      %v3202 = vld [vmem:[#allocation2 + $0xd0] sm:$0xff]
      %v3203 = vld [vmem:[#allocation2 + $0xd8] sm:$0xff]
      %v3204 = vld [vmem:[#allocation2 + $0xe0] sm:$0xff]
      %v3205 = vld [vmem:[#allocation2 + $0xe8] sm:$0xff]
      %v3206 = vld [vmem:[#allocation2 + $0xf0] sm:$0xff]
      %v3207 = vld [vmem:[#allocation2 + $0xf8] sm:$0xff]
      %v3208 = vld [vmem:[%s10] sm:$0xff]
      %v3210 = vsel %vm1479, %v3176, 0
      %v3213 = vsel %vm1479, %v3177, 0
      %v3216 = vsel %vm1479, %v3178, 0
      %v3219 = vsel %vm1479, %v3179, 0
      %v3222 = vsel %vm1479, %v3180, 0
      %v3225 = vsel %vm1479, %v3181, 0
      %v3228 = vsel %vm1479, %v3182, 0
      %v3231 = vsel %vm1479, %v3183, 0
      %v3234 = vsel %vm1479, %v3184, 0
      %v3237 = vsel %vm1479, %v3185, 0
      %v3240 = vsel %vm1479, %v3186, 0
      %v3243 = vsel %vm1479, %v3187, 0
      %v3246 = vsel %vm1479, %v3188, 0
      %v3249 = vsel %vm1479, %v3189, 0
      %v3252 = vsel %vm1479, %v3190, 0
      %v3255 = vsel %vm1479, %v3191, 0
      %v3258 = vsel %vm1479, %v3192, 0
      %v3261 = vsel %vm1479, %v3193, 0
      %v3264 = vsel %vm1479, %v3194, 0
      %v3267 = vsel %vm1479, %v3195, 0
      %v3270 = vsel %vm1479, %v3196, 0
      %v3273 = vsel %vm1479, %v3197, 0
      %v3276 = vsel %vm1479, %v3198, 0
      %v3279 = vsel %vm1479, %v3199, 0
      %v3282 = vsel %vm1479, %v3200, 0
      %v3285 = vsel %vm1479, %v3201, 0
      %v3288 = vsel %vm1479, %v3202, 0
      %v3291 = vsel %vm1479, %v3203, 0
      %v3294 = vsel %vm1479, %v3204, 0
      %v3297 = vsel %vm1479, %v3205, 0
      %v3300 = vsel %vm1479, %v3206, 0
      %v3303 = vsel %vm1479, %v3207, 0
      %3305 = vmatprep.subr.mxu0 0.0
      %3306 = vmatpush1.msra.mxu0 %v3208
      %3307 = vmatprep.subr.mxu0 0.0
      %3308 = vmatpush1.msra.mxu0 0.0
      %3309 = vmatprep.subr.mxu0 0.0
      %3310 = vmatpush1.msra.mxu0 0.0
      %3311 = vmatprep.subr.mxu0 0.0
      %3312 = vmatpush1.msra.mxu0 0.0
      %3313 = vmatprep.subr.mxu0 0.0
      %3314 = vmatpush1.msra.mxu0 0.0
      %3315 = vmatprep.subr.mxu0 0.0
      %3316 = vmatpush1.msra.mxu0 0.0
      %3317 = vmatprep.subr.mxu0 0.0
      %3318 = vmatpush1.msra.mxu0 0.0
      %3319 = vmatprep.subr.mxu0 0.0
      %3320 = vmatpush1.msra.mxu0 0.0
      %3321 = vmatprep.subr.mxu0 0.0
      %3322 = vmatpush1.msra.mxu0 0.0
      %3323 = vmatprep.subr.mxu0 0.0
      %3324 = vmatpush1.msra.mxu0 0.0
      %3325 = vmatprep.subr.mxu0 0.0
      %3326 = vmatpush1.msra.mxu0 0.0
      %3327 = vmatprep.subr.mxu0 0.0
      %3328 = vmatpush1.msra.mxu0 0.0
      %3329 = vmatprep.subr.mxu0 0.0
      %3330 = vmatpush1.msra.mxu0 0.0
      %3331 = vmatprep.subr.mxu0 0.0
      %3332 = vmatpush1.msra.mxu0 0.0
      %3333 = vmatprep.subr.mxu0 0.0
      %3334 = vmatpush1.msra.mxu0 0.0
      %3335 = vmatprep.subr.mxu0 0.0
      %3336 = vmatpush1.msra.mxu0 0.0
      %3337 = vmatprep.subr.mxu0 0.0
      %3338 = vmatpush1.msra.mxu0 0.0
      %3339 = vmatprep.subr.mxu0 0.0
      %3340 = vmatpush1.msra.mxu0 0.0
      %3341 = vmatprep.subr.mxu0 0.0
      %3342 = vmatpush1.msra.mxu0 0.0
      %3343 = vmatprep.subr.mxu0 0.0
      %3344 = vmatpush1.msra.mxu0 0.0
      %3345 = vmatprep.subr.mxu0 0.0
      %3346 = vmatpush1.msra.mxu0 0.0
      %3347 = vmatprep.subr.mxu0 0.0
      %3348 = vmatpush1.msra.mxu0 0.0
      %3349 = vmatprep.subr.mxu0 0.0
      %3350 = vmatpush1.msra.mxu0 0.0
      %3351 = vmatprep.subr.mxu0 0.0
      %3352 = vmatpush1.msra.mxu0 0.0
      %3353 = vmatprep.subr.mxu0 0.0
      %3354 = vmatpush1.msra.mxu0 0.0
      %3355 = vmatprep.subr.mxu0 0.0
      %3356 = vmatpush1.msra.mxu0 0.0
      %3357 = vmatprep.subr.mxu0 0.0
      %3358 = vmatpush1.msra.mxu0 0.0
      %3359 = vmatprep.subr.mxu0 0.0
      %3360 = vmatpush1.msra.mxu0 0.0
      %3361 = vmatprep.subr.mxu0 0.0
      %3362 = vmatpush1.msra.mxu0 0.0
      %3363 = vmatprep.subr.mxu0 0.0
      %3364 = vmatpush1.msra.mxu0 0.0
      %3365 = vmatprep.subr.mxu0 0.0
      %3366 = vmatpush1.msra.mxu0 0.0
      %3367 = vmatprep.subr.mxu0 0.0
      %3368 = vmatpush1.msra.mxu0 0.0
      %3369 = vmatprep.mubr.f32.mxu0 0.0
      %3370 = vmatmul.mubr.f32.gmra.mrb[0].mxu0 %v3210
      %v3371 = vpop.f32.mrb[0].mxu0
      %v3372 = vadd.f32 0.0, %v3371
      %v3373 = vpop.f32.mrb[0].mxu0
      %3374 = vmatprep.mubr.f32.mxu0 0.0
      %3375 = vmatmul.mubr.f32.gmra.mrb[0].mxu0 %v3213
      %v3376 = vpop.f32.mrb[0].mxu0
      %v3377 = vadd.f32 0.0, %v3376
      %v3378 = vpop.f32.mrb[0].mxu0
      %3379 = vmatprep.mubr.f32.mxu0 0.0
      %3380 = vmatmul.mubr.f32.gmra.mrb[0].mxu0 %v3216
      %v3381 = vpop.f32.mrb[0].mxu0
      %v3382 = vadd.f32 0.0, %v3381
      %v3383 = vpop.f32.mrb[0].mxu0
      %3384 = vmatprep.mubr.f32.mxu0 0.0
      %3385 = vmatmul.mubr.f32.gmra.mrb[0].mxu0 %v3219
      %v3386 = vpop.f32.mrb[0].mxu0
      %v3387 = vadd.f32 0.0, %v3386
      %v3388 = vpop.f32.mrb[0].mxu0
      %3389 = vmatprep.mubr.f32.mxu0 0.0
      %3390 = vmatmul.mubr.f32.gmra.mrb[0].mxu0 %v3222
      %v3391 = vpop.f32.mrb[0].mxu0
      %v3392 = vadd.f32 0.0, %v3391
      %v3393 = vpop.f32.mrb[0].mxu0
      %3394 = vmatprep.mubr.f32.mxu0 0.0
      %3395 = vmatmul.mubr.f32.gmra.mrb[0].mxu0 %v3225
      %v3396 = vpop.f32.mrb[0].mxu0
      %v3397 = vadd.f32 0.0, %v3396
      %v3398 = vpop.f32.mrb[0].mxu0
      %3399 = vmatprep.mubr.f32.mxu0 0.0
      %3400 = vmatmul.mubr.f32.gmra.mrb[0].mxu0 %v3228
      %v3401 = vpop.f32.mrb[0].mxu0
      %v3402 = vadd.f32 0.0, %v3401
      %v3403 = vpop.f32.mrb[0].mxu0
      %3404 = vmatprep.mubr.f32.mxu0 0.0
      %3405 = vmatmul.mubr.f32.gmra.mrb[0].mxu0 %v3231
      %v3406 = vpop.f32.mrb[0].mxu0
      %v3407 = vadd.f32 0.0, %v3406
      %v3408 = vpop.f32.mrb[0].mxu0
      %3409 = vmatprep.mubr.f32.mxu0 0.0
      %3410 = vmatmul.mubr.f32.gmra.mrb[0].mxu0 %v3234
      %v3411 = vpop.f32.mrb[0].mxu0
      %v3412 = vadd.f32 0.0, %v3411
      %v3413 = vpop.f32.mrb[0].mxu0
      %3414 = vmatprep.mubr.f32.mxu0 0.0
      %3415 = vmatmul.mubr.f32.gmra.mrb[0].mxu0 %v3237
      %v3416 = vpop.f32.mrb[0].mxu0
      %v3417 = vadd.f32 0.0, %v3416
      %v3418 = vpop.f32.mrb[0].mxu0
      %3419 = vmatprep.mubr.f32.mxu0 0.0
      %3420 = vmatmul.mubr.f32.gmra.mrb[0].mxu0 %v3240
      %v3421 = vpop.f32.mrb[0].mxu0
      %v3422 = vadd.f32 0.0, %v3421
      %v3423 = vpop.f32.mrb[0].mxu0
      %3424 = vmatprep.mubr.f32.mxu0 0.0
      %3425 = vmatmul.mubr.f32.gmra.mrb[0].mxu0 %v3243
      %v3426 = vpop.f32.mrb[0].mxu0
      %v3427 = vadd.f32 0.0, %v3426
      %v3428 = vpop.f32.mrb[0].mxu0
      %3429 = vmatprep.mubr.f32.mxu0 0.0
      %3430 = vmatmul.mubr.f32.gmra.mrb[0].mxu0 %v3246
      %v3431 = vpop.f32.mrb[0].mxu0
      %v3432 = vadd.f32 0.0, %v3431
      %v3433 = vpop.f32.mrb[0].mxu0
      %3434 = vmatprep.mubr.f32.mxu0 0.0
      %3435 = vmatmul.mubr.f32.gmra.mrb[0].mxu0 %v3249
      %v3436 = vpop.f32.mrb[0].mxu0
      %v3437 = vadd.f32 0.0, %v3436
      %v3438 = vpop.f32.mrb[0].mxu0
      %3439 = vmatprep.mubr.f32.mxu0 0.0
      %3440 = vmatmul.mubr.f32.gmra.mrb[0].mxu0 %v3252
      %v3441 = vpop.f32.mrb[0].mxu0
      %v3442 = vadd.f32 0.0, %v3441
      %v3443 = vpop.f32.mrb[0].mxu0
      %3444 = vmatprep.mubr.f32.mxu0 0.0
      %3445 = vmatmul.mubr.f32.gmra.mrb[0].mxu0 %v3255
      %v3446 = vpop.f32.mrb[0].mxu0
      %v3447 = vadd.f32 0.0, %v3446
      %v3448 = vpop.f32.mrb[0].mxu0
      %3449 = vmatprep.mubr.f32.mxu0 0.0
      %3450 = vmatmul.mubr.f32.gmra.mrb[0].mxu0 %v3258
      %v3451 = vpop.f32.mrb[0].mxu0
      %v3452 = vadd.f32 0.0, %v3451
      %v3453 = vpop.f32.mrb[0].mxu0
      %3454 = vmatprep.mubr.f32.mxu0 0.0
      %3455 = vmatmul.mubr.f32.gmra.mrb[0].mxu0 %v3261
      %v3456 = vpop.f32.mrb[0].mxu0
      %v3457 = vadd.f32 0.0, %v3456
      %v3458 = vpop.f32.mrb[0].mxu0
      %3459 = vmatprep.mubr.f32.mxu0 0.0
      %3460 = vmatmul.mubr.f32.gmra.mrb[0].mxu0 %v3264
      %v3461 = vpop.f32.mrb[0].mxu0
      %v3462 = vadd.f32 0.0, %v3461
      %v3463 = vpop.f32.mrb[0].mxu0
      %3464 = vmatprep.mubr.f32.mxu0 0.0
      %3465 = vmatmul.mubr.f32.gmra.mrb[0].mxu0 %v3267
      %v3466 = vpop.f32.mrb[0].mxu0
      %v3467 = vadd.f32 0.0, %v3466
      %v3468 = vpop.f32.mrb[0].mxu0
      %3469 = vmatprep.mubr.f32.mxu0 0.0
      %3470 = vmatmul.mubr.f32.gmra.mrb[0].mxu0 %v3270
      %v3471 = vpop.f32.mrb[0].mxu0
      %v3472 = vadd.f32 0.0, %v3471
      %v3473 = vpop.f32.mrb[0].mxu0
      %3474 = vmatprep.mubr.f32.mxu0 0.0
      %3475 = vmatmul.mubr.f32.gmra.mrb[0].mxu0 %v3273
      %v3476 = vpop.f32.mrb[0].mxu0
      %v3477 = vadd.f32 0.0, %v3476
      %v3478 = vpop.f32.mrb[0].mxu0
      %3479 = vmatprep.mubr.f32.mxu0 0.0
      %3480 = vmatmul.mubr.f32.gmra.mrb[0].mxu0 %v3276
      %v3481 = vpop.f32.mrb[0].mxu0
      %v3482 = vadd.f32 0.0, %v3481
      %v3483 = vpop.f32.mrb[0].mxu0
      %3484 = vmatprep.mubr.f32.mxu0 0.0
      %3485 = vmatmul.mubr.f32.gmra.mrb[0].mxu0 %v3279
      %v3486 = vpop.f32.mrb[0].mxu0
      %v3487 = vadd.f32 0.0, %v3486
      %v3488 = vpop.f32.mrb[0].mxu0
      %3489 = vmatprep.mubr.f32.mxu0 0.0
      %3490 = vmatmul.mubr.f32.gmra.mrb[0].mxu0 %v3282
      %v3491 = vpop.f32.mrb[0].mxu0
      %v3492 = vadd.f32 0.0, %v3491
      %v3493 = vpop.f32.mrb[0].mxu0
      %3494 = vmatprep.mubr.f32.mxu0 0.0
      %3495 = vmatmul.mubr.f32.gmra.mrb[0].mxu0 %v3285
      %v3496 = vpop.f32.mrb[0].mxu0
      %v3497 = vadd.f32 0.0, %v3496
      %v3498 = vpop.f32.mrb[0].mxu0
      %3499 = vmatprep.mubr.f32.mxu0 0.0
      %3500 = vmatmul.mubr.f32.gmra.mrb[0].mxu0 %v3288
      %v3501 = vpop.f32.mrb[0].mxu0
      %v3502 = vadd.f32 0.0, %v3501
      %v3503 = vpop.f32.mrb[0].mxu0
      %3504 = vmatprep.mubr.f32.mxu0 0.0
      %3505 = vmatmul.mubr.f32.gmra.mrb[0].mxu0 %v3291
      %v3506 = vpop.f32.mrb[0].mxu0
      %v3507 = vadd.f32 0.0, %v3506
      %v3508 = vpop.f32.mrb[0].mxu0
      %3509 = vmatprep.mubr.f32.mxu0 0.0
      %3510 = vmatmul.mubr.f32.gmra.mrb[0].mxu0 %v3294
      %v3511 = vpop.f32.mrb[0].mxu0
      %v3512 = vadd.f32 0.0, %v3511
      %v3513 = vpop.f32.mrb[0].mxu0
      %3514 = vmatprep.mubr.f32.mxu0 0.0
      %3515 = vmatmul.mubr.f32.gmra.mrb[0].mxu0 %v3297
      %v3516 = vpop.f32.mrb[0].mxu0
      %v3517 = vadd.f32 0.0, %v3516
      %v3518 = vpop.f32.mrb[0].mxu0
      %3519 = vmatprep.mubr.f32.mxu0 0.0
      %3520 = vmatmul.mubr.f32.gmra.mrb[0].mxu0 %v3300
      %v3521 = vpop.f32.mrb[0].mxu0
      %v3522 = vadd.f32 0.0, %v3521
      %v3523 = vpop.f32.mrb[0].mxu0
      %3524 = vmatprep.mubr.f32.mxu0 0.0
      %3525 = vmatmul.mubr.f32.gmra.mrb[0].mxu0 %v3303
      %v3526 = vpop.f32.mrb[0].mxu0
      %v3527 = vadd.f32 0.0, %v3526
      %v3528 = vpop.f32.mrb[0].mxu0
      %3529 = vdwg.mxu0
      %v3530 = vadd.f32 %v3372, 0.0
      %v3531 = vadd.f32 %v3377, 0.0
      %v3532 = vadd.f32 %v3382, 0.0
      %v3533 = vadd.f32 %v3392, 0.0
      %v3534 = vadd.f32 %v3397, 0.0
      %v3535 = vadd.f32 %v3402, 0.0
      %v3536 = vadd.f32 %v3412, 0.0
      %v3537 = vadd.f32 %v3417, 0.0
      %v3538 = vadd.f32 %v3422, 0.0
      %v3539 = vadd.f32 %v3432, 0.0
      %v3540 = vadd.f32 %v3437, 0.0
      %v3541 = vadd.f32 %v3442, 0.0
      %v3542 = vadd.f32 %v3452, 0.0
      %v3543 = vadd.f32 %v3457, 0.0
      %v3544 = vadd.f32 %v3462, 0.0
      %v3545 = vadd.f32 %v3472, 0.0
      %v3546 = vadd.f32 %v3477, 0.0
      %v3547 = vadd.f32 %v3482, 0.0
      %v3548 = vadd.f32 %v3492, 0.0
      %v3549 = vadd.f32 %v3497, 0.0
      %v3550 = vadd.f32 %v3502, 0.0
      %v3551 = vadd.f32 %v3512, 0.0
      %v3552 = vadd.f32 %v3517, 0.0
      %v3553 = vadd.f32 %v3522, 0.0
      %vm3570 = vcmask 1046528
      %v3571 = vrot.slane %v3377, 1
      %v3572 = vrot.slane %v3382, 1
      %v3573 = vsel %vm3570, %v3571, %v3572
      %v3574 = vrot.slane %v3397, 1
      %v3575 = vrot.slane %v3402, 1
      %v3576 = vsel %vm3570, %v3574, %v3575
      %v3577 = vrot.slane %v3417, 1
      %v3578 = vrot.slane %v3422, 1
      %v3579 = vsel %vm3570, %v3577, %v3578
      %v3580 = vrot.slane %v3437, 1
      %v3581 = vrot.slane %v3442, 1
      %v3582 = vsel %vm3570, %v3580, %v3581
      %v3583 = vrot.slane %v3457, 1
      %v3584 = vrot.slane %v3462, 1
      %v3585 = vsel %vm3570, %v3583, %v3584
      %v3586 = vrot.slane %v3477, 1
      %v3587 = vrot.slane %v3482, 1
      %v3588 = vsel %vm3570, %v3586, %v3587
      %v3589 = vrot.slane %v3497, 1
      %v3590 = vrot.slane %v3502, 1
      %v3591 = vsel %vm3570, %v3589, %v3590
      %v3592 = vrot.slane %v3517, 1
      %v3593 = vrot.slane %v3522, 1
      %v3594 = vsel %vm3570, %v3592, %v3593
      %3595 = vrot.lane.b32.xlu0 %v3571, 120
      %v3596 = vpop.permute.xlu0 %3595
      %3597 = vrot.lane.b32.xlu0 %v3573, 120
      %v3598 = vpop.permute.xlu0 %3597
      %3599 = vrot.lane.b32.xlu0 %v3572, 120
      %v3600 = vpop.permute.xlu0 %3599
      %3601 = vrot.lane.b32.xlu0 %v3574, 120
      %v3602 = vpop.permute.xlu0 %3601
      %3603 = vrot.lane.b32.xlu0 %v3576, 120
      %v3604 = vpop.permute.xlu0 %3603
      %3605 = vrot.lane.b32.xlu0 %v3575, 120
      %v3606 = vpop.permute.xlu0 %3605
      %3607 = vrot.lane.b32.xlu0 %v3577, 120
      %v3608 = vpop.permute.xlu0 %3607
      %3609 = vrot.lane.b32.xlu0 %v3579, 120
      %v3610 = vpop.permute.xlu0 %3609
      %3611 = vrot.lane.b32.xlu0 %v3578, 120
      %v3612 = vpop.permute.xlu0 %3611
      %3613 = vrot.lane.b32.xlu0 %v3580, 120
      %v3614 = vpop.permute.xlu0 %3613
      %3615 = vrot.lane.b32.xlu0 %v3582, 120
      %v3616 = vpop.permute.xlu0 %3615
      %3617 = vrot.lane.b32.xlu0 %v3581, 120
      %v3618 = vpop.permute.xlu0 %3617
      %3619 = vrot.lane.b32.xlu0 %v3583, 120
      %v3620 = vpop.permute.xlu0 %3619
      %3621 = vrot.lane.b32.xlu0 %v3585, 120
      %v3622 = vpop.permute.xlu0 %3621
      %3623 = vrot.lane.b32.xlu0 %v3584, 120
      %v3624 = vpop.permute.xlu0 %3623
      %3625 = vrot.lane.b32.xlu0 %v3586, 120
      %v3626 = vpop.permute.xlu0 %3625
      %3627 = vrot.lane.b32.xlu0 %v3588, 120
      %v3628 = vpop.permute.xlu0 %3627
      %3629 = vrot.lane.b32.xlu0 %v3587, 120
      %v3630 = vpop.permute.xlu0 %3629
      %3631 = vrot.lane.b32.xlu0 %v3589, 120
      %v3632 = vpop.permute.xlu0 %3631
      %3633 = vrot.lane.b32.xlu0 %v3591, 120
      %v3634 = vpop.permute.xlu0 %3633
      %3635 = vrot.lane.b32.xlu0 %v3590, 120
      %v3636 = vpop.permute.xlu0 %3635
      %3637 = vrot.lane.b32.xlu0 %v3592, 120
      %v3638 = vpop.permute.xlu0 %3637
      %3639 = vrot.lane.b32.xlu0 %v3594, 120
      %v3640 = vpop.permute.xlu0 %3639
      %3641 = vrot.lane.b32.xlu0 %v3593, 120
      %v3642 = vpop.permute.xlu0 %3641
      %v3667 = vadd.f32 %v3530, %v3596
      %v3668 = vadd.f32 %v3531, %v3598
      %v3669 = vadd.f32 %v3532, %v3600
      %v3670 = vadd.f32 %v3533, %v3602
      %v3671 = vadd.f32 %v3534, %v3604
      %v3672 = vadd.f32 %v3535, %v3606
      %v3673 = vadd.f32 %v3536, %v3608
      %v3674 = vadd.f32 %v3537, %v3610
      %v3675 = vadd.f32 %v3538, %v3612
      %v3676 = vadd.f32 %v3539, %v3614
      %v3677 = vadd.f32 %v3540, %v3616
      %v3678 = vadd.f32 %v3541, %v3618
      %v3679 = vadd.f32 %v3542, %v3620
      %v3680 = vadd.f32 %v3543, %v3622
      %v3681 = vadd.f32 %v3544, %v3624
      %v3682 = vadd.f32 %v3545, %v3626
      %v3683 = vadd.f32 %v3546, %v3628
      %v3684 = vadd.f32 %v3547, %v3630
      %v3685 = vadd.f32 %v3548, %v3632
      %v3686 = vadd.f32 %v3549, %v3634
      %v3687 = vadd.f32 %v3550, %v3636
      %v3688 = vadd.f32 %v3551, %v3638
      %v3689 = vadd.f32 %v3552, %v3640
      %v3690 = vadd.f32 %v3553, %v3642
      %v3699 = vrot.slane %v3377, 2
      %v3700 = vrot.slane %v3382, 2
      %v3701 = vsel %vm2539, %v3699, %v3700
      %v3702 = vrot.slane %v3387, 2
      %v3703 = vsel %vm2539, %v3700, %v3702
      %v3704 = vrot.slane %v3397, 2
      %v3705 = vrot.slane %v3402, 2
      %v3706 = vsel %vm2539, %v3704, %v3705
      %v3707 = vrot.slane %v3407, 2
      %v3708 = vsel %vm2539, %v3705, %v3707
      %v3709 = vrot.slane %v3417, 2
      %v3710 = vrot.slane %v3422, 2
      %v3711 = vsel %vm2539, %v3709, %v3710
      %v3712 = vrot.slane %v3427, 2
      %v3713 = vsel %vm2539, %v3710, %v3712
      %v3714 = vrot.slane %v3437, 2
      %v3715 = vrot.slane %v3442, 2
      %v3716 = vsel %vm2539, %v3714, %v3715
      %v3717 = vrot.slane %v3447, 2
      %v3718 = vsel %vm2539, %v3715, %v3717
      %v3719 = vrot.slane %v3457, 2
      %v3720 = vrot.slane %v3462, 2
      %v3721 = vsel %vm2539, %v3719, %v3720
      %v3722 = vrot.slane %v3467, 2
      %v3723 = vsel %vm2539, %v3720, %v3722
      %v3724 = vrot.slane %v3477, 2
      %v3725 = vrot.slane %v3482, 2
      %v3726 = vsel %vm2539, %v3724, %v3725
      %v3727 = vrot.slane %v3487, 2
      %v3728 = vsel %vm2539, %v3725, %v3727
      %v3729 = vrot.slane %v3497, 2
      %v3730 = vrot.slane %v3502, 2
      %v3731 = vsel %vm2539, %v3729, %v3730
      %v3732 = vrot.slane %v3507, 2
      %v3733 = vsel %vm2539, %v3730, %v3732
      %v3734 = vrot.slane %v3517, 2
      %v3735 = vrot.slane %v3522, 2
      %v3736 = vsel %vm2539, %v3734, %v3735
      %v3737 = vrot.slane %v3527, 2
      %v3738 = vsel %vm2539, %v3735, %v3737
      %3739 = vrot.lane.b32.xlu0 %v3699, 112
      %v3740 = vpop.permute.xlu0 %3739
      %3741 = vrot.lane.b32.xlu0 %v3701, 112
      %v3742 = vpop.permute.xlu0 %3741
      %3743 = vrot.lane.b32.xlu0 %v3703, 112
      %v3744 = vpop.permute.xlu0 %3743
      %3745 = vrot.lane.b32.xlu0 %v3704, 112
      %v3746 = vpop.permute.xlu0 %3745
      %3747 = vrot.lane.b32.xlu0 %v3706, 112
      %v3748 = vpop.permute.xlu0 %3747
      %3749 = vrot.lane.b32.xlu0 %v3708, 112
      %v3750 = vpop.permute.xlu0 %3749
      %3751 = vrot.lane.b32.xlu0 %v3709, 112
      %v3752 = vpop.permute.xlu0 %3751
      %3753 = vrot.lane.b32.xlu0 %v3711, 112
      %v3754 = vpop.permute.xlu0 %3753
      %3755 = vrot.lane.b32.xlu0 %v3713, 112
      %v3756 = vpop.permute.xlu0 %3755
      %3757 = vrot.lane.b32.xlu0 %v3714, 112
      %v3758 = vpop.permute.xlu0 %3757
      %3759 = vrot.lane.b32.xlu0 %v3716, 112
      %v3760 = vpop.permute.xlu0 %3759
      %3761 = vrot.lane.b32.xlu0 %v3718, 112
      %v3762 = vpop.permute.xlu0 %3761
      %3763 = vrot.lane.b32.xlu0 %v3719, 112
      %v3764 = vpop.permute.xlu0 %3763
      %3765 = vrot.lane.b32.xlu0 %v3721, 112
      %v3766 = vpop.permute.xlu0 %3765
      %3767 = vrot.lane.b32.xlu0 %v3723, 112
      %v3768 = vpop.permute.xlu0 %3767
      %3769 = vrot.lane.b32.xlu0 %v3724, 112
      %v3770 = vpop.permute.xlu0 %3769
      %3771 = vrot.lane.b32.xlu0 %v3726, 112
      %v3772 = vpop.permute.xlu0 %3771
      %3773 = vrot.lane.b32.xlu0 %v3728, 112
      %v3774 = vpop.permute.xlu0 %3773
      %3775 = vrot.lane.b32.xlu0 %v3729, 112
      %v3776 = vpop.permute.xlu0 %3775
      %3777 = vrot.lane.b32.xlu0 %v3731, 112
      %v3778 = vpop.permute.xlu0 %3777
      %3779 = vrot.lane.b32.xlu0 %v3733, 112
      %v3780 = vpop.permute.xlu0 %3779
      %3781 = vrot.lane.b32.xlu0 %v3734, 112
      %v3782 = vpop.permute.xlu0 %3781
      %3783 = vrot.lane.b32.xlu0 %v3736, 112
      %v3784 = vpop.permute.xlu0 %3783
      %3785 = vrot.lane.b32.xlu0 %v3738, 112
      %v3786 = vpop.permute.xlu0 %3785
      %v3811 = vadd.f32 %v3667, %v3740
      %v3812 = vadd.f32 %v3668, %v3742
      %v3813 = vadd.f32 %v3669, %v3744
      %v3814 = vadd.f32 %v3670, %v3746
      %v3815 = vadd.f32 %v3671, %v3748
      %v3816 = vadd.f32 %v3672, %v3750
      %v3817 = vadd.f32 %v3673, %v3752
      %v3818 = vadd.f32 %v3674, %v3754
      %v3819 = vadd.f32 %v3675, %v3756
      %v3820 = vadd.f32 %v3676, %v3758
      %v3821 = vadd.f32 %v3677, %v3760
      %v3822 = vadd.f32 %v3678, %v3762
      %v3823 = vadd.f32 %v3679, %v3764
      %v3824 = vadd.f32 %v3680, %v3766
      %v3825 = vadd.f32 %v3681, %v3768
      %v3826 = vadd.f32 %v3682, %v3770
      %v3827 = vadd.f32 %v3683, %v3772
      %v3828 = vadd.f32 %v3684, %v3774
      %v3829 = vadd.f32 %v3685, %v3776
      %v3830 = vadd.f32 %v3686, %v3778
      %v3831 = vadd.f32 %v3687, %v3780
      %v3832 = vadd.f32 %v3688, %v3782
      %v3833 = vadd.f32 %v3689, %v3784
      %v3834 = vadd.f32 %v3690, %v3786
      %v3835 = vld [vmem:[%s3118] sm:$0xff]
      %v3836 = vld [vmem:[%s3118 + $0x8] sm:$0xff]
      %v3837 = vld [vmem:[%s3118 + $0x10] sm:$0xff]
      %v3838 = vld [vmem:[%s3118 + $0x18] sm:$0xff]
      %v3839 = vld [vmem:[%s3118 + $0x20] sm:$0xff]
      %v3840 = vld [vmem:[%s3118 + $0x28] sm:$0xff]
      %v3841 = vld [vmem:[%s3118 + $0x30] sm:$0xff]
      %v3842 = vld [vmem:[%s3118 + $0x38] sm:$0xff]
      %v3843 = vld [vmem:[%s3118 + $0x40] sm:$0xff]
      %v3844 = vld [vmem:[%s3118 + $0x48] sm:$0xff]
      %v3845 = vld [vmem:[%s3118 + $0x50] sm:$0xff]
      %v3846 = vld [vmem:[%s3118 + $0x58] sm:$0xff]
      %v3847 = vld [vmem:[%s3118 + $0x60] sm:$0xff]
      %v3848 = vld [vmem:[%s3118 + $0x68] sm:$0xff]
      %v3849 = vld [vmem:[%s3118 + $0x70] sm:$0xff]
      %v3850 = vld [vmem:[%s3118 + $0x78] sm:$0xff]
      %v3851 = vld [vmem:[%s3118 + $0x80] sm:$0xff]
      %v3852 = vld [vmem:[%s3118 + $0x88] sm:$0xff]
      %v3853 = vld [vmem:[%s3118 + $0x90] sm:$0xff]
      %v3854 = vld [vmem:[%s3118 + $0x98] sm:$0xff]
      %v3855 = vld [vmem:[%s3118 + $0xa0] sm:$0xff]
      %v3856 = vld [vmem:[%s3118 + $0xa8] sm:$0xff]
      %v3857 = vld [vmem:[%s3118 + $0xb0] sm:$0xff]
      %v3858 = vld [vmem:[%s3118 + $0xb8] sm:$0xff]
      %v3859 = vld [vmem:[%s3118 + $0xc0] sm:$0xff]
      %v3860 = vld [vmem:[%s3118 + $0xc8] sm:$0xff]
      %v3861 = vld [vmem:[%s3118 + $0xd0] sm:$0xff]
      %v3862 = vld [vmem:[%s3118 + $0xd8] sm:$0xff]
      %v3863 = vld [vmem:[%s3118 + $0xe0] sm:$0xff]
      %v3864 = vld [vmem:[%s3118 + $0xe8] sm:$0xff]
      %v3865 = vld [vmem:[%s3118 + $0xf0] sm:$0xff]
      %v3866 = vld [vmem:[%s3118 + $0xf8] sm:$0xff]
      %s3867 = scalar_lea.vmem %s10, 8
      %v3868 = vld [vmem:[%s3867] sm:$0xff]
      %v3870 = vsel %vm1479, %v3835, 0
      %v3873 = vsel %vm1479, %v3836, 0
      %v3876 = vsel %vm1479, %v3837, 0
      %v3879 = vsel %vm1479, %v3838, 0
      %v3882 = vsel %vm1479, %v3839, 0
      %v3885 = vsel %vm1479, %v3840, 0
      %v3888 = vsel %vm1479, %v3841, 0
      %v3891 = vsel %vm1479, %v3842, 0
      %v3894 = vsel %vm1479, %v3843, 0
      %v3897 = vsel %vm1479, %v3844, 0
      %v3900 = vsel %vm1479, %v3845, 0
      %v3903 = vsel %vm1479, %v3846, 0
      %v3906 = vsel %vm1479, %v3847, 0
      %v3909 = vsel %vm1479, %v3848, 0
      %v3912 = vsel %vm1479, %v3849, 0
      %v3915 = vsel %vm1479, %v3850, 0
      %v3918 = vsel %vm1479, %v3851, 0
      %v3921 = vsel %vm1479, %v3852, 0
      %v3924 = vsel %vm1479, %v3853, 0
      %v3927 = vsel %vm1479, %v3854, 0
      %v3930 = vsel %vm1479, %v3855, 0
      %v3933 = vsel %vm1479, %v3856, 0
      %v3936 = vsel %vm1479, %v3857, 0
      %v3939 = vsel %vm1479, %v3858, 0
      %v3942 = vsel %vm1479, %v3859, 0
      %v3945 = vsel %vm1479, %v3860, 0
      %v3948 = vsel %vm1479, %v3861, 0
      %v3951 = vsel %vm1479, %v3862, 0
      %v3954 = vsel %vm1479, %v3863, 0
      %v3957 = vsel %vm1479, %v3864, 0
      %v3960 = vsel %vm1479, %v3865, 0
      %v3963 = vsel %vm1479, %v3866, 0
      %3965 = vmatprep.subr.mxu0 0.0
      %3966 = vmatpush1.msra.mxu0 %v3868
      %3967 = vmatprep.subr.mxu0 0.0
      %3968 = vmatpush1.msra.mxu0 0.0
      %3969 = vmatprep.subr.mxu0 0.0
      %3970 = vmatpush1.msra.mxu0 0.0
      %3971 = vmatprep.subr.mxu0 0.0
      %3972 = vmatpush1.msra.mxu0 0.0
      %3973 = vmatprep.subr.mxu0 0.0
      %3974 = vmatpush1.msra.mxu0 0.0
      %3975 = vmatprep.subr.mxu0 0.0
      %3976 = vmatpush1.msra.mxu0 0.0
      %3977 = vmatprep.subr.mxu0 0.0
      %3978 = vmatpush1.msra.mxu0 0.0
      %3979 = vmatprep.subr.mxu0 0.0
      %3980 = vmatpush1.msra.mxu0 0.0
      %3981 = vmatprep.subr.mxu0 0.0
      %3982 = vmatpush1.msra.mxu0 0.0
      %3983 = vmatprep.subr.mxu0 0.0
      %3984 = vmatpush1.msra.mxu0 0.0
      %3985 = vmatprep.subr.mxu0 0.0
      %3986 = vmatpush1.msra.mxu0 0.0
      %3987 = vmatprep.subr.mxu0 0.0
      %3988 = vmatpush1.msra.mxu0 0.0
      %3989 = vmatprep.subr.mxu0 0.0
      %3990 = vmatpush1.msra.mxu0 0.0
      %3991 = vmatprep.subr.mxu0 0.0
      %3992 = vmatpush1.msra.mxu0 0.0
      %3993 = vmatprep.subr.mxu0 0.0
      %3994 = vmatpush1.msra.mxu0 0.0
      %3995 = vmatprep.subr.mxu0 0.0
      %3996 = vmatpush1.msra.mxu0 0.0
      %3997 = vmatprep.subr.mxu0 0.0
      %3998 = vmatpush1.msra.mxu0 0.0
      %3999 = vmatprep.subr.mxu0 0.0
      %4000 = vmatpush1.msra.mxu0 0.0
      %4001 = vmatprep.subr.mxu0 0.0
      %4002 = vmatpush1.msra.mxu0 0.0
      %4003 = vmatprep.subr.mxu0 0.0
      %4004 = vmatpush1.msra.mxu0 0.0
      %4005 = vmatprep.subr.mxu0 0.0
      %4006 = vmatpush1.msra.mxu0 0.0
      %4007 = vmatprep.subr.mxu0 0.0
      %4008 = vmatpush1.msra.mxu0 0.0
      %4009 = vmatprep.subr.mxu0 0.0
      %4010 = vmatpush1.msra.mxu0 0.0
      %4011 = vmatprep.subr.mxu0 0.0
      %4012 = vmatpush1.msra.mxu0 0.0
      %4013 = vmatprep.subr.mxu0 0.0
      %4014 = vmatpush1.msra.mxu0 0.0
      %4015 = vmatprep.subr.mxu0 0.0
      %4016 = vmatpush1.msra.mxu0 0.0
      %4017 = vmatprep.subr.mxu0 0.0
      %4018 = vmatpush1.msra.mxu0 0.0
      %4019 = vmatprep.subr.mxu0 0.0
      %4020 = vmatpush1.msra.mxu0 0.0
      %4021 = vmatprep.subr.mxu0 0.0
      %4022 = vmatpush1.msra.mxu0 0.0
      %4023 = vmatprep.subr.mxu0 0.0
      %4024 = vmatpush1.msra.mxu0 0.0
      %4025 = vmatprep.subr.mxu0 0.0
      %4026 = vmatpush1.msra.mxu0 0.0
      %4027 = vmatprep.subr.mxu0 0.0
      %4028 = vmatpush1.msra.mxu0 0.0
      %4029 = vmatprep.mubr.f32.mxu0 0.0
      %4030 = vmatmul.mubr.f32.gmra.mrb[0].mxu0 %v3870
      %v4031 = vpop.f32.mrb[0].mxu0
      %v4032 = vadd.f32 0.0, %v4031
      %v4033 = vpop.f32.mrb[0].mxu0
      %4034 = vmatprep.mubr.f32.mxu0 0.0
      %4035 = vmatmul.mubr.f32.gmra.mrb[0].mxu0 %v3873
      %v4036 = vpop.f32.mrb[0].mxu0
      %v4037 = vadd.f32 0.0, %v4036
      %v4038 = vpop.f32.mrb[0].mxu0
      %4039 = vmatprep.mubr.f32.mxu0 0.0
      %4040 = vmatmul.mubr.f32.gmra.mrb[0].mxu0 %v3876
      %v4041 = vpop.f32.mrb[0].mxu0
      %v4042 = vadd.f32 0.0, %v4041
      %v4043 = vpop.f32.mrb[0].mxu0
      %4044 = vmatprep.mubr.f32.mxu0 0.0
      %4045 = vmatmul.mubr.f32.gmra.mrb[0].mxu0 %v3879
      %v4046 = vpop.f32.mrb[0].mxu0
      %v4047 = vadd.f32 0.0, %v4046
      %v4048 = vpop.f32.mrb[0].mxu0
      %4049 = vmatprep.mubr.f32.mxu0 0.0
      %4050 = vmatmul.mubr.f32.gmra.mrb[0].mxu0 %v3882
      %v4051 = vpop.f32.mrb[0].mxu0
      %v4052 = vadd.f32 0.0, %v4051
      %v4053 = vpop.f32.mrb[0].mxu0
      %4054 = vmatprep.mubr.f32.mxu0 0.0
      %4055 = vmatmul.mubr.f32.gmra.mrb[0].mxu0 %v3885
      %v4056 = vpop.f32.mrb[0].mxu0
      %v4057 = vadd.f32 0.0, %v4056
      %v4058 = vpop.f32.mrb[0].mxu0
      %4059 = vmatprep.mubr.f32.mxu0 0.0
      %4060 = vmatmul.mubr.f32.gmra.mrb[0].mxu0 %v3888
      %v4061 = vpop.f32.mrb[0].mxu0
      %v4062 = vadd.f32 0.0, %v4061
      %v4063 = vpop.f32.mrb[0].mxu0
      %4064 = vmatprep.mubr.f32.mxu0 0.0
      %4065 = vmatmul.mubr.f32.gmra.mrb[0].mxu0 %v3891
      %v4066 = vpop.f32.mrb[0].mxu0
      %v4067 = vadd.f32 0.0, %v4066
      %v4068 = vpop.f32.mrb[0].mxu0
      %4069 = vmatprep.mubr.f32.mxu0 0.0
      %4070 = vmatmul.mubr.f32.gmra.mrb[0].mxu0 %v3894
      %v4071 = vpop.f32.mrb[0].mxu0
      %v4072 = vadd.f32 0.0, %v4071
      %v4073 = vpop.f32.mrb[0].mxu0
      %4074 = vmatprep.mubr.f32.mxu0 0.0
      %4075 = vmatmul.mubr.f32.gmra.mrb[0].mxu0 %v3897
      %v4076 = vpop.f32.mrb[0].mxu0
      %v4077 = vadd.f32 0.0, %v4076
      %v4078 = vpop.f32.mrb[0].mxu0
      %4079 = vmatprep.mubr.f32.mxu0 0.0
      %4080 = vmatmul.mubr.f32.gmra.mrb[0].mxu0 %v3900
      %v4081 = vpop.f32.mrb[0].mxu0
      %v4082 = vadd.f32 0.0, %v4081
      %v4083 = vpop.f32.mrb[0].mxu0
      %4084 = vmatprep.mubr.f32.mxu0 0.0
      %4085 = vmatmul.mubr.f32.gmra.mrb[0].mxu0 %v3903
      %v4086 = vpop.f32.mrb[0].mxu0
      %v4087 = vadd.f32 0.0, %v4086
      %v4088 = vpop.f32.mrb[0].mxu0
      %4089 = vmatprep.mubr.f32.mxu0 0.0
      %4090 = vmatmul.mubr.f32.gmra.mrb[0].mxu0 %v3906
      %v4091 = vpop.f32.mrb[0].mxu0
      %v4092 = vadd.f32 0.0, %v4091
      %v4093 = vpop.f32.mrb[0].mxu0
      %4094 = vmatprep.mubr.f32.mxu0 0.0
      %4095 = vmatmul.mubr.f32.gmra.mrb[0].mxu0 %v3909
      %v4096 = vpop.f32.mrb[0].mxu0
      %v4097 = vadd.f32 0.0, %v4096
      %v4098 = vpop.f32.mrb[0].mxu0
      %4099 = vmatprep.mubr.f32.mxu0 0.0
      %4100 = vmatmul.mubr.f32.gmra.mrb[0].mxu0 %v3912
      %v4101 = vpop.f32.mrb[0].mxu0
      %v4102 = vadd.f32 0.0, %v4101
      %v4103 = vpop.f32.mrb[0].mxu0
      %4104 = vmatprep.mubr.f32.mxu0 0.0
      %4105 = vmatmul.mubr.f32.gmra.mrb[0].mxu0 %v3915
      %v4106 = vpop.f32.mrb[0].mxu0
      %v4107 = vadd.f32 0.0, %v4106
      %v4108 = vpop.f32.mrb[0].mxu0
      %4109 = vmatprep.mubr.f32.mxu0 0.0
      %4110 = vmatmul.mubr.f32.gmra.mrb[0].mxu0 %v3918
      %v4111 = vpop.f32.mrb[0].mxu0
      %v4112 = vadd.f32 0.0, %v4111
      %v4113 = vpop.f32.mrb[0].mxu0
      %4114 = vmatprep.mubr.f32.mxu0 0.0
      %4115 = vmatmul.mubr.f32.gmra.mrb[0].mxu0 %v3921
      %v4116 = vpop.f32.mrb[0].mxu0
      %v4117 = vadd.f32 0.0, %v4116
      %v4118 = vpop.f32.mrb[0].mxu0
      %4119 = vmatprep.mubr.f32.mxu0 0.0
      %4120 = vmatmul.mubr.f32.gmra.mrb[0].mxu0 %v3924
      %v4121 = vpop.f32.mrb[0].mxu0
      %v4122 = vadd.f32 0.0, %v4121
      %v4123 = vpop.f32.mrb[0].mxu0
      %4124 = vmatprep.mubr.f32.mxu0 0.0
      %4125 = vmatmul.mubr.f32.gmra.mrb[0].mxu0 %v3927
      %v4126 = vpop.f32.mrb[0].mxu0
      %v4127 = vadd.f32 0.0, %v4126
      %v4128 = vpop.f32.mrb[0].mxu0
      %4129 = vmatprep.mubr.f32.mxu0 0.0
      %4130 = vmatmul.mubr.f32.gmra.mrb[0].mxu0 %v3930
      %v4131 = vpop.f32.mrb[0].mxu0
      %v4132 = vadd.f32 0.0, %v4131
      %v4133 = vpop.f32.mrb[0].mxu0
      %4134 = vmatprep.mubr.f32.mxu0 0.0
      %4135 = vmatmul.mubr.f32.gmra.mrb[0].mxu0 %v3933
      %v4136 = vpop.f32.mrb[0].mxu0
      %v4137 = vadd.f32 0.0, %v4136
      %v4138 = vpop.f32.mrb[0].mxu0
      %4139 = vmatprep.mubr.f32.mxu0 0.0
      %4140 = vmatmul.mubr.f32.gmra.mrb[0].mxu0 %v3936
      %v4141 = vpop.f32.mrb[0].mxu0
      %v4142 = vadd.f32 0.0, %v4141
      %v4143 = vpop.f32.mrb[0].mxu0
      %4144 = vmatprep.mubr.f32.mxu0 0.0
      %4145 = vmatmul.mubr.f32.gmra.mrb[0].mxu0 %v3939
      %v4146 = vpop.f32.mrb[0].mxu0
      %v4147 = vadd.f32 0.0, %v4146
      %v4148 = vpop.f32.mrb[0].mxu0
      %4149 = vmatprep.mubr.f32.mxu0 0.0
      %4150 = vmatmul.mubr.f32.gmra.mrb[0].mxu0 %v3942
      %v4151 = vpop.f32.mrb[0].mxu0
      %v4152 = vadd.f32 0.0, %v4151
      %v4153 = vpop.f32.mrb[0].mxu0
      %4154 = vmatprep.mubr.f32.mxu0 0.0
      %4155 = vmatmul.mubr.f32.gmra.mrb[0].mxu0 %v3945
      %v4156 = vpop.f32.mrb[0].mxu0
      %v4157 = vadd.f32 0.0, %v4156
      %v4158 = vpop.f32.mrb[0].mxu0
      %4159 = vmatprep.mubr.f32.mxu0 0.0
      %4160 = vmatmul.mubr.f32.gmra.mrb[0].mxu0 %v3948
      %v4161 = vpop.f32.mrb[0].mxu0
      %v4162 = vadd.f32 0.0, %v4161
      %v4163 = vpop.f32.mrb[0].mxu0
      %4164 = vmatprep.mubr.f32.mxu0 0.0
      %4165 = vmatmul.mubr.f32.gmra.mrb[0].mxu0 %v3951
      %v4166 = vpop.f32.mrb[0].mxu0
      %v4167 = vadd.f32 0.0, %v4166
      %v4168 = vpop.f32.mrb[0].mxu0
      %4169 = vmatprep.mubr.f32.mxu0 0.0
      %4170 = vmatmul.mubr.f32.gmra.mrb[0].mxu0 %v3954
      %v4171 = vpop.f32.mrb[0].mxu0
      %v4172 = vadd.f32 0.0, %v4171
      %v4173 = vpop.f32.mrb[0].mxu0
      %4174 = vmatprep.mubr.f32.mxu0 0.0
      %4175 = vmatmul.mubr.f32.gmra.mrb[0].mxu0 %v3957
      %v4176 = vpop.f32.mrb[0].mxu0
      %v4177 = vadd.f32 0.0, %v4176
      %v4178 = vpop.f32.mrb[0].mxu0
      %4179 = vmatprep.mubr.f32.mxu0 0.0
      %4180 = vmatmul.mubr.f32.gmra.mrb[0].mxu0 %v3960
      %v4181 = vpop.f32.mrb[0].mxu0
      %v4182 = vadd.f32 0.0, %v4181
      %v4183 = vpop.f32.mrb[0].mxu0
      %4184 = vmatprep.mubr.f32.mxu0 0.0
      %4185 = vmatmul.mubr.f32.gmra.mrb[0].mxu0 %v3963
      %v4186 = vpop.f32.mrb[0].mxu0
      %v4187 = vadd.f32 0.0, %v4186
      %v4188 = vpop.f32.mrb[0].mxu0
      %4189 = vdwg.mxu0
      %v4190 = vadd.f32 %v3811, %v4032
      %v4191 = vadd.f32 %v3812, %v4037
      %v4192 = vadd.f32 %v3813, %v4042
      %v4193 = vadd.f32 %v3814, %v4052
      %v4194 = vadd.f32 %v3815, %v4057
      %v4195 = vadd.f32 %v3816, %v4062
      %v4196 = vadd.f32 %v3817, %v4072
      %v4197 = vadd.f32 %v3818, %v4077
      %v4198 = vadd.f32 %v3819, %v4082
      %v4199 = vadd.f32 %v3820, %v4092
      %v4200 = vadd.f32 %v3821, %v4097
      %v4201 = vadd.f32 %v3822, %v4102
      %v4202 = vadd.f32 %v3823, %v4112
      %v4203 = vadd.f32 %v3824, %v4117
      %v4204 = vadd.f32 %v3825, %v4122
      %v4205 = vadd.f32 %v3826, %v4132
      %v4206 = vadd.f32 %v3827, %v4137
      %v4207 = vadd.f32 %v3828, %v4142
      %v4208 = vadd.f32 %v3829, %v4152
      %v4209 = vadd.f32 %v3830, %v4157
      %v4210 = vadd.f32 %v3831, %v4162
      %v4211 = vadd.f32 %v3832, %v4172
      %v4212 = vadd.f32 %v3833, %v4177
      %v4213 = vadd.f32 %v3834, %v4182
      %v4230 = vrot.slane %v4037, 1
      %v4231 = vrot.slane %v4042, 1
      %v4232 = vsel %vm3570, %v4230, %v4231
      %v4233 = vrot.slane %v4057, 1
      %v4234 = vrot.slane %v4062, 1
      %v4235 = vsel %vm3570, %v4233, %v4234
      %v4236 = vrot.slane %v4077, 1
      %v4237 = vrot.slane %v4082, 1
      %v4238 = vsel %vm3570, %v4236, %v4237
      %v4239 = vrot.slane %v4097, 1
      %v4240 = vrot.slane %v4102, 1
      %v4241 = vsel %vm3570, %v4239, %v4240
      %v4242 = vrot.slane %v4117, 1
      %v4243 = vrot.slane %v4122, 1
      %v4244 = vsel %vm3570, %v4242, %v4243
      %v4245 = vrot.slane %v4137, 1
      %v4246 = vrot.slane %v4142, 1
      %v4247 = vsel %vm3570, %v4245, %v4246
      %v4248 = vrot.slane %v4157, 1
      %v4249 = vrot.slane %v4162, 1
      %v4250 = vsel %vm3570, %v4248, %v4249
      %v4251 = vrot.slane %v4177, 1
      %v4252 = vrot.slane %v4182, 1
      %v4253 = vsel %vm3570, %v4251, %v4252
      %4254 = vrot.lane.b32.xlu0 %v4230, 120
      %v4255 = vpop.permute.xlu0 %4254
      %4256 = vrot.lane.b32.xlu0 %v4232, 120
      %v4257 = vpop.permute.xlu0 %4256
      %4258 = vrot.lane.b32.xlu0 %v4231, 120
      %v4259 = vpop.permute.xlu0 %4258
      %4260 = vrot.lane.b32.xlu0 %v4233, 120
      %v4261 = vpop.permute.xlu0 %4260
      %4262 = vrot.lane.b32.xlu0 %v4235, 120
      %v4263 = vpop.permute.xlu0 %4262
      %4264 = vrot.lane.b32.xlu0 %v4234, 120
      %v4265 = vpop.permute.xlu0 %4264
      %4266 = vrot.lane.b32.xlu0 %v4236, 120
      %v4267 = vpop.permute.xlu0 %4266
      %4268 = vrot.lane.b32.xlu0 %v4238, 120
      %v4269 = vpop.permute.xlu0 %4268
      %4270 = vrot.lane.b32.xlu0 %v4237, 120
      %v4271 = vpop.permute.xlu0 %4270
      %4272 = vrot.lane.b32.xlu0 %v4239, 120
      %v4273 = vpop.permute.xlu0 %4272
      %4274 = vrot.lane.b32.xlu0 %v4241, 120
      %v4275 = vpop.permute.xlu0 %4274
      %4276 = vrot.lane.b32.xlu0 %v4240, 120
      %v4277 = vpop.permute.xlu0 %4276
      %4278 = vrot.lane.b32.xlu0 %v4242, 120
      %v4279 = vpop.permute.xlu0 %4278
      %4280 = vrot.lane.b32.xlu0 %v4244, 120
      %v4281 = vpop.permute.xlu0 %4280
      %4282 = vrot.lane.b32.xlu0 %v4243, 120
      %v4283 = vpop.permute.xlu0 %4282
      %4284 = vrot.lane.b32.xlu0 %v4245, 120
      %v4285 = vpop.permute.xlu0 %4284
      %4286 = vrot.lane.b32.xlu0 %v4247, 120
      %v4287 = vpop.permute.xlu0 %4286
      %4288 = vrot.lane.b32.xlu0 %v4246, 120
      %v4289 = vpop.permute.xlu0 %4288
      %4290 = vrot.lane.b32.xlu0 %v4248, 120
      %v4291 = vpop.permute.xlu0 %4290
      %4292 = vrot.lane.b32.xlu0 %v4250, 120
      %v4293 = vpop.permute.xlu0 %4292
      %4294 = vrot.lane.b32.xlu0 %v4249, 120
      %v4295 = vpop.permute.xlu0 %4294
      %4296 = vrot.lane.b32.xlu0 %v4251, 120
      %v4297 = vpop.permute.xlu0 %4296
      %4298 = vrot.lane.b32.xlu0 %v4253, 120
      %v4299 = vpop.permute.xlu0 %4298
      %4300 = vrot.lane.b32.xlu0 %v4252, 120
      %v4301 = vpop.permute.xlu0 %4300
      %v4326 = vadd.f32 %v4190, %v4255
      %v4327 = vadd.f32 %v4191, %v4257
      %v4328 = vadd.f32 %v4192, %v4259
      %v4329 = vadd.f32 %v4193, %v4261
      %v4330 = vadd.f32 %v4194, %v4263
      %v4331 = vadd.f32 %v4195, %v4265
      %v4332 = vadd.f32 %v4196, %v4267
      %v4333 = vadd.f32 %v4197, %v4269
      %v4334 = vadd.f32 %v4198, %v4271
      %v4335 = vadd.f32 %v4199, %v4273
      %v4336 = vadd.f32 %v4200, %v4275
      %v4337 = vadd.f32 %v4201, %v4277
      %v4338 = vadd.f32 %v4202, %v4279
      %v4339 = vadd.f32 %v4203, %v4281
      %v4340 = vadd.f32 %v4204, %v4283
      %v4341 = vadd.f32 %v4205, %v4285
      %v4342 = vadd.f32 %v4206, %v4287
      %v4343 = vadd.f32 %v4207, %v4289
      %v4344 = vadd.f32 %v4208, %v4291
      %v4345 = vadd.f32 %v4209, %v4293
      %v4346 = vadd.f32 %v4210, %v4295
      %v4347 = vadd.f32 %v4211, %v4297
      %v4348 = vadd.f32 %v4212, %v4299
      %v4349 = vadd.f32 %v4213, %v4301
      %v4358 = vrot.slane %v4037, 2
      %v4359 = vrot.slane %v4042, 2
      %v4360 = vsel %vm2539, %v4358, %v4359
      %v4361 = vrot.slane %v4047, 2
      %v4362 = vsel %vm2539, %v4359, %v4361
      %v4363 = vrot.slane %v4057, 2
      %v4364 = vrot.slane %v4062, 2
      %v4365 = vsel %vm2539, %v4363, %v4364
      %v4366 = vrot.slane %v4067, 2
      %v4367 = vsel %vm2539, %v4364, %v4366
      %v4368 = vrot.slane %v4077, 2
      %v4369 = vrot.slane %v4082, 2
      %v4370 = vsel %vm2539, %v4368, %v4369
      %v4371 = vrot.slane %v4087, 2
      %v4372 = vsel %vm2539, %v4369, %v4371
      %v4373 = vrot.slane %v4097, 2
      %v4374 = vrot.slane %v4102, 2
      %v4375 = vsel %vm2539, %v4373, %v4374
      %v4376 = vrot.slane %v4107, 2
      %v4377 = vsel %vm2539, %v4374, %v4376
      %v4378 = vrot.slane %v4117, 2
      %v4379 = vrot.slane %v4122, 2
      %v4380 = vsel %vm2539, %v4378, %v4379
      %v4381 = vrot.slane %v4127, 2
      %v4382 = vsel %vm2539, %v4379, %v4381
      %v4383 = vrot.slane %v4137, 2
      %v4384 = vrot.slane %v4142, 2
      %v4385 = vsel %vm2539, %v4383, %v4384
      %v4386 = vrot.slane %v4147, 2
      %v4387 = vsel %vm2539, %v4384, %v4386
      %v4388 = vrot.slane %v4157, 2
      %v4389 = vrot.slane %v4162, 2
      %v4390 = vsel %vm2539, %v4388, %v4389
      %v4391 = vrot.slane %v4167, 2
      %v4392 = vsel %vm2539, %v4389, %v4391
      %v4393 = vrot.slane %v4177, 2
      %v4394 = vrot.slane %v4182, 2
      %v4395 = vsel %vm2539, %v4393, %v4394
      %v4396 = vrot.slane %v4187, 2
      %v4397 = vsel %vm2539, %v4394, %v4396
      %4398 = vrot.lane.b32.xlu0 %v4358, 112
      %v4399 = vpop.permute.xlu0 %4398
      %4400 = vrot.lane.b32.xlu0 %v4360, 112
      %v4401 = vpop.permute.xlu0 %4400
      %4402 = vrot.lane.b32.xlu0 %v4362, 112
      %v4403 = vpop.permute.xlu0 %4402
      %4404 = vrot.lane.b32.xlu0 %v4363, 112
      %v4405 = vpop.permute.xlu0 %4404
      %4406 = vrot.lane.b32.xlu0 %v4365, 112
      %v4407 = vpop.permute.xlu0 %4406
      %4408 = vrot.lane.b32.xlu0 %v4367, 112
      %v4409 = vpop.permute.xlu0 %4408
      %4410 = vrot.lane.b32.xlu0 %v4368, 112
      %v4411 = vpop.permute.xlu0 %4410
      %4412 = vrot.lane.b32.xlu0 %v4370, 112
      %v4413 = vpop.permute.xlu0 %4412
      %4414 = vrot.lane.b32.xlu0 %v4372, 112
      %v4415 = vpop.permute.xlu0 %4414
      %4416 = vrot.lane.b32.xlu0 %v4373, 112
      %v4417 = vpop.permute.xlu0 %4416
      %4418 = vrot.lane.b32.xlu0 %v4375, 112
      %v4419 = vpop.permute.xlu0 %4418
      %4420 = vrot.lane.b32.xlu0 %v4377, 112
      %v4421 = vpop.permute.xlu0 %4420
      %4422 = vrot.lane.b32.xlu0 %v4378, 112
      %v4423 = vpop.permute.xlu0 %4422
      %4424 = vrot.lane.b32.xlu0 %v4380, 112
      %v4425 = vpop.permute.xlu0 %4424
      %4426 = vrot.lane.b32.xlu0 %v4382, 112
      %v4427 = vpop.permute.xlu0 %4426
      %4428 = vrot.lane.b32.xlu0 %v4383, 112
      %v4429 = vpop.permute.xlu0 %4428
      %4430 = vrot.lane.b32.xlu0 %v4385, 112
      %v4431 = vpop.permute.xlu0 %4430
      %4432 = vrot.lane.b32.xlu0 %v4387, 112
      %v4433 = vpop.permute.xlu0 %4432
      %4434 = vrot.lane.b32.xlu0 %v4388, 112
      %v4435 = vpop.permute.xlu0 %4434
      %4436 = vrot.lane.b32.xlu0 %v4390, 112
      %v4437 = vpop.permute.xlu0 %4436
      %4438 = vrot.lane.b32.xlu0 %v4392, 112
      %v4439 = vpop.permute.xlu0 %4438
      %4440 = vrot.lane.b32.xlu0 %v4393, 112
      %v4441 = vpop.permute.xlu0 %4440
      %4442 = vrot.lane.b32.xlu0 %v4395, 112
      %v4443 = vpop.permute.xlu0 %4442
      %4444 = vrot.lane.b32.xlu0 %v4397, 112
      %v4445 = vpop.permute.xlu0 %4444
      %v4470 = vadd.f32 %v4326, %v4399
      %v4471 = vadd.f32 %v4327, %v4401
      %v4472 = vadd.f32 %v4328, %v4403
      %v4473 = vadd.f32 %v4329, %v4405
      %v4474 = vadd.f32 %v4330, %v4407
      %v4475 = vadd.f32 %v4331, %v4409
      %v4476 = vadd.f32 %v4332, %v4411
      %v4477 = vadd.f32 %v4333, %v4413
      %v4478 = vadd.f32 %v4334, %v4415
      %v4479 = vadd.f32 %v4335, %v4417
      %v4480 = vadd.f32 %v4336, %v4419
      %v4481 = vadd.f32 %v4337, %v4421
      %v4482 = vadd.f32 %v4338, %v4423
      %v4483 = vadd.f32 %v4339, %v4425
      %v4484 = vadd.f32 %v4340, %v4427
      %v4485 = vadd.f32 %v4341, %v4429
      %v4486 = vadd.f32 %v4342, %v4431
      %v4487 = vadd.f32 %v4343, %v4433
      %v4488 = vadd.f32 %v4344, %v4435
      %v4489 = vadd.f32 %v4345, %v4437
      %v4490 = vadd.f32 %v4346, %v4439
      %v4491 = vadd.f32 %v4347, %v4441
      %v4492 = vadd.f32 %v4348, %v4443
      %v4493 = vadd.f32 %v4349, %v4445
      %s4494 = scalar_lea.vmem [#allocation2], 64
      %v4495 = vld [vmem:[%s4494] sm:$0xff]
      %v4496 = vld [vmem:[%s4494 + $0x8] sm:$0xff]
      %v4497 = vld [vmem:[%s4494 + $0x10] sm:$0xff]
      %v4498 = vld [vmem:[%s4494 + $0x18] sm:$0xff]
      %v4499 = vld [vmem:[%s4494 + $0x20] sm:$0xff]
      %v4500 = vld [vmem:[%s4494 + $0x28] sm:$0xff]
      %v4501 = vld [vmem:[%s4494 + $0x30] sm:$0xff]
      %v4502 = vld [vmem:[%s4494 + $0x38] sm:$0xff]
      %v4503 = vld [vmem:[%s4494 + $0x40] sm:$0xff]
      %v4504 = vld [vmem:[%s4494 + $0x48] sm:$0xff]
      %v4505 = vld [vmem:[%s4494 + $0x50] sm:$0xff]
      %v4506 = vld [vmem:[%s4494 + $0x58] sm:$0xff]
      %v4507 = vld [vmem:[%s4494 + $0x60] sm:$0xff]
      %v4508 = vld [vmem:[%s4494 + $0x68] sm:$0xff]
      %v4509 = vld [vmem:[%s4494 + $0x70] sm:$0xff]
      %v4510 = vld [vmem:[%s4494 + $0x78] sm:$0xff]
      %v4511 = vld [vmem:[%s4494 + $0x80] sm:$0xff]
      %v4512 = vld [vmem:[%s4494 + $0x88] sm:$0xff]
      %v4513 = vld [vmem:[%s4494 + $0x90] sm:$0xff]
      %v4514 = vld [vmem:[%s4494 + $0x98] sm:$0xff]
      %v4515 = vld [vmem:[%s4494 + $0xa0] sm:$0xff]
      %v4516 = vld [vmem:[%s4494 + $0xa8] sm:$0xff]
      %v4517 = vld [vmem:[%s4494 + $0xb0] sm:$0xff]
      %v4518 = vld [vmem:[%s4494 + $0xb8] sm:$0xff]
      %v4519 = vld [vmem:[%s4494 + $0xc0] sm:$0xff]
      %v4520 = vld [vmem:[%s4494 + $0xc8] sm:$0xff]
      %v4521 = vld [vmem:[%s4494 + $0xd0] sm:$0xff]
      %v4522 = vld [vmem:[%s4494 + $0xd8] sm:$0xff]
      %v4523 = vld [vmem:[%s4494 + $0xe0] sm:$0xff]
      %v4524 = vld [vmem:[%s4494 + $0xe8] sm:$0xff]
      %v4525 = vld [vmem:[%s4494 + $0xf0] sm:$0xff]
      %v4526 = vld [vmem:[%s4494 + $0xf8] sm:$0xff]
      %s4527 = scalar_lea.vmem %s10, 16
      %v4528 = vld [vmem:[%s4527] sm:$0xff]
      %v4530 = vsel %vm1479, %v4495, 0
      %v4533 = vsel %vm1479, %v4496, 0
      %v4536 = vsel %vm1479, %v4497, 0
      %v4539 = vsel %vm1479, %v4498, 0
      %v4542 = vsel %vm1479, %v4499, 0
      %v4545 = vsel %vm1479, %v4500, 0
      %v4548 = vsel %vm1479, %v4501, 0
      %v4551 = vsel %vm1479, %v4502, 0
      %v4554 = vsel %vm1479, %v4503, 0
      %v4557 = vsel %vm1479, %v4504, 0
      %v4560 = vsel %vm1479, %v4505, 0
      %v4563 = vsel %vm1479, %v4506, 0
      %v4566 = vsel %vm1479, %v4507, 0
      %v4569 = vsel %vm1479, %v4508, 0
      %v4572 = vsel %vm1479, %v4509, 0
      %v4575 = vsel %vm1479, %v4510, 0
      %v4578 = vsel %vm1479, %v4511, 0
      %v4581 = vsel %vm1479, %v4512, 0
      %v4584 = vsel %vm1479, %v4513, 0
      %v4587 = vsel %vm1479, %v4514, 0
      %v4590 = vsel %vm1479, %v4515, 0
      %v4593 = vsel %vm1479, %v4516, 0
      %v4596 = vsel %vm1479, %v4517, 0
      %v4599 = vsel %vm1479, %v4518, 0
      %v4602 = vsel %vm1479, %v4519, 0
      %v4605 = vsel %vm1479, %v4520, 0
      %v4608 = vsel %vm1479, %v4521, 0
      %v4611 = vsel %vm1479, %v4522, 0
      %v4614 = vsel %vm1479, %v4523, 0
      %v4617 = vsel %vm1479, %v4524, 0
      %v4620 = vsel %vm1479, %v4525, 0
      %v4623 = vsel %vm1479, %v4526, 0
      %4625 = vmatprep.subr.mxu0 0.0
      %4626 = vmatpush1.msra.mxu0 %v4528
      %4627 = vmatprep.subr.mxu0 0.0
      %4628 = vmatpush1.msra.mxu0 0.0
      %4629 = vmatprep.subr.mxu0 0.0
      %4630 = vmatpush1.msra.mxu0 0.0
      %4631 = vmatprep.subr.mxu0 0.0
      %4632 = vmatpush1.msra.mxu0 0.0
      %4633 = vmatprep.subr.mxu0 0.0
      %4634 = vmatpush1.msra.mxu0 0.0
      %4635 = vmatprep.subr.mxu0 0.0
      %4636 = vmatpush1.msra.mxu0 0.0
      %4637 = vmatprep.subr.mxu0 0.0
      %4638 = vmatpush1.msra.mxu0 0.0
      %4639 = vmatprep.subr.mxu0 0.0
      %4640 = vmatpush1.msra.mxu0 0.0
      %4641 = vmatprep.subr.mxu0 0.0
      %4642 = vmatpush1.msra.mxu0 0.0
      %4643 = vmatprep.subr.mxu0 0.0
      %4644 = vmatpush1.msra.mxu0 0.0
      %4645 = vmatprep.subr.mxu0 0.0
      %4646 = vmatpush1.msra.mxu0 0.0
      %4647 = vmatprep.subr.mxu0 0.0
      %4648 = vmatpush1.msra.mxu0 0.0
      %4649 = vmatprep.subr.mxu0 0.0
      %4650 = vmatpush1.msra.mxu0 0.0
      %4651 = vmatprep.subr.mxu0 0.0
      %4652 = vmatpush1.msra.mxu0 0.0
      %4653 = vmatprep.subr.mxu0 0.0
      %4654 = vmatpush1.msra.mxu0 0.0
      %4655 = vmatprep.subr.mxu0 0.0
      %4656 = vmatpush1.msra.mxu0 0.0
      %4657 = vmatprep.subr.mxu0 0.0
      %4658 = vmatpush1.msra.mxu0 0.0
      %4659 = vmatprep.subr.mxu0 0.0
      %4660 = vmatpush1.msra.mxu0 0.0
      %4661 = vmatprep.subr.mxu0 0.0
      %4662 = vmatpush1.msra.mxu0 0.0
      %4663 = vmatprep.subr.mxu0 0.0
      %4664 = vmatpush1.msra.mxu0 0.0
      %4665 = vmatprep.subr.mxu0 0.0
      %4666 = vmatpush1.msra.mxu0 0.0
      %4667 = vmatprep.subr.mxu0 0.0
      %4668 = vmatpush1.msra.mxu0 0.0
      %4669 = vmatprep.subr.mxu0 0.0
      %4670 = vmatpush1.msra.mxu0 0.0
      %4671 = vmatprep.subr.mxu0 0.0
      %4672 = vmatpush1.msra.mxu0 0.0
      %4673 = vmatprep.subr.mxu0 0.0
      %4674 = vmatpush1.msra.mxu0 0.0
      %4675 = vmatprep.subr.mxu0 0.0
      %4676 = vmatpush1.msra.mxu0 0.0
      %4677 = vmatprep.subr.mxu0 0.0
      %4678 = vmatpush1.msra.mxu0 0.0
      %4679 = vmatprep.subr.mxu0 0.0
      %4680 = vmatpush1.msra.mxu0 0.0
      %4681 = vmatprep.subr.mxu0 0.0
      %4682 = vmatpush1.msra.mxu0 0.0
      %4683 = vmatprep.subr.mxu0 0.0
      %4684 = vmatpush1.msra.mxu0 0.0
      %4685 = vmatprep.subr.mxu0 0.0
      %4686 = vmatpush1.msra.mxu0 0.0
      %4687 = vmatprep.subr.mxu0 0.0
      %4688 = vmatpush1.msra.mxu0 0.0
      %4689 = vmatprep.mubr.f32.mxu0 0.0
      %4690 = vmatmul.mubr.f32.gmra.mrb[0].mxu0 %v4530
      %v4691 = vpop.f32.mrb[0].mxu0
      %v4692 = vadd.f32 0.0, %v4691
      %v4693 = vpop.f32.mrb[0].mxu0
      %4694 = vmatprep.mubr.f32.mxu0 0.0
      %4695 = vmatmul.mubr.f32.gmra.mrb[0].mxu0 %v4533
      %v4696 = vpop.f32.mrb[0].mxu0
      %v4697 = vadd.f32 0.0, %v4696
      %v4698 = vpop.f32.mrb[0].mxu0
      %4699 = vmatprep.mubr.f32.mxu0 0.0
      %4700 = vmatmul.mubr.f32.gmra.mrb[0].mxu0 %v4536
      %v4701 = vpop.f32.mrb[0].mxu0
      %v4702 = vadd.f32 0.0, %v4701
      %v4703 = vpop.f32.mrb[0].mxu0
      %4704 = vmatprep.mubr.f32.mxu0 0.0
      %4705 = vmatmul.mubr.f32.gmra.mrb[0].mxu0 %v4539
      %v4706 = vpop.f32.mrb[0].mxu0
      %v4707 = vadd.f32 0.0, %v4706
      %v4708 = vpop.f32.mrb[0].mxu0
      %4709 = vmatprep.mubr.f32.mxu0 0.0
      %4710 = vmatmul.mubr.f32.gmra.mrb[0].mxu0 %v4542
      %v4711 = vpop.f32.mrb[0].mxu0
      %v4712 = vadd.f32 0.0, %v4711
      %v4713 = vpop.f32.mrb[0].mxu0
      %4714 = vmatprep.mubr.f32.mxu0 0.0
      %4715 = vmatmul.mubr.f32.gmra.mrb[0].mxu0 %v4545
      %v4716 = vpop.f32.mrb[0].mxu0
      %v4717 = vadd.f32 0.0, %v4716
      %v4718 = vpop.f32.mrb[0].mxu0
      %4719 = vmatprep.mubr.f32.mxu0 0.0
      %4720 = vmatmul.mubr.f32.gmra.mrb[0].mxu0 %v4548
      %v4721 = vpop.f32.mrb[0].mxu0
      %v4722 = vadd.f32 0.0, %v4721
      %v4723 = vpop.f32.mrb[0].mxu0
      %4724 = vmatprep.mubr.f32.mxu0 0.0
      %4725 = vmatmul.mubr.f32.gmra.mrb[0].mxu0 %v4551
      %v4726 = vpop.f32.mrb[0].mxu0
      %v4727 = vadd.f32 0.0, %v4726
      %v4728 = vpop.f32.mrb[0].mxu0
      %4729 = vmatprep.mubr.f32.mxu0 0.0
      %4730 = vmatmul.mubr.f32.gmra.mrb[0].mxu0 %v4554
      %v4731 = vpop.f32.mrb[0].mxu0
      %v4732 = vadd.f32 0.0, %v4731
      %v4733 = vpop.f32.mrb[0].mxu0
      %4734 = vmatprep.mubr.f32.mxu0 0.0
      %4735 = vmatmul.mubr.f32.gmra.mrb[0].mxu0 %v4557
      %v4736 = vpop.f32.mrb[0].mxu0
      %v4737 = vadd.f32 0.0, %v4736
      %v4738 = vpop.f32.mrb[0].mxu0
      %4739 = vmatprep.mubr.f32.mxu0 0.0
      %4740 = vmatmul.mubr.f32.gmra.mrb[0].mxu0 %v4560
      %v4741 = vpop.f32.mrb[0].mxu0
      %v4742 = vadd.f32 0.0, %v4741
      %v4743 = vpop.f32.mrb[0].mxu0
      %4744 = vmatprep.mubr.f32.mxu0 0.0
      %4745 = vmatmul.mubr.f32.gmra.mrb[0].mxu0 %v4563
      %v4746 = vpop.f32.mrb[0].mxu0
      %v4747 = vadd.f32 0.0, %v4746
      %v4748 = vpop.f32.mrb[0].mxu0
      %4749 = vmatprep.mubr.f32.mxu0 0.0
      %4750 = vmatmul.mubr.f32.gmra.mrb[0].mxu0 %v4566
      %v4751 = vpop.f32.mrb[0].mxu0
      %v4752 = vadd.f32 0.0, %v4751
      %v4753 = vpop.f32.mrb[0].mxu0
      %4754 = vmatprep.mubr.f32.mxu0 0.0
      %4755 = vmatmul.mubr.f32.gmra.mrb[0].mxu0 %v4569
      %v4756 = vpop.f32.mrb[0].mxu0
      %v4757 = vadd.f32 0.0, %v4756
      %v4758 = vpop.f32.mrb[0].mxu0
      %4759 = vmatprep.mubr.f32.mxu0 0.0
      %4760 = vmatmul.mubr.f32.gmra.mrb[0].mxu0 %v4572
      %v4761 = vpop.f32.mrb[0].mxu0
      %v4762 = vadd.f32 0.0, %v4761
      %v4763 = vpop.f32.mrb[0].mxu0
      %4764 = vmatprep.mubr.f32.mxu0 0.0
      %4765 = vmatmul.mubr.f32.gmra.mrb[0].mxu0 %v4575
      %v4766 = vpop.f32.mrb[0].mxu0
      %v4767 = vadd.f32 0.0, %v4766
      %v4768 = vpop.f32.mrb[0].mxu0
      %4769 = vmatprep.mubr.f32.mxu0 0.0
      %4770 = vmatmul.mubr.f32.gmra.mrb[0].mxu0 %v4578
      %v4771 = vpop.f32.mrb[0].mxu0
      %v4772 = vadd.f32 0.0, %v4771
      %v4773 = vpop.f32.mrb[0].mxu0
      %4774 = vmatprep.mubr.f32.mxu0 0.0
      %4775 = vmatmul.mubr.f32.gmra.mrb[0].mxu0 %v4581
      %v4776 = vpop.f32.mrb[0].mxu0
      %v4777 = vadd.f32 0.0, %v4776
      %v4778 = vpop.f32.mrb[0].mxu0
      %4779 = vmatprep.mubr.f32.mxu0 0.0
      %4780 = vmatmul.mubr.f32.gmra.mrb[0].mxu0 %v4584
      %v4781 = vpop.f32.mrb[0].mxu0
      %v4782 = vadd.f32 0.0, %v4781
      %v4783 = vpop.f32.mrb[0].mxu0
      %4784 = vmatprep.mubr.f32.mxu0 0.0
      %4785 = vmatmul.mubr.f32.gmra.mrb[0].mxu0 %v4587
      %v4786 = vpop.f32.mrb[0].mxu0
      %v4787 = vadd.f32 0.0, %v4786
      %v4788 = vpop.f32.mrb[0].mxu0
      %4789 = vmatprep.mubr.f32.mxu0 0.0
      %4790 = vmatmul.mubr.f32.gmra.mrb[0].mxu0 %v4590
      %v4791 = vpop.f32.mrb[0].mxu0
      %v4792 = vadd.f32 0.0, %v4791
      %v4793 = vpop.f32.mrb[0].mxu0
      %4794 = vmatprep.mubr.f32.mxu0 0.0
      %4795 = vmatmul.mubr.f32.gmra.mrb[0].mxu0 %v4593
      %v4796 = vpop.f32.mrb[0].mxu0
      %v4797 = vadd.f32 0.0, %v4796
      %v4798 = vpop.f32.mrb[0].mxu0
      %4799 = vmatprep.mubr.f32.mxu0 0.0
      %4800 = vmatmul.mubr.f32.gmra.mrb[0].mxu0 %v4596
      %v4801 = vpop.f32.mrb[0].mxu0
      %v4802 = vadd.f32 0.0, %v4801
      %v4803 = vpop.f32.mrb[0].mxu0
      %4804 = vmatprep.mubr.f32.mxu0 0.0
      %4805 = vmatmul.mubr.f32.gmra.mrb[0].mxu0 %v4599
      %v4806 = vpop.f32.mrb[0].mxu0
      %v4807 = vadd.f32 0.0, %v4806
      %v4808 = vpop.f32.mrb[0].mxu0
      %4809 = vmatprep.mubr.f32.mxu0 0.0
      %4810 = vmatmul.mubr.f32.gmra.mrb[0].mxu0 %v4602
      %v4811 = vpop.f32.mrb[0].mxu0
      %v4812 = vadd.f32 0.0, %v4811
      %v4813 = vpop.f32.mrb[0].mxu0
      %4814 = vmatprep.mubr.f32.mxu0 0.0
      %4815 = vmatmul.mubr.f32.gmra.mrb[0].mxu0 %v4605
      %v4816 = vpop.f32.mrb[0].mxu0
      %v4817 = vadd.f32 0.0, %v4816
      %v4818 = vpop.f32.mrb[0].mxu0
      %4819 = vmatprep.mubr.f32.mxu0 0.0
      %4820 = vmatmul.mubr.f32.gmra.mrb[0].mxu0 %v4608
      %v4821 = vpop.f32.mrb[0].mxu0
      %v4822 = vadd.f32 0.0, %v4821
      %v4823 = vpop.f32.mrb[0].mxu0
      %4824 = vmatprep.mubr.f32.mxu0 0.0
      %4825 = vmatmul.mubr.f32.gmra.mrb[0].mxu0 %v4611
      %v4826 = vpop.f32.mrb[0].mxu0
      %v4827 = vadd.f32 0.0, %v4826
      %v4828 = vpop.f32.mrb[0].mxu0
      %4829 = vmatprep.mubr.f32.mxu0 0.0
      %4830 = vmatmul.mubr.f32.gmra.mrb[0].mxu0 %v4614
      %v4831 = vpop.f32.mrb[0].mxu0
      %v4832 = vadd.f32 0.0, %v4831
      %v4833 = vpop.f32.mrb[0].mxu0
      %4834 = vmatprep.mubr.f32.mxu0 0.0
      %4835 = vmatmul.mubr.f32.gmra.mrb[0].mxu0 %v4617
      %v4836 = vpop.f32.mrb[0].mxu0
      %v4837 = vadd.f32 0.0, %v4836
      %v4838 = vpop.f32.mrb[0].mxu0
      %4839 = vmatprep.mubr.f32.mxu0 0.0
      %4840 = vmatmul.mubr.f32.gmra.mrb[0].mxu0 %v4620
      %v4841 = vpop.f32.mrb[0].mxu0
      %v4842 = vadd.f32 0.0, %v4841
      %v4843 = vpop.f32.mrb[0].mxu0
      %4844 = vmatprep.mubr.f32.mxu0 0.0
      %4845 = vmatmul.mubr.f32.gmra.mrb[0].mxu0 %v4623
      %v4846 = vpop.f32.mrb[0].mxu0
      %v4847 = vadd.f32 0.0, %v4846
      %v4848 = vpop.f32.mrb[0].mxu0
      %4849 = vdwg.mxu0
      %v4850 = vadd.f32 %v4470, %v4692
      %v4851 = vadd.f32 %v4471, %v4697
      %v4852 = vadd.f32 %v4472, %v4702
      %v4853 = vadd.f32 %v4473, %v4712
      %v4854 = vadd.f32 %v4474, %v4717
      %v4855 = vadd.f32 %v4475, %v4722
      %v4856 = vadd.f32 %v4476, %v4732
      %v4857 = vadd.f32 %v4477, %v4737
      %v4858 = vadd.f32 %v4478, %v4742
      %v4859 = vadd.f32 %v4479, %v4752
      %v4860 = vadd.f32 %v4480, %v4757
      %v4861 = vadd.f32 %v4481, %v4762
      %v4862 = vadd.f32 %v4482, %v4772
      %v4863 = vadd.f32 %v4483, %v4777
      %v4864 = vadd.f32 %v4484, %v4782
      %v4865 = vadd.f32 %v4485, %v4792
      %v4866 = vadd.f32 %v4486, %v4797
      %v4867 = vadd.f32 %v4487, %v4802
      %v4868 = vadd.f32 %v4488, %v4812
      %v4869 = vadd.f32 %v4489, %v4817
      %v4870 = vadd.f32 %v4490, %v4822
      %v4871 = vadd.f32 %v4491, %v4832
      %v4872 = vadd.f32 %v4492, %v4837
      %v4873 = vadd.f32 %v4493, %v4842
      %v4890 = vrot.slane %v4697, 1
      %v4891 = vrot.slane %v4702, 1
      %v4892 = vsel %vm3570, %v4890, %v4891
      %v4893 = vrot.slane %v4717, 1
      %v4894 = vrot.slane %v4722, 1
      %v4895 = vsel %vm3570, %v4893, %v4894
      %v4896 = vrot.slane %v4737, 1
      %v4897 = vrot.slane %v4742, 1
      %v4898 = vsel %vm3570, %v4896, %v4897
      %v4899 = vrot.slane %v4757, 1
      %v4900 = vrot.slane %v4762, 1
      %v4901 = vsel %vm3570, %v4899, %v4900
      %v4902 = vrot.slane %v4777, 1
      %v4903 = vrot.slane %v4782, 1
      %v4904 = vsel %vm3570, %v4902, %v4903
      %v4905 = vrot.slane %v4797, 1
      %v4906 = vrot.slane %v4802, 1
      %v4907 = vsel %vm3570, %v4905, %v4906
      %v4908 = vrot.slane %v4817, 1
      %v4909 = vrot.slane %v4822, 1
      %v4910 = vsel %vm3570, %v4908, %v4909
      %v4911 = vrot.slane %v4837, 1
      %v4912 = vrot.slane %v4842, 1
      %v4913 = vsel %vm3570, %v4911, %v4912
      %4914 = vrot.lane.b32.xlu0 %v4890, 120
      %v4915 = vpop.permute.xlu0 %4914
      %4916 = vrot.lane.b32.xlu0 %v4892, 120
      %v4917 = vpop.permute.xlu0 %4916
      %4918 = vrot.lane.b32.xlu0 %v4891, 120
      %v4919 = vpop.permute.xlu0 %4918
      %4920 = vrot.lane.b32.xlu0 %v4893, 120
      %v4921 = vpop.permute.xlu0 %4920
      %4922 = vrot.lane.b32.xlu0 %v4895, 120
      %v4923 = vpop.permute.xlu0 %4922
      %4924 = vrot.lane.b32.xlu0 %v4894, 120
      %v4925 = vpop.permute.xlu0 %4924
      %4926 = vrot.lane.b32.xlu0 %v4896, 120
      %v4927 = vpop.permute.xlu0 %4926
      %4928 = vrot.lane.b32.xlu0 %v4898, 120
      %v4929 = vpop.permute.xlu0 %4928
      %4930 = vrot.lane.b32.xlu0 %v4897, 120
      %v4931 = vpop.permute.xlu0 %4930
      %4932 = vrot.lane.b32.xlu0 %v4899, 120
      %v4933 = vpop.permute.xlu0 %4932
      %4934 = vrot.lane.b32.xlu0 %v4901, 120
      %v4935 = vpop.permute.xlu0 %4934
      %4936 = vrot.lane.b32.xlu0 %v4900, 120
      %v4937 = vpop.permute.xlu0 %4936
      %4938 = vrot.lane.b32.xlu0 %v4902, 120
      %v4939 = vpop.permute.xlu0 %4938
      %4940 = vrot.lane.b32.xlu0 %v4904, 120
      %v4941 = vpop.permute.xlu0 %4940
      %4942 = vrot.lane.b32.xlu0 %v4903, 120
      %v4943 = vpop.permute.xlu0 %4942
      %4944 = vrot.lane.b32.xlu0 %v4905, 120
      %v4945 = vpop.permute.xlu0 %4944
      %4946 = vrot.lane.b32.xlu0 %v4907, 120
      %v4947 = vpop.permute.xlu0 %4946
      %4948 = vrot.lane.b32.xlu0 %v4906, 120
      %v4949 = vpop.permute.xlu0 %4948
      %4950 = vrot.lane.b32.xlu0 %v4908, 120
      %v4951 = vpop.permute.xlu0 %4950
      %4952 = vrot.lane.b32.xlu0 %v4910, 120
      %v4953 = vpop.permute.xlu0 %4952
      %4954 = vrot.lane.b32.xlu0 %v4909, 120
      %v4955 = vpop.permute.xlu0 %4954
      %4956 = vrot.lane.b32.xlu0 %v4911, 120
      %v4957 = vpop.permute.xlu0 %4956
      %4958 = vrot.lane.b32.xlu0 %v4913, 120
      %v4959 = vpop.permute.xlu0 %4958
      %4960 = vrot.lane.b32.xlu0 %v4912, 120
      %v4961 = vpop.permute.xlu0 %4960
      %v4986 = vadd.f32 %v4850, %v4915
      %v4987 = vadd.f32 %v4851, %v4917
      %v4988 = vadd.f32 %v4852, %v4919
      %v4989 = vadd.f32 %v4853, %v4921
      %v4990 = vadd.f32 %v4854, %v4923
      %v4991 = vadd.f32 %v4855, %v4925
      %v4992 = vadd.f32 %v4856, %v4927
      %v4993 = vadd.f32 %v4857, %v4929
      %v4994 = vadd.f32 %v4858, %v4931
      %v4995 = vadd.f32 %v4859, %v4933
      %v4996 = vadd.f32 %v4860, %v4935
      %v4997 = vadd.f32 %v4861, %v4937
      %v4998 = vadd.f32 %v4862, %v4939
      %v4999 = vadd.f32 %v4863, %v4941
      %v5000 = vadd.f32 %v4864, %v4943
      %v5001 = vadd.f32 %v4865, %v4945
      %v5002 = vadd.f32 %v4866, %v4947
      %v5003 = vadd.f32 %v4867, %v4949
      %v5004 = vadd.f32 %v4868, %v4951
      %v5005 = vadd.f32 %v4869, %v4953
      %v5006 = vadd.f32 %v4870, %v4955
      %v5007 = vadd.f32 %v4871, %v4957
      %v5008 = vadd.f32 %v4872, %v4959
      %v5009 = vadd.f32 %v4873, %v4961
      %v5018 = vrot.slane %v4697, 2
      %v5019 = vrot.slane %v4702, 2
      %v5020 = vsel %vm2539, %v5018, %v5019
      %v5021 = vrot.slane %v4707, 2
      %v5022 = vsel %vm2539, %v5019, %v5021
      %v5023 = vrot.slane %v4717, 2
      %v5024 = vrot.slane %v4722, 2
      %v5025 = vsel %vm2539, %v5023, %v5024
      %v5026 = vrot.slane %v4727, 2
      %v5027 = vsel %vm2539, %v5024, %v5026
      %v5028 = vrot.slane %v4737, 2
      %v5029 = vrot.slane %v4742, 2
      %v5030 = vsel %vm2539, %v5028, %v5029
      %v5031 = vrot.slane %v4747, 2
      %v5032 = vsel %vm2539, %v5029, %v5031
      %v5033 = vrot.slane %v4757, 2
      %v5034 = vrot.slane %v4762, 2
      %v5035 = vsel %vm2539, %v5033, %v5034
      %v5036 = vrot.slane %v4767, 2
      %v5037 = vsel %vm2539, %v5034, %v5036
      %v5038 = vrot.slane %v4777, 2
      %v5039 = vrot.slane %v4782, 2
      %v5040 = vsel %vm2539, %v5038, %v5039
      %v5041 = vrot.slane %v4787, 2
      %v5042 = vsel %vm2539, %v5039, %v5041
      %v5043 = vrot.slane %v4797, 2
      %v5044 = vrot.slane %v4802, 2
      %v5045 = vsel %vm2539, %v5043, %v5044
      %v5046 = vrot.slane %v4807, 2
      %v5047 = vsel %vm2539, %v5044, %v5046
      %v5048 = vrot.slane %v4817, 2
      %v5049 = vrot.slane %v4822, 2
      %v5050 = vsel %vm2539, %v5048, %v5049
      %v5051 = vrot.slane %v4827, 2
      %v5052 = vsel %vm2539, %v5049, %v5051
      %v5053 = vrot.slane %v4837, 2
      %v5054 = vrot.slane %v4842, 2
      %v5055 = vsel %vm2539, %v5053, %v5054
      %v5056 = vrot.slane %v4847, 2
      %v5057 = vsel %vm2539, %v5054, %v5056
      %5058 = vrot.lane.b32.xlu0 %v5018, 112
      %v5059 = vpop.permute.xlu0 %5058
      %5060 = vrot.lane.b32.xlu0 %v5020, 112
      %v5061 = vpop.permute.xlu0 %5060
      %5062 = vrot.lane.b32.xlu0 %v5022, 112
      %v5063 = vpop.permute.xlu0 %5062
      %5064 = vrot.lane.b32.xlu0 %v5023, 112
      %v5065 = vpop.permute.xlu0 %5064
      %5066 = vrot.lane.b32.xlu0 %v5025, 112
      %v5067 = vpop.permute.xlu0 %5066
      %5068 = vrot.lane.b32.xlu0 %v5027, 112
      %v5069 = vpop.permute.xlu0 %5068
      %5070 = vrot.lane.b32.xlu0 %v5028, 112
      %v5071 = vpop.permute.xlu0 %5070
      %5072 = vrot.lane.b32.xlu0 %v5030, 112
      %v5073 = vpop.permute.xlu0 %5072
      %5074 = vrot.lane.b32.xlu0 %v5032, 112
      %v5075 = vpop.permute.xlu0 %5074
      %5076 = vrot.lane.b32.xlu0 %v5033, 112
      %v5077 = vpop.permute.xlu0 %5076
      %5078 = vrot.lane.b32.xlu0 %v5035, 112
      %v5079 = vpop.permute.xlu0 %5078
      %5080 = vrot.lane.b32.xlu0 %v5037, 112
      %v5081 = vpop.permute.xlu0 %5080
      %5082 = vrot.lane.b32.xlu0 %v5038, 112
      %v5083 = vpop.permute.xlu0 %5082
      %5084 = vrot.lane.b32.xlu0 %v5040, 112
      %v5085 = vpop.permute.xlu0 %5084
      %5086 = vrot.lane.b32.xlu0 %v5042, 112
      %v5087 = vpop.permute.xlu0 %5086
      %5088 = vrot.lane.b32.xlu0 %v5043, 112
      %v5089 = vpop.permute.xlu0 %5088
      %5090 = vrot.lane.b32.xlu0 %v5045, 112
      %v5091 = vpop.permute.xlu0 %5090
      %5092 = vrot.lane.b32.xlu0 %v5047, 112
      %v5093 = vpop.permute.xlu0 %5092
      %5094 = vrot.lane.b32.xlu0 %v5048, 112
      %v5095 = vpop.permute.xlu0 %5094
      %5096 = vrot.lane.b32.xlu0 %v5050, 112
      %v5097 = vpop.permute.xlu0 %5096
      %5098 = vrot.lane.b32.xlu0 %v5052, 112
      %v5099 = vpop.permute.xlu0 %5098
      %5100 = vrot.lane.b32.xlu0 %v5053, 112
      %v5101 = vpop.permute.xlu0 %5100
      %5102 = vrot.lane.b32.xlu0 %v5055, 112
      %v5103 = vpop.permute.xlu0 %5102
      %5104 = vrot.lane.b32.xlu0 %v5057, 112
      %v5105 = vpop.permute.xlu0 %5104
      %v5130 = vadd.f32 %v4986, %v5059
      %v5131 = vadd.f32 %v4987, %v5061
      %v5132 = vadd.f32 %v4988, %v5063
      %v5133 = vadd.f32 %v4989, %v5065
      %v5134 = vadd.f32 %v4990, %v5067
      %v5135 = vadd.f32 %v4991, %v5069
      %v5136 = vadd.f32 %v4992, %v5071
      %v5137 = vadd.f32 %v4993, %v5073
      %v5138 = vadd.f32 %v4994, %v5075
      %v5139 = vadd.f32 %v4995, %v5077
      %v5140 = vadd.f32 %v4996, %v5079
      %v5141 = vadd.f32 %v4997, %v5081
      %v5142 = vadd.f32 %v4998, %v5083
      %v5143 = vadd.f32 %v4999, %v5085
      %v5144 = vadd.f32 %v5000, %v5087
      %v5145 = vadd.f32 %v5001, %v5089
      %v5146 = vadd.f32 %v5002, %v5091
      %v5147 = vadd.f32 %v5003, %v5093
      %v5148 = vadd.f32 %v5004, %v5095
      %v5149 = vadd.f32 %v5005, %v5097
      %v5150 = vadd.f32 %v5006, %v5099
      %v5151 = vadd.f32 %v5007, %v5101
      %v5152 = vadd.f32 %v5008, %v5103
      %v5153 = vadd.f32 %v5009, %v5105
      %v5154 = vld [vmem:[%s11] sm:$0x1]
      %v5156 = vlaneseq
      %v5157 = vshrl.u32 %v5156, 7
      %v5158 = vsub.s32 0, %v5157
      %v5159 = vrot.slane %v5154, %v5158
      %v5161 = vadd.f32 %v5130, %v5159
      %v5162 = vadd.f32 %v5131, %v5159
      %v5163 = vadd.f32 %v5132, %v5159
      %v5164 = vadd.f32 %v5133, %v5159
      %v5165 = vadd.f32 %v5134, %v5159
      %v5166 = vadd.f32 %v5135, %v5159
      %v5167 = vadd.f32 %v5136, %v5159
      %v5168 = vadd.f32 %v5137, %v5159
      %v5169 = vadd.f32 %v5138, %v5159
      %v5170 = vadd.f32 %v5139, %v5159
      %v5171 = vadd.f32 %v5140, %v5159
      %v5172 = vadd.f32 %v5141, %v5159
      %v5173 = vadd.f32 %v5142, %v5159
      %v5174 = vadd.f32 %v5143, %v5159
      %v5175 = vadd.f32 %v5144, %v5159
      %v5176 = vadd.f32 %v5145, %v5159
      %v5177 = vadd.f32 %v5146, %v5159
      %v5178 = vadd.f32 %v5147, %v5159
      %v5179 = vadd.f32 %v5148, %v5159
      %v5180 = vadd.f32 %v5149, %v5159
      %v5181 = vadd.f32 %v5150, %v5159
      %v5182 = vadd.f32 %v5151, %v5159
      %v5183 = vadd.f32 %v5152, %v5159
      %v5184 = vadd.f32 %v5153, %v5159
      %vm5185 = vcmask 64519
      %5186 = vst.msk [vmem:[%s807 - $0x7] sm:$0x80] %vm5185, %v5161
      %5187 = vst.msk [vmem:[%s807 + $0x1] sm:$0xff] %vm1479, %v5162
      %vm5188 = vcmask 63488
      %5189 = vst.msk [vmem:[%s807 + $0x9] sm:$0x7f] %vm5188, %v5163
      %5190 = vst.msk [vmem:[%s807 + $0x9] sm:$0x80] %vm5185, %v5164
      %5191 = vst.msk [vmem:[%s807 + $0x11] sm:$0xff] %vm1479, %v5165
      %5192 = vst.msk [vmem:[%s807 + $0x19] sm:$0x7f] %vm5188, %v5166
      %5193 = vst.msk [vmem:[%s807 + $0x19] sm:$0x80] %vm5185, %v5167
      %5194 = vst.msk [vmem:[%s807 + $0x21] sm:$0xff] %vm1479, %v5168
      %5195 = vst.msk [vmem:[%s807 + $0x29] sm:$0x7f] %vm5188, %v5169
      %5196 = vst.msk [vmem:[%s807 + $0x29] sm:$0x80] %vm5185, %v5170
      %5197 = vst.msk [vmem:[%s807 + $0x31] sm:$0xff] %vm1479, %v5171
      %5198 = vst.msk [vmem:[%s807 + $0x39] sm:$0x7f] %vm5188, %v5172
      %5199 = vst.msk [vmem:[%s807 + $0x39] sm:$0x80] %vm5185, %v5173
      %5200 = vst.msk [vmem:[%s807 + $0x41] sm:$0xff] %vm1479, %v5174
      %5201 = vst.msk [vmem:[%s807 + $0x49] sm:$0x7f] %vm5188, %v5175
      %5202 = vst.msk [vmem:[%s807 + $0x49] sm:$0x80] %vm5185, %v5176
      %5203 = vst.msk [vmem:[%s807 + $0x51] sm:$0xff] %vm1479, %v5177
      %5204 = vst.msk [vmem:[%s807 + $0x59] sm:$0x7f] %vm5188, %v5178
      %5205 = vst.msk [vmem:[%s807 + $0x59] sm:$0x80] %vm5185, %v5179
      %5206 = vst.msk [vmem:[%s807 + $0x61] sm:$0xff] %vm1479, %v5180
      %5207 = vst.msk [vmem:[%s807 + $0x69] sm:$0x7f] %vm5188, %v5181
      %5208 = vst.msk [vmem:[%s807 + $0x69] sm:$0x80] %vm5185, %v5182
      %5209 = vst.msk [vmem:[%s807 + $0x71] sm:$0xff] %vm1479, %v5183
      %5210 = vst.msk [vmem:[%s807 + $0x79] sm:$0x7f] %vm5188, %v5184
      %s5211 = smul.u32 8, %s30
      %p5212 = scmp.lt.s32.totalorder %s29, 1
      %s5213 = scalar_select %p5212, %s29, 1
      %p5214 = scmp.lt.s32.totalorder %s5211, 15
      %s5215 = scalar_select %p5214, %s5211, 15
      %s5216 = smul.addr %s5215, 2
      %s5217 = smul.addr %s5213, 32
      %s5218 = sadd.s32 %s5216, %s5217
      %s5219 = smul.addr %s5218, 8
      %s5220 = scalar_lea.vmem %s12, %s5219
      %s5221 = smul.u32 8, %s30
      %p5222 = scmp.lt.s32.totalorder %s29, 1
      %s5223 = scalar_select %p5222, %s29, 1
      %p5224 = scmp.lt.s32.totalorder %s5221, 15
      %s5225 = scalar_select %p5224, %s5221, 15
      %s5226 = smul.addr %s5225, 2
      %s5227 = smul.addr %s5223, 32
      %s5228 = sadd.s32 %s5226, %s5227
      %s5229 = smul.addr %s5228, 8
      %s5230 = scalar_lea.vmem %s13, %s5229
      // Predicated region
      $region77: #{fpn_block_forward_nhwc.1} parent=67 // pred_check
        %p5231 = pneg %p388
      $region78: #{fpn_block_forward_nhwc.1} parent=67 // pred_check_branch
        %5233 = sbr.rel (%p5231) target = $region80
      $region79: #{fpn_block_forward_nhwc.1} parent=67 // pred_region
        %s5234 = smul.u32 8, %s30
      $region80: #{fpn_block_forward_nhwc.1} parent=67 // pred_fallthru
        _
      // Predicated region
      $region81: #{fpn_block_forward_nhwc.1} parent=67 // pred_check
        %p5235 = pneg %p416
      $region82: #{fpn_block_forward_nhwc.1} parent=67 // pred_check_branch
        %5237 = sbr.rel (%p5235) target = $region84
      $region83: #{fpn_block_forward_nhwc.1} parent=67 // pred_region
        %s5238 = smul.u32 8, %s30
      $region84: #{fpn_block_forward_nhwc.1} parent=67 // pred_fallthru
        _
    $region68: #{fpn_block_forward_nhwc.1} parent=5 // pred_fallthru
      _
    %p5239 = scmp.le.s32.totalorder 2, %s20
    // Predicated region
    $region85: #{fpn_block_forward_nhwc.1} parent=5 // pred_check
      %p5240 = pneg %p5239
    $region86: #{fpn_block_forward_nhwc.1} parent=5 // pred_check_branch
      %5242 = sbr.rel (%p5240) target = $region88
    $region87: #{fpn_block_forward_nhwc.1} parent=5 // pred_region
      %s5243 = ssub.s32 %s20, 2
      // Predicated region
      $region89: #{fpn_block_forward_nhwc.1} parent=87 // pred_check
        %p5244 = pneg %p394
      $region90: #{fpn_block_forward_nhwc.1} parent=87 // pred_check_branch
        %5246 = sbr.rel (%p5244) target = $region92
      $region91: #{fpn_block_forward_nhwc.1} parent=87 // pred_region
        %s5247 = smul.u32 8, %s32
        %p5248 = scmp.lt.s32.totalorder %s31, 1
        %s5249 = scalar_select %p5248, %s31, 1
        %p5250 = scmp.lt.s32.totalorder %s5247, 15
        %s5251 = scalar_select %p5250, %s5247, 15
        %s5252 = smul.addr %s5251, 2
        %s5253 = smul.addr %s5249, 32
        %s5254 = sadd.s32 %s5252, %s5253
        %s5255 = smul.addr %s5254, 8
        %s5256 = scalar_lea.vmem %s12, %s5255
      $region92: #{fpn_block_forward_nhwc.1} parent=87 // pred_fallthru
        _
      // Predicated region
      $region93: #{fpn_block_forward_nhwc.1} parent=87 // pred_check
        %p5257 = pneg %p422
      $region94: #{fpn_block_forward_nhwc.1} parent=87 // pred_check_branch
        %5259 = sbr.rel (%p5257) target = $region96
      $region95: #{fpn_block_forward_nhwc.1} parent=87 // pred_region
        %s5260 = smul.u32 8, %s32
        %p5261 = scmp.lt.s32.totalorder %s31, 1
        %s5262 = scalar_select %p5261, %s31, 1
        %p5263 = scmp.lt.s32.totalorder %s5260, 15
        %s5264 = scalar_select %p5263, %s5260, 15
        %s5265 = smul.addr %s5264, 2
        %s5266 = smul.addr %s5262, 32
        %s5267 = sadd.s32 %s5265, %s5266
        %s5268 = smul.addr %s5267, 8
        %s5269 = scalar_lea.vmem %s13, %s5268
      $region96: #{fpn_block_forward_nhwc.1} parent=87 // pred_fallthru
        _
    $region88: #{fpn_block_forward_nhwc.1} parent=5 // pred_fallthru
      _
  $region6: #{fpn_block_forward_nhwc.1} parent=0 // loop_footer
    %s24 = sadd.s32 1, %s20
  $region7: #{fpn_block_forward_nhwc.1} parent=0 // loop_footer_branch
    %19 = sbr.rel target = $region3
  $region8: #{fpn_block_forward_nhwc.1} parent=0 // loop_exit
    _

</llo_original>
